<compile_context>
chip_gen: v5e
topology: v5e:2x2
jax: 0.10.0
libtpu: 0.0.40
codegen_flags: <defaults>
</compile_context>

<pallas_src>
import numpy as np

import jax
import jax.numpy as jnp
from jax.experimental import pallas as pl
from jax.experimental.pallas import tpu as pltpu


KSIZE = 5          # both convs are 5x5
H_IN, W_IN, C_IN = 32, 32, 3
C1, C2 = 6, 16     # conv channel counts
W1_OUT, W1_POOL = 28, 14
W2_OUT, W2_POOL = 10, 5


# ---------------------------------------------------------------------------
# Fused whole-network kernel (one grid step == one image)
# ---------------------------------------------------------------------------

def _net_kernel(x_ref,                                   # (1, 32, 1, 96)  NHWC rows, lane = w*3+c
                band1_ref, bias1_ref, se1_ref, so1_ref,  # (5,96,168) (1,84) (168,84) (168,84)
                band2_ref, bias2_ref, se2_ref, so2_ref,  # (5,84,160) (1,80) (160,80) (160,80)
                fc1w_ref, fc1b_ref,                      # (5,80,120) (1,120)
                fc2w_ref, fc2b_ref,                      # (120,84)   (1,84)
                fc3w_ref, fc3b_ref,                      # (84,10)    (1,10)
                out_ref,                                 # (1, 1, 10)
                pool1_ref, pool2_ref):                   # VMEM scratch (14,1,84), (5,1,80)
    f32 = jnp.float32

    def conv_row(load_row, ho, band_ref):
        # One valid conv output row, lane-flat (1, Wo*Cout): 5 MXU dots, no im2col.
        acc = jnp.dot(load_row(ho), band_ref[0], preferred_element_type=f32)
        for kh in range(1, KSIZE):
            acc = acc + jnp.dot(load_row(ho + kh), band_ref[kh],
                                preferred_element_type=f32)
        return acc

    def conv_relu_pool_row(i, load_row, band_ref, bias_ref, se_ref, so_ref, dst_ref):
        # Conv rows 2i and 2i+1 -> fused 2x2 maxpool row i (relu/bias commute with max).
        r0 = conv_row(load_row, 2 * i, band_ref)
        r1 = conv_row(load_row, 2 * i + 1, band_ref)
        hmax = jnp.maximum(r0, r1)
        pooled = jnp.maximum(
            jnp.dot(hmax, se_ref[...], preferred_element_type=f32),   # even columns
            jnp.dot(hmax, so_ref[...], preferred_element_type=f32))   # odd columns
        dst_ref[i, :, :] = jnp.maximum(pooled + bias_ref[...], 0.0)

    # ---- conv1 (3->6, 5x5) + relu + 2x2 pool  ->  pool1_ref (14, 1, 84)
    load_x = lambda h: x_ref[0, h, :, :]          # (1, 96)

    @pl.loop(0, W1_POOL)
    def _(i):
        conv_relu_pool_row(i, load_x, band1_ref, bias1_ref, se1_ref, so1_ref, pool1_ref)

    # ---- conv2 (6->16, 5x5) + relu + 2x2 pool ->  pool2_ref (5, 1, 80)
    load_p1 = lambda h: pool1_ref[h, :, :]        # (1, 84)

    @pl.loop(0, W2_POOL)
    def _(i):
        conv_relu_pool_row(i, load_p1, band2_ref, bias2_ref, se2_ref, so2_ref, pool2_ref)

    # ---- fc1 (torch NCHW-flatten permutation folded into the weight) + relu
    h1 = fc1b_ref[...]                            # (1, 120)
    for hh in range(W2_POOL):
        h1 = h1 + jnp.dot(pool2_ref[hh, :, :], fc1w_ref[hh],
                          preferred_element_type=f32)
    h1 = jnp.maximum(h1, 0.0)

    # ---- fc2 + relu, fc3, softmax (all in-register, fused epilogue)
    h2 = jnp.maximum(
        jnp.dot(h1, fc2w_ref[...], preferred_element_type=f32) + fc2b_ref[...], 0.0)
    logits = jnp.dot(h2, fc3w_ref[...], preferred_element_type=f32) + fc3b_ref[...]

    m = jnp.max(logits, axis=-1, keepdims=True)
    e = jnp.exp(logits - m)
    s = jnp.sum(e, axis=-1, keepdims=True)
    # pl.reciprocal(s, approx=True) would put this on the idle EUP slot at ~2^-12
    # relative error; exact normalization is kept to match PyTorch softmax closely.
    out_ref[0, :, :] = e * pl.reciprocal(s, approx=False)


def _const_map(ndim):
    return lambda i: (0,) * ndim


@jax.jit
def net_forward(kp, x_nchw):
    """x_nchw: (N, 3, 32, 32) float32 -> (N, 10) softmax probabilities."""
    n = x_nchw.shape[0]
    # NCHW -> NHWC once, rows stored lane-flat: (N, H, 1, W*C), lane = w*3 + c.
    x_rows = jnp.transpose(x_nchw, (0, 2, 3, 1)).reshape(n, H_IN, 1, W_IN * C_IN)

    weights = (kp["band1"], kp["bias1"], kp["se1"], kp["so1"],
               kp["band2"], kp["bias2"], kp["se2"], kp["so2"],
               kp["fc1_w"], kp["fc1_b"], kp["fc2_w"], kp["fc2_b"],
               kp["fc3_w"], kp["fc3_b"])

    in_specs = [pl.BlockSpec((1, H_IN, 1, W_IN * C_IN), lambda i: (i, 0, 0, 0))]
    in_specs += [pl.BlockSpec(w.shape, _const_map(w.ndim)) for w in weights]

    out = pl.pallas_call(
        _net_kernel,
        out_shape=jax.ShapeDtypeStruct((n, 1, 10), jnp.float32),
        grid=(n,),
        in_specs=in_specs,
        out_specs=pl.BlockSpec((1, 1, 10), lambda i: (i, 0, 0)),
        scratch_shapes=[
            pltpu.VMEM((W1_POOL, 1, W1_POOL * C1), jnp.float32),   # pool1 (14,1,84)
            pltpu.VMEM((W2_POOL, 1, W2_POOL * C2), jnp.float32),   # pool2 (5,1,80)
        ],
        compiler_params=pltpu.CompilerParams(
            dimension_semantics=("parallel",)),                    # batch across TCs (v7x)
    )(x_rows, *weights)
    return out.reshape(n, 10)


# ---------------------------------------------------------------------------
# One-time host-side parameter re-layout (PyTorch layouts -> kernel layouts)
# ---------------------------------------------------------------------------

def _band_conv_weight(w_torch, w_in):
    """(Cout, Cin, k, k) -> banded (k, W_in*Cin, W_out*Cout).

    B[kh, wi*Cin+ci, wo*Cout+co] = w[co, ci, kh, wi-wo]  (0 <= wi-wo < k, else 0),
    so `sum_kh x_row[h+kh] @ B[kh]` is exactly the valid cross-correlation row.
    """
    w = np.asarray(w_torch, np.float32)
    cout, cin, k, _ = w.shape
    wo_n = w_in - k + 1
    band = np.zeros((k, w_in * cin, wo_n * cout), np.float32)
    for kh in range(k):
        for kw in range(k):
            blk = w[:, :, kh, kw].T                      # (Cin, Cout)
            for wo in range(wo_n):
                wi = wo + kw
                band[kh, wi * cin:(wi + 1) * cin, wo * cout:(wo + 1) * cout] = blk
    return band


def _pool_select(wo, cout):
    """Exact 0/1 matrices picking even / odd W positions of a lane-flat conv row."""
    wp = wo // 2
    se = np.zeros((wo * cout, wp * cout), np.float32)
    so = np.zeros_like(se)
    for j in range(wp):
        for c in range(cout):
            se[(2 * j) * cout + c, j * cout + c] = 1.0
            so[(2 * j + 1) * cout + c, j * cout + c] = 1.0
    return se, so


def prepare_params(p):
    """Fold all layout work (banding, bias tiling, NCHW->NHWC fc1 permutation,
    fc transposes) into a one-time host-side conversion of PyTorch-layout params."""
    se1, so1 = _pool_select(W1_OUT, C1)
    se2, so2 = _pool_select(W2_OUT, C2)
    # fc1: torch input index is c*25 + h*5 + w; kernel consumes rows (h, w*16+c).
    fc1 = np.asarray(p["fc1_w"], np.float32).reshape(120, C2, 5, 5)
    fc1_nhwc = fc1.transpose(2, 3, 1, 0).reshape(5, 5 * C2, 120)
    return {
        "band1": jnp.asarray(_band_conv_weight(p["conv1_w"], W_IN)),          # (5,96,168)
        "bias1": jnp.asarray(np.tile(np.asarray(p["conv1_b"], np.float32), W1_POOL)[None, :]),
        "se1": jnp.asarray(se1), "so1": jnp.asarray(so1),
        "band2": jnp.asarray(_band_conv_weight(p["conv2_w"], W1_POOL)),       # (5,84,160)
        "bias2": jnp.asarray(np.tile(np.asarray(p["conv2_b"], np.float32), W2_POOL)[None, :]),
        "se2": jnp.asarray(se2), "so2": jnp.asarray(so2),
        "fc1_w": jnp.asarray(fc1_nhwc),                                        # (5,80,120)
        "fc1_b": jnp.asarray(np.asarray(p["fc1_b"], np.float32)[None, :]),
        "fc2_w": jnp.asarray(np.asarray(p["fc2_w"], np.float32).T),            # (120,84)
        "fc2_b": jnp.asarray(np.asarray(p["fc2_b"], np.float32)[None, :]),
        "fc3_w": jnp.asarray(np.asarray(p["fc3_w"], np.float32).T),            # (84,10)
        "fc3_b": jnp.asarray(np.asarray(p["fc3_b"], np.float32)[None, :]),
    }


def init_torch_params(key):
    """PyTorch-layout params with nn.Conv2d / nn.Linear default uniform init."""
    def uni(k, shape, fan_in):
        b = 1.0 / float(np.sqrt(fan_in))
        return jax.random.uniform(k, shape, jnp.float32, -b, b)

    ks = jax.random.split(key, 10)
    return {
        "conv1_w": uni(ks[0], (C1, C_IN, 5, 5), C_IN * 25),
        "conv1_b": uni(ks[1], (C1,), C_IN * 25),
        "conv2_w": uni(ks[2], (C2, C1, 5, 5), C1 * 25),
        "conv2_b": uni(ks[3], (C2,), C1 * 25),
        "fc1_w": uni(ks[4], (120, 400), 400),
        "fc1_b": uni(ks[5], (120,), 400),
        "fc2_w": uni(ks[6], (84, 120), 120),
        "fc2_b": uni(ks[7], (84,), 120),
        "fc3_w": uni(ks[8], (10, 84), 84),
        "fc3_b": uni(ks[9], (10,), 84),
    }


# ---------------------------------------------------------------------------
# Pure-JAX reference (mirrors the PyTorch module, torch layouts) for validation
# ---------------------------------------------------------------------------

def net_reference(p, x):
    hi = jax.lax.Precision.HIGHEST

    def conv(x, w, b):
        y = jax.lax.conv_general_dilated(
            x, w, window_strides=(1, 1), padding="VALID",
            dimension_numbers=("NCHW", "OIHW", "NCHW"), precision=hi)
        return y + b.reshape(1, -1, 1, 1)

    def pool(x):
        n, c, h, w = x.shape
        return x.reshape(n, c, h // 2, 2, w // 2, 2).max(axis=(3, 5))

    x = pool(jax.nn.relu(conv(x, p["conv1_w"], p["conv1_b"])))
    x = pool(jax.nn.relu(conv(x, p["conv2_w"], p["conv2_b"])))
    x = x.reshape(x.shape[0], 16 * 5 * 5)
    x = jax.nn.relu(jnp.dot(x, p["fc1_w"].T, precision=hi) + p["fc1_b"])
    x = jax.nn.relu(jnp.dot(x, p["fc2_w"].T, precision=hi) + p["fc2_b"])
    x = jnp.dot(x, p["fc3_w"].T, precision=hi) + p["fc3_b"]
    return jax.nn.softmax(x, axis=1)


# TODO(synk): the training loop (DataLoader, CrossEntropyLoss, Adam) in the original
# script is host-side training infrastructure, not part of the module's forward pass.

if __name__ == "__main__":
    key = jax.random.PRNGKey(0)
    pkey, xkey = jax.random.split(key)

    torch_params = init_torch_params(pkey)
    kparams = prepare_params(torch_params)          # one-time host-side re-layout

    # CIFAR-10 shaped input (fc1's 16*5*5 forces 3x32x32), batch = 2.
    x = jax.random.normal(xkey, (2, 3, 32, 32), dtype=jnp.float32)

    probs = net_forward(kparams, x)
    probs = jax.block_until_ready(probs)

    assert probs.shape == (2, 10)
    assert bool(jnp.all(jnp.isfinite(probs)))
    assert bool(jnp.allclose(jnp.sum(probs, axis=1), 1.0, atol=1e-5))

    ref = net_reference(torch_params, x)
    ref = jax.block_until_ready(ref)
    assert bool(jnp.allclose(probs, ref, atol=1e-3)), (
        "max abs diff vs reference: %g" % float(jnp.max(jnp.abs(probs - ref))))

    print("KERNEL_OK")
</pallas_src>

<mosaic_0001>
module attributes {stable_mosaic.version = 11 : i64} {
  func.func @_net_kernel(%arg0: i32, %arg1: memref<1x32x1x96xf32, #tpu.memory_space<vmem>>, %arg2: memref<5x96x168xf32, #tpu.memory_space<vmem>>, %arg3: memref<1x84xf32, #tpu.memory_space<vmem>>, %arg4: memref<168x84xf32, #tpu.memory_space<vmem>>, %arg5: memref<168x84xf32, #tpu.memory_space<vmem>>, %arg6: memref<5x84x160xf32, #tpu.memory_space<vmem>>, %arg7: memref<1x80xf32, #tpu.memory_space<vmem>>, %arg8: memref<160x80xf32, #tpu.memory_space<vmem>>, %arg9: memref<160x80xf32, #tpu.memory_space<vmem>>, %arg10: memref<5x80x120xf32, #tpu.memory_space<vmem>>, %arg11: memref<1x120xf32, #tpu.memory_space<vmem>>, %arg12: memref<120x84xf32, #tpu.memory_space<vmem>>, %arg13: memref<1x84xf32, #tpu.memory_space<vmem>>, %arg14: memref<84x10xf32, #tpu.memory_space<vmem>>, %arg15: memref<1x10xf32, #tpu.memory_space<vmem>>, %arg16: memref<1x1x10xf32, #tpu.memory_space<vmem>>, %arg17: memref<14x1x84xf32, #tpu.memory_space<vmem>>, %arg18: memref<5x1x80xf32, #tpu.memory_space<vmem>>) attributes {dimension_semantics = [#tpu.dimension_semantics<parallel>], iteration_bounds = array<i64: 2>, scalar_prefetch = 0 : i64, scratch_operands = 2 : i64, tpu.core_type = #tpu.core_type<tc>, window_params = [{transform_indices = @transform_0, window_bounds = array<i64: 1, 32, 1, 96>}, {pipeline_mode = #tpu.pipeline_mode<synchronous>, transform_indices = @transform_1, window_bounds = array<i64: 5, 96, 168>}, {pipeline_mode = #tpu.pipeline_mode<synchronous>, transform_indices = @transform_2, window_bounds = array<i64: 1, 84>}, {pipeline_mode = #tpu.pipeline_mode<synchronous>, transform_indices = @transform_3, window_bounds = array<i64: 168, 84>}, {pipeline_mode = #tpu.pipeline_mode<synchronous>, transform_indices = @transform_4, window_bounds = array<i64: 168, 84>}, {pipeline_mode = #tpu.pipeline_mode<synchronous>, transform_indices = @transform_5, window_bounds = array<i64: 5, 84, 160>}, {pipeline_mode = #tpu.pipeline_mode<synchronous>, transform_indices = @transform_6, window_bounds = array<i64: 1, 80>}, {pipeline_mode = #tpu.pipeline_mode<synchronous>, transform_indices = @transform_7, window_bounds = array<i64: 160, 80>}, {pipeline_mode = #tpu.pipeline_mode<synchronous>, transform_indices = @transform_8, window_bounds = array<i64: 160, 80>}, {pipeline_mode = #tpu.pipeline_mode<synchronous>, transform_indices = @transform_9, window_bounds = array<i64: 5, 80, 120>}, {pipeline_mode = #tpu.pipeline_mode<synchronous>, transform_indices = @transform_10, window_bounds = array<i64: 1, 120>}, {pipeline_mode = #tpu.pipeline_mode<synchronous>, transform_indices = @transform_11, window_bounds = array<i64: 120, 84>}, {pipeline_mode = #tpu.pipeline_mode<synchronous>, transform_indices = @transform_12, window_bounds = array<i64: 1, 84>}, {pipeline_mode = #tpu.pipeline_mode<synchronous>, transform_indices = @transform_13, window_bounds = array<i64: 84, 10>}, {pipeline_mode = #tpu.pipeline_mode<synchronous>, transform_indices = @transform_14, window_bounds = array<i64: 1, 10>}, {transform_indices = @transform_15, window_bounds = array<i64: 1, 1, 10>}]} {
    %c0_i32 = arith.constant 0 : i32
    %c14_i32 = arith.constant 14 : i32
    %0 = arith.addi %c0_i32, %c14_i32 : i32
    %c1_i32 = arith.constant 1 : i32
    scf.for %arg19 = %c0_i32 to %0 step %c1_i32  : i32 {
      %c1_i32_52 = arith.constant 1 : i32
      %58 = arith.muli %arg19, %c1_i32_52 : i32
      %c0_i32_53 = arith.constant 0 : i32
      %59 = arith.addi %c0_i32_53, %58 : i32
      %c2_i32 = arith.constant 2 : i32
      %60 = arith.muli %c2_i32, %59 : i32
      %c0_54 = arith.constant 0 : index
      %61 = arith.index_cast %60 : i32 to index
      %c0_55 = arith.constant 0 : index
      %c0_56 = arith.constant 0 : index
      %62 = vector.load %arg1[%c0_54, %61, %c0_55, %c0_56] : memref<1x32x1x96xf32, #tpu.memory_space<vmem>>, vector<1x1x1x96xf32>
      %63 = vector.shape_cast %62 : vector<1x1x1x96xf32> to vector<1x96xf32>
      %c0_57 = arith.constant 0 : index
      %c0_58 = arith.constant 0 : index
      %c0_59 = arith.constant 0 : index
      %64 = vector.load %arg2[%c0_57, %c0_58, %c0_59] : memref<5x96x168xf32, #tpu.memory_space<vmem>>, vector<1x96x168xf32>
      %65 = vector.shape_cast %64 : vector<1x96x168xf32> to vector<96x168xf32>
      %cst_60 = arith.constant dense<0.000000e+00> : vector<1x168xf32>
      %66 = tpu.matmul %63, %65, %cst_60 {dimension_numbers = #tpu.dot_dimension_numbers<[1], [0], [0], [1], [0, 0, 1, 1], [], []>} : vector<1x96xf32>, vector<96x168xf32>, vector<1x168xf32> -> vector<1x168xf32>
      %c1_i32_61 = arith.constant 1 : i32
      %67 = arith.addi %60, %c1_i32_61 : i32
      %c0_62 = arith.constant 0 : index
      %68 = arith.index_cast %67 : i32 to index
      %c0_63 = arith.constant 0 : index
      %c0_64 = arith.constant 0 : index
      %69 = vector.load %arg1[%c0_62, %68, %c0_63, %c0_64] : memref<1x32x1x96xf32, #tpu.memory_space<vmem>>, vector<1x1x1x96xf32>
      %70 = vector.shape_cast %69 : vector<1x1x1x96xf32> to vector<1x96xf32>
      %c1_65 = arith.constant 1 : index
      %c0_66 = arith.constant 0 : index
      %c0_67 = arith.constant 0 : index
      %71 = vector.load %arg2[%c1_65, %c0_66, %c0_67] : memref<5x96x168xf32, #tpu.memory_space<vmem>>, vector<1x96x168xf32>
      %72 = vector.shape_cast %71 : vector<1x96x168xf32> to vector<96x168xf32>
      %cst_68 = arith.constant dense<0.000000e+00> : vector<1x168xf32>
      %73 = tpu.matmul %70, %72, %cst_68 {dimension_numbers = #tpu.dot_dimension_numbers<[1], [0], [0], [1], [0, 0, 1, 1], [], []>} : vector<1x96xf32>, vector<96x168xf32>, vector<1x168xf32> -> vector<1x168xf32>
      %74 = arith.addf %66, %73 : vector<1x168xf32>
      %c2_i32_69 = arith.constant 2 : i32
      %75 = arith.addi %60, %c2_i32_69 : i32
      %c0_70 = arith.constant 0 : index
      %76 = arith.index_cast %75 : i32 to index
      %c0_71 = arith.constant 0 : index
      %c0_72 = arith.constant 0 : index
      %77 = vector.load %arg1[%c0_70, %76, %c0_71, %c0_72] : memref<1x32x1x96xf32, #tpu.memory_space<vmem>>, vector<1x1x1x96xf32>
      %78 = vector.shape_cast %77 : vector<1x1x1x96xf32> to vector<1x96xf32>
      %c2_73 = arith.constant 2 : index
      %c0_74 = arith.constant 0 : index
      %c0_75 = arith.constant 0 : index
      %79 = vector.load %arg2[%c2_73, %c0_74, %c0_75] : memref<5x96x168xf32, #tpu.memory_space<vmem>>, vector<1x96x168xf32>
      %80 = vector.shape_cast %79 : vector<1x96x168xf32> to vector<96x168xf32>
      %cst_76 = arith.constant dense<0.000000e+00> : vector<1x168xf32>
      %81 = tpu.matmul %78, %80, %cst_76 {dimension_numbers = #tpu.dot_dimension_numbers<[1], [0], [0], [1], [0, 0, 1, 1], [], []>} : vector<1x96xf32>, vector<96x168xf32>, vector<1x168xf32> -> vector<1x168xf32>
      %82 = arith.addf %74, %81 : vector<1x168xf32>
      %c3_i32 = arith.constant 3 : i32
      %83 = arith.addi %60, %c3_i32 : i32
      %c0_77 = arith.constant 0 : index
      %84 = arith.index_cast %83 : i32 to index
      %c0_78 = arith.constant 0 : index
      %c0_79 = arith.constant 0 : index
      %85 = vector.load %arg1[%c0_77, %84, %c0_78, %c0_79] : memref<1x32x1x96xf32, #tpu.memory_space<vmem>>, vector<1x1x1x96xf32>
      %86 = vector.shape_cast %85 : vector<1x1x1x96xf32> to vector<1x96xf32>
      %c3_80 = arith.constant 3 : index
      %c0_81 = arith.constant 0 : index
      %c0_82 = arith.constant 0 : index
      %87 = vector.load %arg2[%c3_80, %c0_81, %c0_82] : memref<5x96x168xf32, #tpu.memory_space<vmem>>, vector<1x96x168xf32>
      %88 = vector.shape_cast %87 : vector<1x96x168xf32> to vector<96x168xf32>
      %cst_83 = arith.constant dense<0.000000e+00> : vector<1x168xf32>
      %89 = tpu.matmul %86, %88, %cst_83 {dimension_numbers = #tpu.dot_dimension_numbers<[1], [0], [0], [1], [0, 0, 1, 1], [], []>} : vector<1x96xf32>, vector<96x168xf32>, vector<1x168xf32> -> vector<1x168xf32>
      %90 = arith.addf %82, %89 : vector<1x168xf32>
      %c4_i32 = arith.constant 4 : i32
      %91 = arith.addi %60, %c4_i32 : i32
      %c0_84 = arith.constant 0 : index
      %92 = arith.index_cast %91 : i32 to index
      %c0_85 = arith.constant 0 : index
      %c0_86 = arith.constant 0 : index
      %93 = vector.load %arg1[%c0_84, %92, %c0_85, %c0_86] : memref<1x32x1x96xf32, #tpu.memory_space<vmem>>, vector<1x1x1x96xf32>
      %94 = vector.shape_cast %93 : vector<1x1x1x96xf32> to vector<1x96xf32>
      %c4_87 = arith.constant 4 : index
      %c0_88 = arith.constant 0 : index
      %c0_89 = arith.constant 0 : index
      %95 = vector.load %arg2[%c4_87, %c0_88, %c0_89] : memref<5x96x168xf32, #tpu.memory_space<vmem>>, vector<1x96x168xf32>
      %96 = vector.shape_cast %95 : vector<1x96x168xf32> to vector<96x168xf32>
      %cst_90 = arith.constant dense<0.000000e+00> : vector<1x168xf32>
      %97 = tpu.matmul %94, %96, %cst_90 {dimension_numbers = #tpu.dot_dimension_numbers<[1], [0], [0], [1], [0, 0, 1, 1], [], []>} : vector<1x96xf32>, vector<96x168xf32>, vector<1x168xf32> -> vector<1x168xf32>
      %98 = arith.addf %90, %97 : vector<1x168xf32>
      %c2_i32_91 = arith.constant 2 : i32
      %99 = arith.muli %c2_i32_91, %59 : i32
      %c1_i32_92 = arith.constant 1 : i32
      %100 = arith.addi %99, %c1_i32_92 : i32
      %c0_93 = arith.constant 0 : index
      %101 = arith.index_cast %100 : i32 to index
      %c0_94 = arith.constant 0 : index
      %c0_95 = arith.constant 0 : index
      %102 = vector.load %arg1[%c0_93, %101, %c0_94, %c0_95] : memref<1x32x1x96xf32, #tpu.memory_space<vmem>>, vector<1x1x1x96xf32>
      %103 = vector.shape_cast %102 : vector<1x1x1x96xf32> to vector<1x96xf32>
      %c0_96 = arith.constant 0 : index
      %c0_97 = arith.constant 0 : index
      %c0_98 = arith.constant 0 : index
      %104 = vector.load %arg2[%c0_96, %c0_97, %c0_98] : memref<5x96x168xf32, #tpu.memory_space<vmem>>, vector<1x96x168xf32>
      %105 = vector.shape_cast %104 : vector<1x96x168xf32> to vector<96x168xf32>
      %cst_99 = arith.constant dense<0.000000e+00> : vector<1x168xf32>
      %106 = tpu.matmul %103, %105, %cst_99 {dimension_numbers = #tpu.dot_dimension_numbers<[1], [0], [0], [1], [0, 0, 1, 1], [], []>} : vector<1x96xf32>, vector<96x168xf32>, vector<1x168xf32> -> vector<1x168xf32>
      %c1_i32_100 = arith.constant 1 : i32
      %107 = arith.addi %100, %c1_i32_100 : i32
      %c0_101 = arith.constant 0 : index
      %108 = arith.index_cast %107 : i32 to index
      %c0_102 = arith.constant 0 : index
      %c0_103 = arith.constant 0 : index
      %109 = vector.load %arg1[%c0_101, %108, %c0_102, %c0_103] : memref<1x32x1x96xf32, #tpu.memory_space<vmem>>, vector<1x1x1x96xf32>
      %110 = vector.shape_cast %109 : vector<1x1x1x96xf32> to vector<1x96xf32>
      %c1_104 = arith.constant 1 : index
      %c0_105 = arith.constant 0 : index
      %c0_106 = arith.constant 0 : index
      %111 = vector.load %arg2[%c1_104, %c0_105, %c0_106] : memref<5x96x168xf32, #tpu.memory_space<vmem>>, vector<1x96x168xf32>
      %112 = vector.shape_cast %111 : vector<1x96x168xf32> to vector<96x168xf32>
      %cst_107 = arith.constant dense<0.000000e+00> : vector<1x168xf32>
      %113 = tpu.matmul %110, %112, %cst_107 {dimension_numbers = #tpu.dot_dimension_numbers<[1], [0], [0], [1], [0, 0, 1, 1], [], []>} : vector<1x96xf32>, vector<96x168xf32>, vector<1x168xf32> -> vector<1x168xf32>
      %114 = arith.addf %106, %113 : vector<1x168xf32>
      %c2_i32_108 = arith.constant 2 : i32
      %115 = arith.addi %100, %c2_i32_108 : i32
      %c0_109 = arith.constant 0 : index
      %116 = arith.index_cast %115 : i32 to index
      %c0_110 = arith.constant 0 : index
      %c0_111 = arith.constant 0 : index
      %117 = vector.load %arg1[%c0_109, %116, %c0_110, %c0_111] : memref<1x32x1x96xf32, #tpu.memory_space<vmem>>, vector<1x1x1x96xf32>
      %118 = vector.shape_cast %117 : vector<1x1x1x96xf32> to vector<1x96xf32>
      %c2_112 = arith.constant 2 : index
      %c0_113 = arith.constant 0 : index
      %c0_114 = arith.constant 0 : index
      %119 = vector.load %arg2[%c2_112, %c0_113, %c0_114] : memref<5x96x168xf32, #tpu.memory_space<vmem>>, vector<1x96x168xf32>
      %120 = vector.shape_cast %119 : vector<1x96x168xf32> to vector<96x168xf32>
      %cst_115 = arith.constant dense<0.000000e+00> : vector<1x168xf32>
      %121 = tpu.matmul %118, %120, %cst_115 {dimension_numbers = #tpu.dot_dimension_numbers<[1], [0], [0], [1], [0, 0, 1, 1], [], []>} : vector<1x96xf32>, vector<96x168xf32>, vector<1x168xf32> -> vector<1x168xf32>
      %122 = arith.addf %114, %121 : vector<1x168xf32>
      %c3_i32_116 = arith.constant 3 : i32
      %123 = arith.addi %100, %c3_i32_116 : i32
      %c0_117 = arith.constant 0 : index
      %124 = arith.index_cast %123 : i32 to index
      %c0_118 = arith.constant 0 : index
      %c0_119 = arith.constant 0 : index
      %125 = vector.load %arg1[%c0_117, %124, %c0_118, %c0_119] : memref<1x32x1x96xf32, #tpu.memory_space<vmem>>, vector<1x1x1x96xf32>
      %126 = vector.shape_cast %125 : vector<1x1x1x96xf32> to vector<1x96xf32>
      %c3_120 = arith.constant 3 : index
      %c0_121 = arith.constant 0 : index
      %c0_122 = arith.constant 0 : index
      %127 = vector.load %arg2[%c3_120, %c0_121, %c0_122] : memref<5x96x168xf32, #tpu.memory_space<vmem>>, vector<1x96x168xf32>
      %128 = vector.shape_cast %127 : vector<1x96x168xf32> to vector<96x168xf32>
      %cst_123 = arith.constant dense<0.000000e+00> : vector<1x168xf32>
      %129 = tpu.matmul %126, %128, %cst_123 {dimension_numbers = #tpu.dot_dimension_numbers<[1], [0], [0], [1], [0, 0, 1, 1], [], []>} : vector<1x96xf32>, vector<96x168xf32>, vector<1x168xf32> -> vector<1x168xf32>
      %130 = arith.addf %122, %129 : vector<1x168xf32>
      %c4_i32_124 = arith.constant 4 : i32
      %131 = arith.addi %100, %c4_i32_124 : i32
      %c0_125 = arith.constant 0 : index
      %132 = arith.index_cast %131 : i32 to index
      %c0_126 = arith.constant 0 : index
      %c0_127 = arith.constant 0 : index
      %133 = vector.load %arg1[%c0_125, %132, %c0_126, %c0_127] : memref<1x32x1x96xf32, #tpu.memory_space<vmem>>, vector<1x1x1x96xf32>
      %134 = vector.shape_cast %133 : vector<1x1x1x96xf32> to vector<1x96xf32>
      %c4_128 = arith.constant 4 : index
      %c0_129 = arith.constant 0 : index
      %c0_130 = arith.constant 0 : index
      %135 = vector.load %arg2[%c4_128, %c0_129, %c0_130] : memref<5x96x168xf32, #tpu.memory_space<vmem>>, vector<1x96x168xf32>
      %136 = vector.shape_cast %135 : vector<1x96x168xf32> to vector<96x168xf32>
      %cst_131 = arith.constant dense<0.000000e+00> : vector<1x168xf32>
      %137 = tpu.matmul %134, %136, %cst_131 {dimension_numbers = #tpu.dot_dimension_numbers<[1], [0], [0], [1], [0, 0, 1, 1], [], []>} : vector<1x96xf32>, vector<96x168xf32>, vector<1x168xf32> -> vector<1x168xf32>
      %138 = arith.addf %130, %137 : vector<1x168xf32>
      %139 = arith.maximumf %98, %138 : vector<1x168xf32>
      %c0_132 = arith.constant 0 : index
      %c0_133 = arith.constant 0 : index
      %140 = vector.load %arg4[%c0_132, %c0_133] : memref<168x84xf32, #tpu.memory_space<vmem>>, vector<168x84xf32>
      %cst_134 = arith.constant dense<0.000000e+00> : vector<1x84xf32>
      %141 = tpu.matmul %139, %140, %cst_134 {dimension_numbers = #tpu.dot_dimension_numbers<[1], [0], [0], [1], [0, 0, 1, 1], [], []>} : vector<1x168xf32>, vector<168x84xf32>, vector<1x84xf32> -> vector<1x84xf32>
      %c0_135 = arith.constant 0 : index
      %c0_136 = arith.constant 0 : index
      %142 = vector.load %arg5[%c0_135, %c0_136] : memref<168x84xf32, #tpu.memory_space<vmem>>, vector<168x84xf32>
      %cst_137 = arith.constant dense<0.000000e+00> : vector<1x84xf32>
      %143 = tpu.matmul %139, %142, %cst_137 {dimension_numbers = #tpu.dot_dimension_numbers<[1], [0], [0], [1], [0, 0, 1, 1], [], []>} : vector<1x168xf32>, vector<168x84xf32>, vector<1x84xf32> -> vector<1x84xf32>
      %144 = arith.maximumf %141, %143 : vector<1x84xf32>
      %c0_138 = arith.constant 0 : index
      %c0_139 = arith.constant 0 : index
      %145 = vector.load %arg3[%c0_138, %c0_139] : memref<1x84xf32, #tpu.memory_space<vmem>>, vector<1x84xf32>
      %146 = arith.addf %144, %145 : vector<1x84xf32>
      %cst_140 = arith.constant 0.000000e+00 : f32
      %147 = vector.broadcast %cst_140 : f32 to vector<1x84xf32>
      %148 = arith.maximumf %146, %147 : vector<1x84xf32>
      %149 = arith.index_cast %59 : i32 to index
      %c0_141 = arith.constant 0 : index
      %c0_142 = arith.constant 0 : index
      %150 = vector.load %arg17[%149, %c0_141, %c0_142] : memref<14x1x84xf32, #tpu.memory_space<vmem>>, vector<1x1x84xf32>
      %151 = vector.shape_cast %150 : vector<1x1x84xf32> to vector<1x84xf32>
      %152 = vector.shape_cast %148 : vector<1x84xf32> to vector<1x1x84xf32>
      tpu.vector_store %arg17[%149, %c0_141, %c0_142], %152 {strides = array<i32>} : memref<14x1x84xf32, #tpu.memory_space<vmem>>, vector<1x1x84xf32>,
    }
    %c14_i32_0 = arith.constant 14 : i32
    %c0_i32_1 = arith.constant 0 : i32
    %c5_i32 = arith.constant 5 : i32
    %1 = arith.addi %c0_i32_1, %c5_i32 : i32
    %c1_i32_2 = arith.constant 1 : i32
    scf.for %arg19 = %c0_i32_1 to %1 step %c1_i32_2  : i32 {
      %c1_i32_52 = arith.constant 1 : i32
      %58 = arith.muli %arg19, %c1_i32_52 : i32
      %c0_i32_53 = arith.constant 0 : i32
      %59 = arith.addi %c0_i32_53, %58 : i32
      %c2_i32 = arith.constant 2 : i32
      %60 = arith.muli %c2_i32, %59 : i32
      %61 = arith.index_cast %60 : i32 to index
      %c0_54 = arith.constant 0 : index
      %c0_55 = arith.constant 0 : index
      %62 = vector.load %arg17[%61, %c0_54, %c0_55] : memref<14x1x84xf32, #tpu.memory_space<vmem>>, vector<1x1x84xf32>
      %63 = vector.shape_cast %62 : vector<1x1x84xf32> to vector<1x84xf32>
      %c0_56 = arith.constant 0 : index
      %c0_57 = arith.constant 0 : index
      %c0_58 = arith.constant 0 : index
      %64 = vector.load %arg6[%c0_56, %c0_57, %c0_58] : memref<5x84x160xf32, #tpu.memory_space<vmem>>, vector<1x84x160xf32>
      %65 = vector.shape_cast %64 : vector<1x84x160xf32> to vector<84x160xf32>
      %cst_59 = arith.constant dense<0.000000e+00> : vector<1x160xf32>
      %66 = tpu.matmul %63, %65, %cst_59 {dimension_numbers = #tpu.dot_dimension_numbers<[1], [0], [0], [1], [0, 0, 1, 1], [], []>} : vector<1x84xf32>, vector<84x160xf32>, vector<1x160xf32> -> vector<1x160xf32>
      %c1_i32_60 = arith.constant 1 : i32
      %67 = arith.addi %60, %c1_i32_60 : i32
      %68 = arith.index_cast %67 : i32 to index
      %c0_61 = arith.constant 0 : index
      %c0_62 = arith.constant 0 : index
      %69 = vector.load %arg17[%68, %c0_61, %c0_62] : memref<14x1x84xf32, #tpu.memory_space<vmem>>, vector<1x1x84xf32>
      %70 = vector.shape_cast %69 : vector<1x1x84xf32> to vector<1x84xf32>
      %c1_63 = arith.constant 1 : index
      %c0_64 = arith.constant 0 : index
      %c0_65 = arith.constant 0 : index
      %71 = vector.load %arg6[%c1_63, %c0_64, %c0_65] : memref<5x84x160xf32, #tpu.memory_space<vmem>>, vector<1x84x160xf32>
      %72 = vector.shape_cast %71 : vector<1x84x160xf32> to vector<84x160xf32>
      %cst_66 = arith.constant dense<0.000000e+00> : vector<1x160xf32>
      %73 = tpu.matmul %70, %72, %cst_66 {dimension_numbers = #tpu.dot_dimension_numbers<[1], [0], [0], [1], [0, 0, 1, 1], [], []>} : vector<1x84xf32>, vector<84x160xf32>, vector<1x160xf32> -> vector<1x160xf32>
      %74 = arith.addf %66, %73 : vector<1x160xf32>
      %c2_i32_67 = arith.constant 2 : i32
      %75 = arith.addi %60, %c2_i32_67 : i32
      %76 = arith.index_cast %75 : i32 to index
      %c0_68 = arith.constant 0 : index
      %c0_69 = arith.constant 0 : index
      %77 = vector.load %arg17[%76, %c0_68, %c0_69] : memref<14x1x84xf32, #tpu.memory_space<vmem>>, vector<1x1x84xf32>
      %78 = vector.shape_cast %77 : vector<1x1x84xf32> to vector<1x84xf32>
      %c2_70 = arith.constant 2 : index
      %c0_71 = arith.constant 0 : index
      %c0_72 = arith.constant 0 : index
      %79 = vector.load %arg6[%c2_70, %c0_71, %c0_72] : memref<5x84x160xf32, #tpu.memory_space<vmem>>, vector<1x84x160xf32>
      %80 = vector.shape_cast %79 : vector<1x84x160xf32> to vector<84x160xf32>
      %cst_73 = arith.constant dense<0.000000e+00> : vector<1x160xf32>
      %81 = tpu.matmul %78, %80, %cst_73 {dimension_numbers = #tpu.dot_dimension_numbers<[1], [0], [0], [1], [0, 0, 1, 1], [], []>} : vector<1x84xf32>, vector<84x160xf32>, vector<1x160xf32> -> vector<1x160xf32>
      %82 = arith.addf %74, %81 : vector<1x160xf32>
      %c3_i32 = arith.constant 3 : i32
      %83 = arith.addi %60, %c3_i32 : i32
      %84 = arith.index_cast %83 : i32 to index
      %c0_74 = arith.constant 0 : index
      %c0_75 = arith.constant 0 : index
      %85 = vector.load %arg17[%84, %c0_74, %c0_75] : memref<14x1x84xf32, #tpu.memory_space<vmem>>, vector<1x1x84xf32>
      %86 = vector.shape_cast %85 : vector<1x1x84xf32> to vector<1x84xf32>
      %c3_76 = arith.constant 3 : index
      %c0_77 = arith.constant 0 : index
      %c0_78 = arith.constant 0 : index
      %87 = vector.load %arg6[%c3_76, %c0_77, %c0_78] : memref<5x84x160xf32, #tpu.memory_space<vmem>>, vector<1x84x160xf32>
      %88 = vector.shape_cast %87 : vector<1x84x160xf32> to vector<84x160xf32>
      %cst_79 = arith.constant dense<0.000000e+00> : vector<1x160xf32>
      %89 = tpu.matmul %86, %88, %cst_79 {dimension_numbers = #tpu.dot_dimension_numbers<[1], [0], [0], [1], [0, 0, 1, 1], [], []>} : vector<1x84xf32>, vector<84x160xf32>, vector<1x160xf32> -> vector<1x160xf32>
      %90 = arith.addf %82, %89 : vector<1x160xf32>
      %c4_i32 = arith.constant 4 : i32
      %91 = arith.addi %60, %c4_i32 : i32
      %92 = arith.index_cast %91 : i32 to index
      %c0_80 = arith.constant 0 : index
      %c0_81 = arith.constant 0 : index
      %93 = vector.load %arg17[%92, %c0_80, %c0_81] : memref<14x1x84xf32, #tpu.memory_space<vmem>>, vector<1x1x84xf32>
      %94 = vector.shape_cast %93 : vector<1x1x84xf32> to vector<1x84xf32>
      %c4_82 = arith.constant 4 : index
      %c0_83 = arith.constant 0 : index
      %c0_84 = arith.constant 0 : index
      %95 = vector.load %arg6[%c4_82, %c0_83, %c0_84] : memref<5x84x160xf32, #tpu.memory_space<vmem>>, vector<1x84x160xf32>
      %96 = vector.shape_cast %95 : vector<1x84x160xf32> to vector<84x160xf32>
      %cst_85 = arith.constant dense<0.000000e+00> : vector<1x160xf32>
      %97 = tpu.matmul %94, %96, %cst_85 {dimension_numbers = #tpu.dot_dimension_numbers<[1], [0], [0], [1], [0, 0, 1, 1], [], []>} : vector<1x84xf32>, vector<84x160xf32>, vector<1x160xf32> -> vector<1x160xf32>
      %98 = arith.addf %90, %97 : vector<1x160xf32>
      %c2_i32_86 = arith.constant 2 : i32
      %99 = arith.muli %c2_i32_86, %59 : i32
      %c1_i32_87 = arith.constant 1 : i32
      %100 = arith.addi %99, %c1_i32_87 : i32
      %101 = arith.index_cast %100 : i32 to index
      %c0_88 = arith.constant 0 : index
      %c0_89 = arith.constant 0 : index
      %102 = vector.load %arg17[%101, %c0_88, %c0_89] : memref<14x1x84xf32, #tpu.memory_space<vmem>>, vector<1x1x84xf32>
      %103 = vector.shape_cast %102 : vector<1x1x84xf32> to vector<1x84xf32>
      %c0_90 = arith.constant 0 : index
      %c0_91 = arith.constant 0 : index
      %c0_92 = arith.constant 0 : index
      %104 = vector.load %arg6[%c0_90, %c0_91, %c0_92] : memref<5x84x160xf32, #tpu.memory_space<vmem>>, vector<1x84x160xf32>
      %105 = vector.shape_cast %104 : vector<1x84x160xf32> to vector<84x160xf32>
      %cst_93 = arith.constant dense<0.000000e+00> : vector<1x160xf32>
      %106 = tpu.matmul %103, %105, %cst_93 {dimension_numbers = #tpu.dot_dimension_numbers<[1], [0], [0], [1], [0, 0, 1, 1], [], []>} : vector<1x84xf32>, vector<84x160xf32>, vector<1x160xf32> -> vector<1x160xf32>
      %c1_i32_94 = arith.constant 1 : i32
      %107 = arith.addi %100, %c1_i32_94 : i32
      %108 = arith.index_cast %107 : i32 to index
      %c0_95 = arith.constant 0 : index
      %c0_96 = arith.constant 0 : index
      %109 = vector.load %arg17[%108, %c0_95, %c0_96] : memref<14x1x84xf32, #tpu.memory_space<vmem>>, vector<1x1x84xf32>
      %110 = vector.shape_cast %109 : vector<1x1x84xf32> to vector<1x84xf32>
      %c1_97 = arith.constant 1 : index
      %c0_98 = arith.constant 0 : index
      %c0_99 = arith.constant 0 : index
      %111 = vector.load %arg6[%c1_97, %c0_98, %c0_99] : memref<5x84x160xf32, #tpu.memory_space<vmem>>, vector<1x84x160xf32>
      %112 = vector.shape_cast %111 : vector<1x84x160xf32> to vector<84x160xf32>
      %cst_100 = arith.constant dense<0.000000e+00> : vector<1x160xf32>
      %113 = tpu.matmul %110, %112, %cst_100 {dimension_numbers = #tpu.dot_dimension_numbers<[1], [0], [0], [1], [0, 0, 1, 1], [], []>} : vector<1x84xf32>, vector<84x160xf32>, vector<1x160xf32> -> vector<1x160xf32>
      %114 = arith.addf %106, %113 : vector<1x160xf32>
      %c2_i32_101 = arith.constant 2 : i32
      %115 = arith.addi %100, %c2_i32_101 : i32
      %116 = arith.index_cast %115 : i32 to index
      %c0_102 = arith.constant 0 : index
      %c0_103 = arith.constant 0 : index
      %117 = vector.load %arg17[%116, %c0_102, %c0_103] : memref<14x1x84xf32, #tpu.memory_space<vmem>>, vector<1x1x84xf32>
      %118 = vector.shape_cast %117 : vector<1x1x84xf32> to vector<1x84xf32>
      %c2_104 = arith.constant 2 : index
      %c0_105 = arith.constant 0 : index
      %c0_106 = arith.constant 0 : index
      %119 = vector.load %arg6[%c2_104, %c0_105, %c0_106] : memref<5x84x160xf32, #tpu.memory_space<vmem>>, vector<1x84x160xf32>
      %120 = vector.shape_cast %119 : vector<1x84x160xf32> to vector<84x160xf32>
      %cst_107 = arith.constant dense<0.000000e+00> : vector<1x160xf32>
      %121 = tpu.matmul %118, %120, %cst_107 {dimension_numbers = #tpu.dot_dimension_numbers<[1], [0], [0], [1], [0, 0, 1, 1], [], []>} : vector<1x84xf32>, vector<84x160xf32>, vector<1x160xf32> -> vector<1x160xf32>
      %122 = arith.addf %114, %121 : vector<1x160xf32>
      %c3_i32_108 = arith.constant 3 : i32
      %123 = arith.addi %100, %c3_i32_108 : i32
      %124 = arith.index_cast %123 : i32 to index
      %c0_109 = arith.constant 0 : index
      %c0_110 = arith.constant 0 : index
      %125 = vector.load %arg17[%124, %c0_109, %c0_110] : memref<14x1x84xf32, #tpu.memory_space<vmem>>, vector<1x1x84xf32>
      %126 = vector.shape_cast %125 : vector<1x1x84xf32> to vector<1x84xf32>
      %c3_111 = arith.constant 3 : index
      %c0_112 = arith.constant 0 : index
      %c0_113 = arith.constant 0 : index
      %127 = vector.load %arg6[%c3_111, %c0_112, %c0_113] : memref<5x84x160xf32, #tpu.memory_space<vmem>>, vector<1x84x160xf32>
      %128 = vector.shape_cast %127 : vector<1x84x160xf32> to vector<84x160xf32>
      %cst_114 = arith.constant dense<0.000000e+00> : vector<1x160xf32>
      %129 = tpu.matmul %126, %128, %cst_114 {dimension_numbers = #tpu.dot_dimension_numbers<[1], [0], [0], [1], [0, 0, 1, 1], [], []>} : vector<1x84xf32>, vector<84x160xf32>, vector<1x160xf32> -> vector<1x160xf32>
      %130 = arith.addf %122, %129 : vector<1x160xf32>
      %c4_i32_115 = arith.constant 4 : i32
      %131 = arith.addi %100, %c4_i32_115 : i32
      %132 = arith.index_cast %131 : i32 to index
      %c0_116 = arith.constant 0 : index
      %c0_117 = arith.constant 0 : index
      %133 = vector.load %arg17[%132, %c0_116, %c0_117] : memref<14x1x84xf32, #tpu.memory_space<vmem>>, vector<1x1x84xf32>
      %134 = vector.shape_cast %133 : vector<1x1x84xf32> to vector<1x84xf32>
      %c4_118 = arith.constant 4 : index
      %c0_119 = arith.constant 0 : index
      %c0_120 = arith.constant 0 : index
      %135 = vector.load %arg6[%c4_118, %c0_119, %c0_120] : memref<5x84x160xf32, #tpu.memory_space<vmem>>, vector<1x84x160xf32>
      %136 = vector.shape_cast %135 : vector<1x84x160xf32> to vector<84x160xf32>
      %cst_121 = arith.constant dense<0.000000e+00> : vector<1x160xf32>
      %137 = tpu.matmul %134, %136, %cst_121 {dimension_numbers = #tpu.dot_dimension_numbers<[1], [0], [0], [1], [0, 0, 1, 1], [], []>} : vector<1x84xf32>, vector<84x160xf32>, vector<1x160xf32> -> vector<1x160xf32>
      %138 = arith.addf %130, %137 : vector<1x160xf32>
      %139 = arith.maximumf %98, %138 : vector<1x160xf32>
      %c0_122 = arith.constant 0 : index
      %c0_123 = arith.constant 0 : index
      %140 = vector.load %arg8[%c0_122, %c0_123] : memref<160x80xf32, #tpu.memory_space<vmem>>, vector<160x80xf32>
      %cst_124 = arith.constant dense<0.000000e+00> : vector<1x80xf32>
      %141 = tpu.matmul %139, %140, %cst_124 {dimension_numbers = #tpu.dot_dimension_numbers<[1], [0], [0], [1], [0, 0, 1, 1], [], []>} : vector<1x160xf32>, vector<160x80xf32>, vector<1x80xf32> -> vector<1x80xf32>
      %c0_125 = arith.constant 0 : index
      %c0_126 = arith.constant 0 : index
      %142 = vector.load %arg9[%c0_125, %c0_126] : memref<160x80xf32, #tpu.memory_space<vmem>>, vector<160x80xf32>
      %cst_127 = arith.constant dense<0.000000e+00> : vector<1x80xf32>
      %143 = tpu.matmul %139, %142, %cst_127 {dimension_numbers = #tpu.dot_dimension_numbers<[1], [0], [0], [1], [0, 0, 1, 1], [], []>} : vector<1x160xf32>, vector<160x80xf32>, vector<1x80xf32> -> vector<1x80xf32>
      %144 = arith.maximumf %141, %143 : vector<1x80xf32>
      %c0_128 = arith.constant 0 : index
      %c0_129 = arith.constant 0 : index
      %145 = vector.load %arg7[%c0_128, %c0_129] : memref<1x80xf32, #tpu.memory_space<vmem>>, vector<1x80xf32>
      %146 = arith.addf %144, %145 : vector<1x80xf32>
      %cst_130 = arith.constant 0.000000e+00 : f32
      %147 = vector.broadcast %cst_130 : f32 to vector<1x80xf32>
      %148 = arith.maximumf %146, %147 : vector<1x80xf32>
      %149 = arith.index_cast %59 : i32 to index
      %c0_131 = arith.constant 0 : index
      %c0_132 = arith.constant 0 : index
      %150 = vector.load %arg18[%149, %c0_131, %c0_132] : memref<5x1x80xf32, #tpu.memory_space<vmem>>, vector<1x1x80xf32>
      %151 = vector.shape_cast %150 : vector<1x1x80xf32> to vector<1x80xf32>
      %152 = vector.shape_cast %148 : vector<1x80xf32> to vector<1x1x80xf32>
      tpu.vector_store %arg18[%149, %c0_131, %c0_132], %152 {strides = array<i32>} : memref<5x1x80xf32, #tpu.memory_space<vmem>>, vector<1x1x80xf32>,
    }
    %c5_i32_3 = arith.constant 5 : i32
    %c0 = arith.constant 0 : index
    %c0_4 = arith.constant 0 : index
    %2 = vector.load %arg11[%c0, %c0_4] : memref<1x120xf32, #tpu.memory_space<vmem>>, vector<1x120xf32>
    %c0_5 = arith.constant 0 : index
    %c0_6 = arith.constant 0 : index
    %c0_7 = arith.constant 0 : index
    %3 = vector.load %arg18[%c0_5, %c0_6, %c0_7] : memref<5x1x80xf32, #tpu.memory_space<vmem>>, vector<1x1x80xf32>
    %4 = vector.shape_cast %3 : vector<1x1x80xf32> to vector<1x80xf32>
    %c0_8 = arith.constant 0 : index
    %c0_9 = arith.constant 0 : index
    %c0_10 = arith.constant 0 : index
    %5 = vector.load %arg10[%c0_8, %c0_9, %c0_10] : memref<5x80x120xf32, #tpu.memory_space<vmem>>, vector<1x80x120xf32>
    %6 = vector.shape_cast %5 : vector<1x80x120xf32> to vector<80x120xf32>
    %cst = arith.constant dense<0.000000e+00> : vector<1x120xf32>
    %7 = tpu.matmul %4, %6, %cst {dimension_numbers = #tpu.dot_dimension_numbers<[1], [0], [0], [1], [0, 0, 1, 1], [], []>} : vector<1x80xf32>, vector<80x120xf32>, vector<1x120xf32> -> vector<1x120xf32>
    %8 = arith.addf %2, %7 : vector<1x120xf32>
    %c1 = arith.constant 1 : index
    %c0_11 = arith.constant 0 : index
    %c0_12 = arith.constant 0 : index
    %9 = vector.load %arg18[%c1, %c0_11, %c0_12] : memref<5x1x80xf32, #tpu.memory_space<vmem>>, vector<1x1x80xf32>
    %10 = vector.shape_cast %9 : vector<1x1x80xf32> to vector<1x80xf32>
    %c1_13 = arith.constant 1 : index
    %c0_14 = arith.constant 0 : index
    %c0_15 = arith.constant 0 : index
    %11 = vector.load %arg10[%c1_13, %c0_14, %c0_15] : memref<5x80x120xf32, #tpu.memory_space<vmem>>, vector<1x80x120xf32>
    %12 = vector.shape_cast %11 : vector<1x80x120xf32> to vector<80x120xf32>
    %cst_16 = arith.constant dense<0.000000e+00> : vector<1x120xf32>
    %13 = tpu.matmul %10, %12, %cst_16 {dimension_numbers = #tpu.dot_dimension_numbers<[1], [0], [0], [1], [0, 0, 1, 1], [], []>} : vector<1x80xf32>, vector<80x120xf32>, vector<1x120xf32> -> vector<1x120xf32>
    %14 = arith.addf %8, %13 : vector<1x120xf32>
    %c2 = arith.constant 2 : index
    %c0_17 = arith.constant 0 : index
    %c0_18 = arith.constant 0 : index
    %15 = vector.load %arg18[%c2, %c0_17, %c0_18] : memref<5x1x80xf32, #tpu.memory_space<vmem>>, vector<1x1x80xf32>
    %16 = vector.shape_cast %15 : vector<1x1x80xf32> to vector<1x80xf32>
    %c2_19 = arith.constant 2 : index
    %c0_20 = arith.constant 0 : index
    %c0_21 = arith.constant 0 : index
    %17 = vector.load %arg10[%c2_19, %c0_20, %c0_21] : memref<5x80x120xf32, #tpu.memory_space<vmem>>, vector<1x80x120xf32>
    %18 = vector.shape_cast %17 : vector<1x80x120xf32> to vector<80x120xf32>
    %cst_22 = arith.constant dense<0.000000e+00> : vector<1x120xf32>
    %19 = tpu.matmul %16, %18, %cst_22 {dimension_numbers = #tpu.dot_dimension_numbers<[1], [0], [0], [1], [0, 0, 1, 1], [], []>} : vector<1x80xf32>, vector<80x120xf32>, vector<1x120xf32> -> vector<1x120xf32>
    %20 = arith.addf %14, %19 : vector<1x120xf32>
    %c3 = arith.constant 3 : index
    %c0_23 = arith.constant 0 : index
    %c0_24 = arith.constant 0 : index
    %21 = vector.load %arg18[%c3, %c0_23, %c0_24] : memref<5x1x80xf32, #tpu.memory_space<vmem>>, vector<1x1x80xf32>
    %22 = vector.shape_cast %21 : vector<1x1x80xf32> to vector<1x80xf32>
    %c3_25 = arith.constant 3 : index
    %c0_26 = arith.constant 0 : index
    %c0_27 = arith.constant 0 : index
    %23 = vector.load %arg10[%c3_25, %c0_26, %c0_27] : memref<5x80x120xf32, #tpu.memory_space<vmem>>, vector<1x80x120xf32>
    %24 = vector.shape_cast %23 : vector<1x80x120xf32> to vector<80x120xf32>
    %cst_28 = arith.constant dense<0.000000e+00> : vector<1x120xf32>
    %25 = tpu.matmul %22, %24, %cst_28 {dimension_numbers = #tpu.dot_dimension_numbers<[1], [0], [0], [1], [0, 0, 1, 1], [], []>} : vector<1x80xf32>, vector<80x120xf32>, vector<1x120xf32> -> vector<1x120xf32>
    %26 = arith.addf %20, %25 : vector<1x120xf32>
    %c4 = arith.constant 4 : index
    %c0_29 = arith.constant 0 : index
    %c0_30 = arith.constant 0 : index
    %27 = vector.load %arg18[%c4, %c0_29, %c0_30] : memref<5x1x80xf32, #tpu.memory_space<vmem>>, vector<1x1x80xf32>
    %28 = vector.shape_cast %27 : vector<1x1x80xf32> to vector<1x80xf32>
    %c4_31 = arith.constant 4 : index
    %c0_32 = arith.constant 0 : index
    %c0_33 = arith.constant 0 : index
    %29 = vector.load %arg10[%c4_31, %c0_32, %c0_33] : memref<5x80x120xf32, #tpu.memory_space<vmem>>, vector<1x80x120xf32>
    %30 = vector.shape_cast %29 : vector<1x80x120xf32> to vector<80x120xf32>
    %cst_34 = arith.constant dense<0.000000e+00> : vector<1x120xf32>
    %31 = tpu.matmul %28, %30, %cst_34 {dimension_numbers = #tpu.dot_dimension_numbers<[1], [0], [0], [1], [0, 0, 1, 1], [], []>} : vector<1x80xf32>, vector<80x120xf32>, vector<1x120xf32> -> vector<1x120xf32>
    %32 = arith.addf %26, %31 : vector<1x120xf32>
    %cst_35 = arith.constant 0.000000e+00 : f32
    %33 = vector.broadcast %cst_35 : f32 to vector<1x120xf32>
    %34 = arith.maximumf %32, %33 : vector<1x120xf32>
    %c0_36 = arith.constant 0 : index
    %c0_37 = arith.constant 0 : index
    %35 = vector.load %arg12[%c0_36, %c0_37] : memref<120x84xf32, #tpu.memory_space<vmem>>, vector<120x84xf32>
    %cst_38 = arith.constant dense<0.000000e+00> : vector<1x84xf32>
    %36 = tpu.matmul %34, %35, %cst_38 {dimension_numbers = #tpu.dot_dimension_numbers<[1], [0], [0], [1], [0, 0, 1, 1], [], []>} : vector<1x120xf32>, vector<120x84xf32>, vector<1x84xf32> -> vector<1x84xf32>
    %c0_39 = arith.constant 0 : index
    %c0_40 = arith.constant 0 : index
    %37 = vector.load %arg13[%c0_39, %c0_40] : memref<1x84xf32, #tpu.memory_space<vmem>>, vector<1x84xf32>
    %38 = arith.addf %36, %37 : vector<1x84xf32>
    %cst_41 = arith.constant 0.000000e+00 : f32
    %39 = vector.broadcast %cst_41 : f32 to vector<1x84xf32>
    %40 = arith.maximumf %38, %39 : vector<1x84xf32>
    %c0_42 = arith.constant 0 : index
    %c0_43 = arith.constant 0 : index
    %41 = vector.load %arg14[%c0_42, %c0_43] : memref<84x10xf32, #tpu.memory_space<vmem>>, vector<84x10xf32>
    %cst_44 = arith.constant dense<0.000000e+00> : vector<1x10xf32>
    %42 = tpu.matmul %40, %41, %cst_44 {dimension_numbers = #tpu.dot_dimension_numbers<[1], [0], [0], [1], [0, 0, 1, 1], [], []>} : vector<1x84xf32>, vector<84x10xf32>, vector<1x10xf32> -> vector<1x10xf32>
    %c0_45 = arith.constant 0 : index
    %c0_46 = arith.constant 0 : index
    %43 = vector.load %arg15[%c0_45, %c0_46] : memref<1x10xf32, #tpu.memory_space<vmem>>, vector<1x10xf32>
    %44 = arith.addf %42, %43 : vector<1x10xf32>
    %cst_47 = arith.constant dense<0xFF800000> : vector<1xf32>
    %45 = vector.multi_reduction <maximumf>, %44, %cst_47 [1] : vector<1x10xf32> to vector<1xf32>
    %46 = vector.shape_cast %45 : vector<1xf32> to vector<1x1xf32>
    %47 = vector.broadcast %46 : vector<1x1xf32> to vector<1x10xf32>
    %48 = arith.subf %44, %47 : vector<1x10xf32>
    %49 = math.exp %48 : vector<1x10xf32>
    %cst_48 = arith.constant dense<0.000000e+00> : vector<1xf32>
    %50 = vector.multi_reduction <add>, %49, %cst_48 [1] : vector<1x10xf32> to vector<1xf32>
    %51 = vector.shape_cast %50 : vector<1xf32> to vector<1x1xf32>
    %52 = tpu.reciprocal %51 : vector<1x1xf32> -> vector<1x1xf32>
    %53 = vector.broadcast %52 : vector<1x1xf32> to vector<1x10xf32>
    %54 = arith.mulf %49, %53 : vector<1x10xf32>
    %c0_49 = arith.constant 0 : index
    %c0_50 = arith.constant 0 : index
    %c0_51 = arith.constant 0 : index
    %55 = vector.load %arg16[%c0_49, %c0_50, %c0_51] : memref<1x1x10xf32, #tpu.memory_space<vmem>>, vector<1x1x10xf32>
    %56 = vector.shape_cast %55 : vector<1x1x10xf32> to vector<1x10xf32>
    %57 = vector.shape_cast %54 : vector<1x10xf32> to vector<1x1x10xf32>
    tpu.vector_store %arg16[%c0_49, %c0_50, %c0_51], %57 {strides = array<i32>} : memref<1x1x10xf32, #tpu.memory_space<vmem>>, vector<1x1x10xf32>,
    return
  }
  func.func @transform_0(%arg0: i32) -> (i32, i32, i32, i32) {
    %c0_i32 = arith.constant 0 : i32
    %c0_i32_0 = arith.constant 0 : i32
    %c0_i32_1 = arith.constant 0 : i32
    %c0_i32_2 = arith.constant 0 : i32
    return %arg0, %c0_i32, %c0_i32_0, %c0_i32_1 : i32, i32, i32, i32
  }
  func.func @transform_1(%arg0: i32) -> (i32, i32, i32) {
    %c0_i32 = arith.constant 0 : i32
    %c0_i32_0 = arith.constant 0 : i32
    %c0_i32_1 = arith.constant 0 : i32
    %c0_i32_2 = arith.constant 0 : i32
    return %c0_i32, %c0_i32_0, %c0_i32_1 : i32, i32, i32
  }
  func.func @transform_2(%arg0: i32) -> (i32, i32) {
    %c0_i32 = arith.constant 0 : i32
    %c0_i32_0 = arith.constant 0 : i32
    %c0_i32_1 = arith.constant 0 : i32
    return %c0_i32, %c0_i32_0 : i32, i32
  }
  func.func @transform_3(%arg0: i32) -> (i32, i32) {
    %c0_i32 = arith.constant 0 : i32
    %c0_i32_0 = arith.constant 0 : i32
    %c0_i32_1 = arith.constant 0 : i32
    return %c0_i32, %c0_i32_0 : i32, i32
  }
  func.func @transform_4(%arg0: i32) -> (i32, i32) {
    %c0_i32 = arith.constant 0 : i32
    %c0_i32_0 = arith.constant 0 : i32
    %c0_i32_1 = arith.constant 0 : i32
    return %c0_i32, %c0_i32_0 : i32, i32
  }
  func.func @transform_5(%arg0: i32) -> (i32, i32, i32) {
    %c0_i32 = arith.constant 0 : i32
    %c0_i32_0 = arith.constant 0 : i32
    %c0_i32_1 = arith.constant 0 : i32
    %c0_i32_2 = arith.constant 0 : i32
    return %c0_i32, %c0_i32_0, %c0_i32_1 : i32, i32, i32
  }
  func.func @transform_6(%arg0: i32) -> (i32, i32) {
    %c0_i32 = arith.constant 0 : i32
    %c0_i32_0 = arith.constant 0 : i32
    %c0_i32_1 = arith.constant 0 : i32
    return %c0_i32, %c0_i32_0 : i32, i32
  }
  func.func @transform_7(%arg0: i32) -> (i32, i32) {
    %c0_i32 = arith.constant 0 : i32
    %c0_i32_0 = arith.constant 0 : i32
    %c0_i32_1 = arith.constant 0 : i32
    return %c0_i32, %c0_i32_0 : i32, i32
  }
  func.func @transform_8(%arg0: i32) -> (i32, i32) {
    %c0_i32 = arith.constant 0 : i32
    %c0_i32_0 = arith.constant 0 : i32
    %c0_i32_1 = arith.constant 0 : i32
    return %c0_i32, %c0_i32_0 : i32, i32
  }
  func.func @transform_9(%arg0: i32) -> (i32, i32, i32) {
    %c0_i32 = arith.constant 0 : i32
    %c0_i32_0 = arith.constant 0 : i32
    %c0_i32_1 = arith.constant 0 : i32
    %c0_i32_2 = arith.constant 0 : i32
    return %c0_i32, %c0_i32_0, %c0_i32_1 : i32, i32, i32
  }
  func.func @transform_10(%arg0: i32) -> (i32, i32) {
    %c0_i32 = arith.constant 0 : i32
    %c0_i32_0 = arith.constant 0 : i32
    %c0_i32_1 = arith.constant 0 : i32
    return %c0_i32, %c0_i32_0 : i32, i32
  }
  func.func @transform_11(%arg0: i32) -> (i32, i32) {
    %c0_i32 = arith.constant 0 : i32
    %c0_i32_0 = arith.constant 0 : i32
    %c0_i32_1 = arith.constant 0 : i32
    return %c0_i32, %c0_i32_0 : i32, i32
  }
  func.func @transform_12(%arg0: i32) -> (i32, i32) {
    %c0_i32 = arith.constant 0 : i32
    %c0_i32_0 = arith.constant 0 : i32
    %c0_i32_1 = arith.constant 0 : i32
    return %c0_i32, %c0_i32_0 : i32, i32
  }
  func.func @transform_13(%arg0: i32) -> (i32, i32) {
    %c0_i32 = arith.constant 0 : i32
    %c0_i32_0 = arith.constant 0 : i32
    %c0_i32_1 = arith.constant 0 : i32
    return %c0_i32, %c0_i32_0 : i32, i32
  }
  func.func @transform_14(%arg0: i32) -> (i32, i32) {
    %c0_i32 = arith.constant 0 : i32
    %c0_i32_0 = arith.constant 0 : i32
    %c0_i32_1 = arith.constant 0 : i32
    return %c0_i32, %c0_i32_0 : i32, i32
  }
  func.func @transform_15(%arg0: i32) -> (i32, i32, i32) {
    %c0_i32 = arith.constant 0 : i32
    %c0_i32_0 = arith.constant 0 : i32
    %c0_i32_1 = arith.constant 0 : i32
    return %arg0, %c0_i32, %c0_i32_0 : i32, i32, i32
  }
}

</mosaic_0001>

<llo_original>
// kernel: net_forward.1
$region0: #{net_forward.1}
  #allocation0 [shape = 'u32[]', space=smem, size = 0x4, offset = 0x4, fixed_abs, tag = 'smem constant byte address 0x4 - core index']
  #allocation1 [shape = 'u32[72,128]{1,0:T(1,128)}', space=vmem, size = 0x9000, scoped, tag = 'internal scratch']
  #allocation2 [shape = 'f32[14,1,84]{2,1,0:T(1,128)}', space=vmem, size = 0x1c00, scoped, tag = 'scratch operand']
  #allocation3 [shape = 'f32[5,1,80]{2,1,0:T(1,128)}', space=vmem, size = 0xa00, scoped, tag = 'scratch operand']
  %s0 = inlined_call_operand.vmem [shape: f32[2,32,1,96], index: 0, kind: input, shape index: {}]
  %s1 = inlined_call_operand.vmem [shape: f32[5,96,168], index: 1, kind: input, shape index: {}]
  %s2 = inlined_call_operand.vmem [shape: f32[1,84], index: 2, kind: input, shape index: {}]
  %s3 = inlined_call_operand.vmem [shape: f32[168,84], index: 3, kind: input, shape index: {}]
  %s4 = inlined_call_operand.vmem [shape: f32[168,84], index: 4, kind: input, shape index: {}]
  %s5 = inlined_call_operand.vmem [shape: f32[5,84,160], index: 5, kind: input, shape index: {}]
  %s6 = inlined_call_operand.vmem [shape: f32[1,80], index: 6, kind: input, shape index: {}]
  %s7 = inlined_call_operand.vmem [shape: f32[160,80], index: 7, kind: input, shape index: {}]
  %s8 = inlined_call_operand.vmem [shape: f32[160,80], index: 8, kind: input, shape index: {}]
  %s9 = inlined_call_operand.vmem [shape: f32[5,80,120], index: 9, kind: input, shape index: {}]
  %s10 = inlined_call_operand.vmem [shape: f32[1,120], index: 10, kind: input, shape index: {}]
  %s11 = inlined_call_operand.vmem [shape: f32[120,84], index: 11, kind: input, shape index: {}]
  %s12 = inlined_call_operand.vmem [shape: f32[1,84], index: 12, kind: input, shape index: {}]
  %s13 = inlined_call_operand.vmem [shape: f32[84,10], index: 13, kind: input, shape index: {}]
  %s14 = inlined_call_operand.vmem [shape: f32[1,10], index: 14, kind: input, shape index: {}]
  %s15 = inlined_call_operand.hbm [shape: f32[2,1,10], index: 15, kind: output, shape index: {}]
  %s16 = sld [smem:[#allocation0]]
  $region107: #{net_forward.1} parent=0
    _
  %s18 = ssub.s32 1, %s16
  %s19 = scalar_select 0, %s18, %s16
  $region1: #{net_forward.1} parent=0
    #allocation4 [shape = 'u8[1024]{0}', space=vmem, size = 0x400, scoped, tag = 'output window, operand 0']
    #allocation5 [shape = 's32[2]{0}', space=sflag, size = 0x8, scoped, tag = 'scoped memory for net_forward.1']
    %20 = vsyncpa [#allocation5], 0
    %s21 = scalar_lea.sflag [#allocation5], 1
    %22 = vsyncpa %s21, 0
    loop: start=0, step=1, limit=4
    $region2: #{net_forward.1} parent=1 // loop_pre_header
      _
    $region3: #{net_forward.1} parent=1 // loop_header
      %s24 = sphi 0, %s28
      %p25 = scmp.ge.s32.totalorder %s24, 4
      %s34 = sphi 0, %s36
      %s37 = sphi 0, %s34
      %s38 = sphi 0, %s37
      %s54 = sphi 0, %s38
      %s58 = sphi 0, %s58
      %s60 = sphi 0, %s58
      %s61 = sphi 0, %s60
      %s75 = sphi 0, %s61
      %s79 = sphi 0, %s79
      %s81 = sphi 0, %s79
      %s82 = sphi 0, %s81
      %s96 = sphi 0, %s82
      %s100 = sphi 0, %s100
      %s102 = sphi 0, %s100
      %s103 = sphi 0, %s102
      %s117 = sphi 0, %s103
      %s121 = sphi 0, %s121
      %s123 = sphi 0, %s121
      %s124 = sphi 0, %s123
      %s138 = sphi 0, %s124
      %s142 = sphi 0, %s142
      %s144 = sphi 0, %s142
      %s145 = sphi 0, %s144
      %s159 = sphi 0, %s145
      %s163 = sphi 0, %s163
      %s165 = sphi 0, %s163
      %s166 = sphi 0, %s165
      %s180 = sphi 0, %s166
      %s184 = sphi 0, %s184
      %s186 = sphi 0, %s184
      %s187 = sphi 0, %s186
      %s201 = sphi 0, %s187
      %s205 = sphi 0, %s205
      %s207 = sphi 0, %s205
      %s208 = sphi 0, %s207
      %s222 = sphi 0, %s208
      %s226 = sphi 0, %s226
      %s228 = sphi 0, %s226
      %s229 = sphi 0, %s228
      %s243 = sphi 0, %s229
      %s247 = sphi 0, %s247
      %s249 = sphi 0, %s247
      %s250 = sphi 0, %s249
      %s264 = sphi 0, %s250
      %s268 = sphi 0, %s268
      %s270 = sphi 0, %s268
      %s271 = sphi 0, %s270
      %s285 = sphi 0, %s271
      %s289 = sphi 0, %s289
      %s291 = sphi 0, %s289
      %s292 = sphi 0, %s291
      %s306 = sphi 0, %s292
      %s310 = sphi 0, %s310
      %s312 = sphi 0, %s310
      %s313 = sphi 0, %s312
      %s327 = sphi 0, %s313
      %s331 = sphi 0, %s331
      %s333 = sphi 0, %s331
      %s334 = sphi 0, %s333
      %s348 = sphi 0, %s334
      %s354 = sphi 0, %s356
      %s357 = sphi 0, %s354
      %s358 = sphi 0, %s357
      %s374 = sphi 0, %s358
    $region4: #{net_forward.1} parent=1 // loop_header_branch
      %27 = sbr.rel (%p25) target = $region8
    $region5: #{net_forward.1} parent=1 // loop_body
      %s29 = ssub.s32 %s24, 1
      %s30 = ssub.s32 %s24, 2
      %s31 = sadd.s32 %s24, 1
      %s32 = ssub.s32 %s24, %s31
      %p33 = scmp.eq.s32.totalorder %s32, 0
      %s35 = sadd.s32 %s34, 1
      %s36 = scalar_select %p33, %s34, %s35
      %p39 = pneg %p33
      %p40 = scmp.eq.s32.totalorder %s24, 1
      %p41 = por %p39, %p40
      %p42 = scmp.ne.s32.totalorder %s34, %s37
      %p43 = scmp.eq.s32.totalorder %s24, 0
      %p44 = por %p42, %p43
      %p45 = scmp.ne.s32.totalorder %s34, %s37
      %p46 = scmp.eq.s32.totalorder %s29, 1
      %p47 = por %p45, %p46
      %p48 = scmp.ne.s32.totalorder %s37, %s38
      %p49 = scmp.eq.s32.totalorder %s29, 0
      %p50 = por %p48, %p49
      %p51 = scmp.ne.s32.totalorder %s37, %s38
      %p52 = scmp.eq.s32.totalorder %s30, 1
      %p53 = por %p51, %p52
      %p55 = scmp.ne.s32.totalorder %s38, %s54
      %p56 = scmp.eq.s32.totalorder %s30, 0
      %p57 = por %p55, %p56
      %s59 = sadd.s32 %s58, 1
      %p62 = scmp.eq.s32.totalorder %s24, 1
      %p63 = scmp.ne.s32.totalorder %s58, %s60
      %p64 = scmp.eq.s32.totalorder %s24, 0
      %p65 = por %p63, %p64
      %p66 = scmp.ne.s32.totalorder %s58, %s60
      %p67 = scmp.eq.s32.totalorder %s29, 1
      %p68 = por %p66, %p67
      %p69 = scmp.ne.s32.totalorder %s60, %s61
      %p70 = scmp.eq.s32.totalorder %s29, 0
      %p71 = por %p69, %p70
      %p72 = scmp.ne.s32.totalorder %s60, %s61
      %p73 = scmp.eq.s32.totalorder %s30, 1
      %p74 = por %p72, %p73
      %p76 = scmp.ne.s32.totalorder %s61, %s75
      %p77 = scmp.eq.s32.totalorder %s30, 0
      %p78 = por %p76, %p77
      %s80 = sadd.s32 %s79, 1
      %p83 = scmp.eq.s32.totalorder %s24, 1
      %p84 = scmp.ne.s32.totalorder %s79, %s81
      %p85 = scmp.eq.s32.totalorder %s24, 0
      %p86 = por %p84, %p85
      %p87 = scmp.ne.s32.totalorder %s79, %s81
      %p88 = scmp.eq.s32.totalorder %s29, 1
      %p89 = por %p87, %p88
      %p90 = scmp.ne.s32.totalorder %s81, %s82
      %p91 = scmp.eq.s32.totalorder %s29, 0
      %p92 = por %p90, %p91
      %p93 = scmp.ne.s32.totalorder %s81, %s82
      %p94 = scmp.eq.s32.totalorder %s30, 1
      %p95 = por %p93, %p94
      %p97 = scmp.ne.s32.totalorder %s82, %s96
      %p98 = scmp.eq.s32.totalorder %s30, 0
      %p99 = por %p97, %p98
      %s101 = sadd.s32 %s100, 1
      %p104 = scmp.eq.s32.totalorder %s24, 1
      %p105 = scmp.ne.s32.totalorder %s100, %s102
      %p106 = scmp.eq.s32.totalorder %s24, 0
      %p107 = por %p105, %p106
      %p108 = scmp.ne.s32.totalorder %s100, %s102
      %p109 = scmp.eq.s32.totalorder %s29, 1
      %p110 = por %p108, %p109
      %p111 = scmp.ne.s32.totalorder %s102, %s103
      %p112 = scmp.eq.s32.totalorder %s29, 0
      %p113 = por %p111, %p112
      %p114 = scmp.ne.s32.totalorder %s102, %s103
      %p115 = scmp.eq.s32.totalorder %s30, 1
      %p116 = por %p114, %p115
      %p118 = scmp.ne.s32.totalorder %s103, %s117
      %p119 = scmp.eq.s32.totalorder %s30, 0
      %p120 = por %p118, %p119
      %s122 = sadd.s32 %s121, 1
      %p125 = scmp.eq.s32.totalorder %s24, 1
      %p126 = scmp.ne.s32.totalorder %s121, %s123
      %p127 = scmp.eq.s32.totalorder %s24, 0
      %p128 = por %p126, %p127
      %p129 = scmp.ne.s32.totalorder %s121, %s123
      %p130 = scmp.eq.s32.totalorder %s29, 1
      %p131 = por %p129, %p130
      %p132 = scmp.ne.s32.totalorder %s123, %s124
      %p133 = scmp.eq.s32.totalorder %s29, 0
      %p134 = por %p132, %p133
      %p135 = scmp.ne.s32.totalorder %s123, %s124
      %p136 = scmp.eq.s32.totalorder %s30, 1
      %p137 = por %p135, %p136
      %p139 = scmp.ne.s32.totalorder %s124, %s138
      %p140 = scmp.eq.s32.totalorder %s30, 0
      %p141 = por %p139, %p140
      %s143 = sadd.s32 %s142, 1
      %p146 = scmp.eq.s32.totalorder %s24, 1
      %p147 = scmp.ne.s32.totalorder %s142, %s144
      %p148 = scmp.eq.s32.totalorder %s24, 0
      %p149 = por %p147, %p148
      %p150 = scmp.ne.s32.totalorder %s142, %s144
      %p151 = scmp.eq.s32.totalorder %s29, 1
      %p152 = por %p150, %p151
      %p153 = scmp.ne.s32.totalorder %s144, %s145
      %p154 = scmp.eq.s32.totalorder %s29, 0
      %p155 = por %p153, %p154
      %p156 = scmp.ne.s32.totalorder %s144, %s145
      %p157 = scmp.eq.s32.totalorder %s30, 1
      %p158 = por %p156, %p157
      %p160 = scmp.ne.s32.totalorder %s145, %s159
      %p161 = scmp.eq.s32.totalorder %s30, 0
      %p162 = por %p160, %p161
      %s164 = sadd.s32 %s163, 1
      %p167 = scmp.eq.s32.totalorder %s24, 1
      %p168 = scmp.ne.s32.totalorder %s163, %s165
      %p169 = scmp.eq.s32.totalorder %s24, 0
      %p170 = por %p168, %p169
      %p171 = scmp.ne.s32.totalorder %s163, %s165
      %p172 = scmp.eq.s32.totalorder %s29, 1
      %p173 = por %p171, %p172
      %p174 = scmp.ne.s32.totalorder %s165, %s166
      %p175 = scmp.eq.s32.totalorder %s29, 0
      %p176 = por %p174, %p175
      %p177 = scmp.ne.s32.totalorder %s165, %s166
      %p178 = scmp.eq.s32.totalorder %s30, 1
      %p179 = por %p177, %p178
      %p181 = scmp.ne.s32.totalorder %s166, %s180
      %p182 = scmp.eq.s32.totalorder %s30, 0
      %p183 = por %p181, %p182
      %s185 = sadd.s32 %s184, 1
      %p188 = scmp.eq.s32.totalorder %s24, 1
      %p189 = scmp.ne.s32.totalorder %s184, %s186
      %p190 = scmp.eq.s32.totalorder %s24, 0
      %p191 = por %p189, %p190
      %p192 = scmp.ne.s32.totalorder %s184, %s186
      %p193 = scmp.eq.s32.totalorder %s29, 1
      %p194 = por %p192, %p193
      %p195 = scmp.ne.s32.totalorder %s186, %s187
      %p196 = scmp.eq.s32.totalorder %s29, 0
      %p197 = por %p195, %p196
      %p198 = scmp.ne.s32.totalorder %s186, %s187
      %p199 = scmp.eq.s32.totalorder %s30, 1
      %p200 = por %p198, %p199
      %p202 = scmp.ne.s32.totalorder %s187, %s201
      %p203 = scmp.eq.s32.totalorder %s30, 0
      %p204 = por %p202, %p203
      %s206 = sadd.s32 %s205, 1
      %p209 = scmp.eq.s32.totalorder %s24, 1
      %p210 = scmp.ne.s32.totalorder %s205, %s207
      %p211 = scmp.eq.s32.totalorder %s24, 0
      %p212 = por %p210, %p211
      %p213 = scmp.ne.s32.totalorder %s205, %s207
      %p214 = scmp.eq.s32.totalorder %s29, 1
      %p215 = por %p213, %p214
      %p216 = scmp.ne.s32.totalorder %s207, %s208
      %p217 = scmp.eq.s32.totalorder %s29, 0
      %p218 = por %p216, %p217
      %p219 = scmp.ne.s32.totalorder %s207, %s208
      %p220 = scmp.eq.s32.totalorder %s30, 1
      %p221 = por %p219, %p220
      %p223 = scmp.ne.s32.totalorder %s208, %s222
      %p224 = scmp.eq.s32.totalorder %s30, 0
      %p225 = por %p223, %p224
      %s227 = sadd.s32 %s226, 1
      %p230 = scmp.eq.s32.totalorder %s24, 1
      %p231 = scmp.ne.s32.totalorder %s226, %s228
      %p232 = scmp.eq.s32.totalorder %s24, 0
      %p233 = por %p231, %p232
      %p234 = scmp.ne.s32.totalorder %s226, %s228
      %p235 = scmp.eq.s32.totalorder %s29, 1
      %p236 = por %p234, %p235
      %p237 = scmp.ne.s32.totalorder %s228, %s229
      %p238 = scmp.eq.s32.totalorder %s29, 0
      %p239 = por %p237, %p238
      %p240 = scmp.ne.s32.totalorder %s228, %s229
      %p241 = scmp.eq.s32.totalorder %s30, 1
      %p242 = por %p240, %p241
      %p244 = scmp.ne.s32.totalorder %s229, %s243
      %p245 = scmp.eq.s32.totalorder %s30, 0
      %p246 = por %p244, %p245
      %s248 = sadd.s32 %s247, 1
      %p251 = scmp.eq.s32.totalorder %s24, 1
      %p252 = scmp.ne.s32.totalorder %s247, %s249
      %p253 = scmp.eq.s32.totalorder %s24, 0
      %p254 = por %p252, %p253
      %p255 = scmp.ne.s32.totalorder %s247, %s249
      %p256 = scmp.eq.s32.totalorder %s29, 1
      %p257 = por %p255, %p256
      %p258 = scmp.ne.s32.totalorder %s249, %s250
      %p259 = scmp.eq.s32.totalorder %s29, 0
      %p260 = por %p258, %p259
      %p261 = scmp.ne.s32.totalorder %s249, %s250
      %p262 = scmp.eq.s32.totalorder %s30, 1
      %p263 = por %p261, %p262
      %p265 = scmp.ne.s32.totalorder %s250, %s264
      %p266 = scmp.eq.s32.totalorder %s30, 0
      %p267 = por %p265, %p266
      %s269 = sadd.s32 %s268, 1
      %p272 = scmp.eq.s32.totalorder %s24, 1
      %p273 = scmp.ne.s32.totalorder %s268, %s270
      %p274 = scmp.eq.s32.totalorder %s24, 0
      %p275 = por %p273, %p274
      %p276 = scmp.ne.s32.totalorder %s268, %s270
      %p277 = scmp.eq.s32.totalorder %s29, 1
      %p278 = por %p276, %p277
      %p279 = scmp.ne.s32.totalorder %s270, %s271
      %p280 = scmp.eq.s32.totalorder %s29, 0
      %p281 = por %p279, %p280
      %p282 = scmp.ne.s32.totalorder %s270, %s271
      %p283 = scmp.eq.s32.totalorder %s30, 1
      %p284 = por %p282, %p283
      %p286 = scmp.ne.s32.totalorder %s271, %s285
      %p287 = scmp.eq.s32.totalorder %s30, 0
      %p288 = por %p286, %p287
      %s290 = sadd.s32 %s289, 1
      %p293 = scmp.eq.s32.totalorder %s24, 1
      %p294 = scmp.ne.s32.totalorder %s289, %s291
      %p295 = scmp.eq.s32.totalorder %s24, 0
      %p296 = por %p294, %p295
      %p297 = scmp.ne.s32.totalorder %s289, %s291
      %p298 = scmp.eq.s32.totalorder %s29, 1
      %p299 = por %p297, %p298
      %p300 = scmp.ne.s32.totalorder %s291, %s292
      %p301 = scmp.eq.s32.totalorder %s29, 0
      %p302 = por %p300, %p301
      %p303 = scmp.ne.s32.totalorder %s291, %s292
      %p304 = scmp.eq.s32.totalorder %s30, 1
      %p305 = por %p303, %p304
      %p307 = scmp.ne.s32.totalorder %s292, %s306
      %p308 = scmp.eq.s32.totalorder %s30, 0
      %p309 = por %p307, %p308
      %s311 = sadd.s32 %s310, 1
      %p314 = scmp.eq.s32.totalorder %s24, 1
      %p315 = scmp.ne.s32.totalorder %s310, %s312
      %p316 = scmp.eq.s32.totalorder %s24, 0
      %p317 = por %p315, %p316
      %p318 = scmp.ne.s32.totalorder %s310, %s312
      %p319 = scmp.eq.s32.totalorder %s29, 1
      %p320 = por %p318, %p319
      %p321 = scmp.ne.s32.totalorder %s312, %s313
      %p322 = scmp.eq.s32.totalorder %s29, 0
      %p323 = por %p321, %p322
      %p324 = scmp.ne.s32.totalorder %s312, %s313
      %p325 = scmp.eq.s32.totalorder %s30, 1
      %p326 = por %p324, %p325
      %p328 = scmp.ne.s32.totalorder %s313, %s327
      %p329 = scmp.eq.s32.totalorder %s30, 0
      %p330 = por %p328, %p329
      %s332 = sadd.s32 %s331, 1
      %p335 = scmp.eq.s32.totalorder %s24, 1
      %p336 = scmp.ne.s32.totalorder %s331, %s333
      %p337 = scmp.eq.s32.totalorder %s24, 0
      %p338 = por %p336, %p337
      %p339 = scmp.ne.s32.totalorder %s331, %s333
      %p340 = scmp.eq.s32.totalorder %s29, 1
      %p341 = por %p339, %p340
      %p342 = scmp.ne.s32.totalorder %s333, %s334
      %p343 = scmp.eq.s32.totalorder %s29, 0
      %p344 = por %p342, %p343
      %p345 = scmp.ne.s32.totalorder %s333, %s334
      %p346 = scmp.eq.s32.totalorder %s30, 1
      %p347 = por %p345, %p346
      %p349 = scmp.ne.s32.totalorder %s334, %s348
      %p350 = scmp.eq.s32.totalorder %s30, 0
      %p351 = por %p349, %p350
      %s352 = ssub.s32 %s24, %s31
      %p353 = scmp.eq.s32.totalorder %s352, 0
      %s355 = sadd.s32 %s354, 1
      %s356 = scalar_select %p353, %s354, %s355
      %p359 = pneg %p353
      %p360 = scmp.eq.s32.totalorder %s24, 1
      %p361 = por %p359, %p360
      %p362 = scmp.ne.s32.totalorder %s354, %s357
      %p363 = scmp.eq.s32.totalorder %s24, 0
      %p364 = por %p362, %p363
      %p365 = scmp.ne.s32.totalorder %s354, %s357
      %p366 = scmp.eq.s32.totalorder %s29, 1
      %p367 = por %p365, %p366
      %p368 = scmp.ne.s32.totalorder %s357, %s358
      %p369 = scmp.eq.s32.totalorder %s29, 0
      %p370 = por %p368, %p369
      %p371 = scmp.ne.s32.totalorder %s357, %s358
      %p372 = scmp.eq.s32.totalorder %s30, 1
      %p373 = por %p371, %p372
      %p375 = scmp.ne.s32.totalorder %s358, %s374
      %p376 = scmp.eq.s32.totalorder %s30, 0
      %p377 = por %p375, %p376
      %p378 = scmp.le.s32.totalorder 1, %s24
      %p379 = scmp.lt.s32.totalorder %s24, 3
      %p380 = pnand %p378, %p379
      %p381 = pneg %p380
      // Predicated region
      $region9: #{net_forward.1} parent=5 // pred_check
        _
      $region10: #{net_forward.1} parent=5 // pred_check_branch
        %383 = sbr.rel (%p380) target = $region12
      $region11: #{net_forward.1} parent=5 // pred_region
        %s384 = ssub.s32 %s24, 1
        // Predicated region
        $region13: #{net_forward.1} parent=11 // pred_check
          %p385 = pneg %p71
        $region14: #{net_forward.1} parent=11 // pred_check_branch
          %387 = sbr.rel (%p385) target = $region16
        $region15: #{net_forward.1} parent=11 // pred_region
          _
        $region16: #{net_forward.1} parent=11 // pred_fallthru
          _
        // Predicated region
        $region17: #{net_forward.1} parent=11 // pred_check
          %p388 = pneg %p92
        $region18: #{net_forward.1} parent=11 // pred_check_branch
          %390 = sbr.rel (%p388) target = $region20
        $region19: #{net_forward.1} parent=11 // pred_region
          _
        $region20: #{net_forward.1} parent=11 // pred_fallthru
          _
        // Predicated region
        $region21: #{net_forward.1} parent=11 // pred_check
          %p391 = pneg %p113
        $region22: #{net_forward.1} parent=11 // pred_check_branch
          %393 = sbr.rel (%p391) target = $region24
        $region23: #{net_forward.1} parent=11 // pred_region
          _
        $region24: #{net_forward.1} parent=11 // pred_fallthru
          _
        // Predicated region
        $region25: #{net_forward.1} parent=11 // pred_check
          %p394 = pneg %p134
        $region26: #{net_forward.1} parent=11 // pred_check_branch
          %396 = sbr.rel (%p394) target = $region28
        $region27: #{net_forward.1} parent=11 // pred_region
          _
        $region28: #{net_forward.1} parent=11 // pred_fallthru
          _
        // Predicated region
        $region29: #{net_forward.1} parent=11 // pred_check
          %p397 = pneg %p155
        $region30: #{net_forward.1} parent=11 // pred_check_branch
          %399 = sbr.rel (%p397) target = $region32
        $region31: #{net_forward.1} parent=11 // pred_region
          _
        $region32: #{net_forward.1} parent=11 // pred_fallthru
          _
        // Predicated region
        $region33: #{net_forward.1} parent=11 // pred_check
          %p400 = pneg %p176
        $region34: #{net_forward.1} parent=11 // pred_check_branch
          %402 = sbr.rel (%p400) target = $region36
        $region35: #{net_forward.1} parent=11 // pred_region
          _
        $region36: #{net_forward.1} parent=11 // pred_fallthru
          _
        // Predicated region
        $region37: #{net_forward.1} parent=11 // pred_check
          %p403 = pneg %p197
        $region38: #{net_forward.1} parent=11 // pred_check_branch
          %405 = sbr.rel (%p403) target = $region40
        $region39: #{net_forward.1} parent=11 // pred_region
          _
        $region40: #{net_forward.1} parent=11 // pred_fallthru
          _
        // Predicated region
        $region41: #{net_forward.1} parent=11 // pred_check
          %p406 = pneg %p218
        $region42: #{net_forward.1} parent=11 // pred_check_branch
          %408 = sbr.rel (%p406) target = $region44
        $region43: #{net_forward.1} parent=11 // pred_region
          _
        $region44: #{net_forward.1} parent=11 // pred_fallthru
          _
        // Predicated region
        $region45: #{net_forward.1} parent=11 // pred_check
          %p409 = pneg %p239
        $region46: #{net_forward.1} parent=11 // pred_check_branch
          %411 = sbr.rel (%p409) target = $region48
        $region47: #{net_forward.1} parent=11 // pred_region
          _
        $region48: #{net_forward.1} parent=11 // pred_fallthru
          _
        // Predicated region
        $region49: #{net_forward.1} parent=11 // pred_check
          %p412 = pneg %p260
        $region50: #{net_forward.1} parent=11 // pred_check_branch
          %414 = sbr.rel (%p412) target = $region52
        $region51: #{net_forward.1} parent=11 // pred_region
          _
        $region52: #{net_forward.1} parent=11 // pred_fallthru
          _
        // Predicated region
        $region53: #{net_forward.1} parent=11 // pred_check
          %p415 = pneg %p281
        $region54: #{net_forward.1} parent=11 // pred_check_branch
          %417 = sbr.rel (%p415) target = $region56
        $region55: #{net_forward.1} parent=11 // pred_region
          _
        $region56: #{net_forward.1} parent=11 // pred_fallthru
          _
        // Predicated region
        $region57: #{net_forward.1} parent=11 // pred_check
          %p418 = pneg %p302
        $region58: #{net_forward.1} parent=11 // pred_check_branch
          %420 = sbr.rel (%p418) target = $region60
        $region59: #{net_forward.1} parent=11 // pred_region
          _
        $region60: #{net_forward.1} parent=11 // pred_fallthru
          _
        // Predicated region
        $region61: #{net_forward.1} parent=11 // pred_check
          %p421 = pneg %p323
        $region62: #{net_forward.1} parent=11 // pred_check_branch
          %423 = sbr.rel (%p421) target = $region64
        $region63: #{net_forward.1} parent=11 // pred_region
          _
        $region64: #{net_forward.1} parent=11 // pred_fallthru
          _
        // Predicated region
        $region65: #{net_forward.1} parent=11 // pred_check
          %p424 = pneg %p344
        $region66: #{net_forward.1} parent=11 // pred_check_branch
          %426 = sbr.rel (%p424) target = $region68
        $region67: #{net_forward.1} parent=11 // pred_region
          _
        $region68: #{net_forward.1} parent=11 // pred_fallthru
          _
      $region12: #{net_forward.1} parent=5 // pred_fallthru
        _
      %p427 = scmp.lt.s32.totalorder %s24, 2
      // Predicated region
      $region69: #{net_forward.1} parent=5 // pred_check
        %p428 = pneg %p427
      $region70: #{net_forward.1} parent=5 // pred_check_branch
        %430 = sbr.rel (%p428) target = $region72
      $region71: #{net_forward.1} parent=5 // pred_region
        // Predicated region
        $region73: #{net_forward.1} parent=71 // pred_check
          %p431 = pneg %p44
        $region74: #{net_forward.1} parent=71 // pred_check_branch
          %433 = sbr.rel (%p431) target = $region76
        $region75: #{net_forward.1} parent=71 // pred_region
          %p434 = scmp.lt.s32.totalorder %s24, 1
          %s435 = scalar_select %p434, %s24, 1
          %s436 = smul.addr %s435, 32
          %s437 = scalar_lea.vmem %s0, %s436
        $region76: #{net_forward.1} parent=71 // pred_fallthru
          _
      $region72: #{net_forward.1} parent=5 // pred_fallthru
        _
      %p438 = scmp.le.s32.totalorder 1, %s24
      %p439 = scmp.lt.s32.totalorder %s24, 3
      %p440 = pnand %p438, %p439
      %p441 = pneg %p440
      // Predicated region
      $region77: #{net_forward.1} parent=5 // pred_check
        _
      $region78: #{net_forward.1} parent=5 // pred_check_branch
        %443 = sbr.rel (%p440) target = $region80
      $region79: #{net_forward.1} parent=5 // pred_region
        %s444 = ssub.s32 %s24, 1
        %p445 = scmp.lt.s32.totalorder %s29, 1
        %s446 = scalar_select %p445, %s29, 1
        %s447 = smul.addr %s446, 32
        %s448 = scalar_lea.vmem %s0, %s447
        %p449 = pneg %p50
        %p450 = pneg %p47
        %p451 = pneg %p71
        %p452 = pneg %p68
        %p453 = pneg %p92
        %p454 = pneg %p89
        %p455 = pneg %p113
        %p456 = pneg %p110
        %p457 = pneg %p134
        %p458 = pneg %p131
        %p459 = pneg %p155
        %p460 = pneg %p152
        %p461 = pneg %p176
        %p462 = pneg %p173
        %p463 = pneg %p197
        %p464 = pneg %p194
        %p465 = pneg %p218
        %p466 = pneg %p215
        %p467 = pneg %p239
        %p468 = pneg %p236
        %p469 = pneg %p260
        %p470 = pneg %p257
        %p471 = pneg %p281
        %p472 = pneg %p278
        %p473 = pneg %p302
        %p474 = pneg %p299
        %p475 = pneg %p323
        %p476 = pneg %p320
        %p477 = pneg %p344
        %p478 = pneg %p341
        %p479 = pneg %p370
        %p480 = pneg %p367
        %s481 = sand.u32 %s357, 1
        %s482 = scalar_lea.sflag [#allocation5], %s481
        %s483 = sand.u32 %s357, 1
        %s484 = scalar_lea.vmem [#allocation4], %s483
        %p485 = scmp.lt.s32.totalorder %s29, 1
        %s486 = scalar_select %p485, %s29, 1
        %s487 = smul.addr %s486, 32
        %s488 = scalar_lea.vmem %s0, %s487
        loop: start=0, step=1, limit=14
        $region81: #{net_forward.1} parent=79 // loop_pre_header
          _
        $region82: #{net_forward.1} parent=79 // loop_header
          %s490 = sphi 0, %s494
          %p491 = scmp.ge.s32.totalorder %s490, 14
        $region83: #{net_forward.1} parent=79 // loop_header_branch
          %493 = sbr.rel (%p491) target = $region87
        $region84: #{net_forward.1} parent=79 // loop_body
          %s495 = smul.u32 %s490, 2
          %s496 = scalar_lea.vmem %s488, %s495
          %v497 = vld [vmem:[%s496] sm:$0x1]
          %v498 = vld [vmem:[%s1] sm:$0xff]
          %v499 = vld [vmem:[%s1 + $0x8] sm:$0xff]
          %v500 = vld [vmem:[%s1 + $0x10] sm:$0xff]
          %v501 = vld [vmem:[%s1 + $0x18] sm:$0xff]
          %v502 = vld [vmem:[%s1 + $0x20] sm:$0xff]
          %v503 = vld [vmem:[%s1 + $0x28] sm:$0xff]
          %v504 = vld [vmem:[%s1 + $0x30] sm:$0xff]
          %v505 = vld [vmem:[%s1 + $0x38] sm:$0xff]
          %v506 = vld [vmem:[%s1 + $0x40] sm:$0xff]
          %v507 = vld [vmem:[%s1 + $0x48] sm:$0xff]
          %v508 = vld [vmem:[%s1 + $0x50] sm:$0xff]
          %v509 = vld [vmem:[%s1 + $0x58] sm:$0xff]
          %v510 = vld [vmem:[%s1 + $0x60] sm:$0xff]
          %v511 = vld [vmem:[%s1 + $0x68] sm:$0xff]
          %v512 = vld [vmem:[%s1 + $0x70] sm:$0xff]
          %v513 = vld [vmem:[%s1 + $0x78] sm:$0xff]
          %v514 = vld [vmem:[%s1 + $0x80] sm:$0xff]
          %v515 = vld [vmem:[%s1 + $0x88] sm:$0xff]
          %v516 = vld [vmem:[%s1 + $0x90] sm:$0xff]
          %v517 = vld [vmem:[%s1 + $0x98] sm:$0xff]
          %v518 = vld [vmem:[%s1 + $0xa0] sm:$0xff]
          %v519 = vld [vmem:[%s1 + $0xa8] sm:$0xff]
          %v520 = vld [vmem:[%s1 + $0xb0] sm:$0xff]
          %v521 = vld [vmem:[%s1 + $0xb8] sm:$0xff]
          %s522 = sadd.s32 %s495, 1
          %s523 = scalar_lea.vmem %s488, %s522
          %v524 = vld [vmem:[%s523] sm:$0x1]
          %s525 = scalar_lea.vmem %s1, 192
          %v526 = vld [vmem:[%s525] sm:$0xff]
          %v527 = vld [vmem:[%s525 + $0x8] sm:$0xff]
          %v528 = vld [vmem:[%s525 + $0x10] sm:$0xff]
          %v529 = vld [vmem:[%s525 + $0x18] sm:$0xff]
          %v530 = vld [vmem:[%s525 + $0x20] sm:$0xff]
          %v531 = vld [vmem:[%s525 + $0x28] sm:$0xff]
          %v532 = vld [vmem:[%s525 + $0x30] sm:$0xff]
          %v533 = vld [vmem:[%s525 + $0x38] sm:$0xff]
          %v534 = vld [vmem:[%s525 + $0x40] sm:$0xff]
          %v535 = vld [vmem:[%s525 + $0x48] sm:$0xff]
          %v536 = vld [vmem:[%s525 + $0x50] sm:$0xff]
          %v537 = vld [vmem:[%s525 + $0x58] sm:$0xff]
          %v538 = vld [vmem:[%s525 + $0x60] sm:$0xff]
          %v539 = vld [vmem:[%s525 + $0x68] sm:$0xff]
          %v540 = vld [vmem:[%s525 + $0x70] sm:$0xff]
          %v541 = vld [vmem:[%s525 + $0x78] sm:$0xff]
          %v542 = vld [vmem:[%s525 + $0x80] sm:$0xff]
          %v543 = vld [vmem:[%s525 + $0x88] sm:$0xff]
          %v544 = vld [vmem:[%s525 + $0x90] sm:$0xff]
          %v545 = vld [vmem:[%s525 + $0x98] sm:$0xff]
          %v546 = vld [vmem:[%s525 + $0xa0] sm:$0xff]
          %v547 = vld [vmem:[%s525 + $0xa8] sm:$0xff]
          %v548 = vld [vmem:[%s525 + $0xb0] sm:$0xff]
          %v549 = vld [vmem:[%s525 + $0xb8] sm:$0xff]
          %vm550 = vcmask 785408
          %v552 = vsel %vm550, %v524, 0
          %554 = vmatpush.msra.mxu0 0.0
          %555 = vmatpush.msra.mxu0 0.0
          %556 = vmatpush.msra.mxu0 0.0
          %557 = vmatpush.msra.mxu0 0.0
          %558 = vmatpush.msra.mxu0 %v548
          %559 = vmatpush.msra.mxu0 %v546
          %560 = vmatpush.msra.mxu0 %v544
          %561 = vmatpush.msra.mxu0 %v542
          %562 = vmatpush.msra.mxu0 %v540
          %563 = vmatpush.msra.mxu0 %v538
          %564 = vmatpush.msra.mxu0 %v536
          %565 = vmatpush.msra.mxu0 %v534
          %566 = vmatpush.msra.mxu0 %v532
          %567 = vmatpush.msra.mxu0 %v530
          %568 = vmatpush.msra.mxu0 %v528
          %569 = vmatpush.msra.mxu0 %v526
          %570 = vmatmul.f32.gmra.mxu0 %v552
          %v571 = vpop.f32.mrf.mxu0
          %v572 = vadd.f32 0.0, %v571
          %573 = vdwg.mxu0
          %574 = vmatpush.msra.mxu0 0.0
          %575 = vmatpush.msra.mxu0 0.0
          %576 = vmatpush.msra.mxu0 0.0
          %577 = vmatpush.msra.mxu0 0.0
          %578 = vmatpush.msra.mxu0 %v549
          %579 = vmatpush.msra.mxu0 %v547
          %580 = vmatpush.msra.mxu0 %v545
          %581 = vmatpush.msra.mxu0 %v543
          %582 = vmatpush.msra.mxu0 %v541
          %583 = vmatpush.msra.mxu0 %v539
          %584 = vmatpush.msra.mxu0 %v537
          %585 = vmatpush.msra.mxu0 %v535
          %586 = vmatpush.msra.mxu0 %v533
          %587 = vmatpush.msra.mxu0 %v531
          %588 = vmatpush.msra.mxu0 %v529
          %589 = vmatpush.msra.mxu0 %v527
          %590 = vmatmul.f32.gmra.mxu0 %v552
          %v591 = vpop.f32.mrf.mxu0
          %v592 = vadd.f32 0.0, %v591
          %593 = vdwg.mxu0
          %v595 = vsel %vm550, %v497, 0
          %597 = vmatpush.msra.mxu0 0.0
          %598 = vmatpush.msra.mxu0 0.0
          %599 = vmatpush.msra.mxu0 0.0
          %600 = vmatpush.msra.mxu0 0.0
          %601 = vmatpush.msra.mxu0 %v520
          %602 = vmatpush.msra.mxu0 %v518
          %603 = vmatpush.msra.mxu0 %v516
          %604 = vmatpush.msra.mxu0 %v514
          %605 = vmatpush.msra.mxu0 %v512
          %606 = vmatpush.msra.mxu0 %v510
          %607 = vmatpush.msra.mxu0 %v508
          %608 = vmatpush.msra.mxu0 %v506
          %609 = vmatpush.msra.mxu0 %v504
          %610 = vmatpush.msra.mxu0 %v502
          %611 = vmatpush.msra.mxu0 %v500
          %612 = vmatpush.msra.mxu0 %v498
          %613 = vmatmul.f32.gmra.mxu0 %v595
          %v614 = vpop.f32.mrf.mxu0
          %v615 = vadd.f32 %v572, %v614
          %616 = vdwg.mxu0
          %617 = vmatpush.msra.mxu0 0.0
          %618 = vmatpush.msra.mxu0 0.0
          %619 = vmatpush.msra.mxu0 0.0
          %620 = vmatpush.msra.mxu0 0.0
          %621 = vmatpush.msra.mxu0 %v521
          %622 = vmatpush.msra.mxu0 %v519
          %623 = vmatpush.msra.mxu0 %v517
          %624 = vmatpush.msra.mxu0 %v515
          %625 = vmatpush.msra.mxu0 %v513
          %626 = vmatpush.msra.mxu0 %v511
          %627 = vmatpush.msra.mxu0 %v509
          %628 = vmatpush.msra.mxu0 %v507
          %629 = vmatpush.msra.mxu0 %v505
          %630 = vmatpush.msra.mxu0 %v503
          %631 = vmatpush.msra.mxu0 %v501
          %632 = vmatpush.msra.mxu0 %v499
          %633 = vmatmul.f32.gmra.mxu0 %v595
          %v634 = vpop.f32.mrf.mxu0
          %v635 = vadd.f32 %v592, %v634
          %636 = vdwg.mxu0
          %s637 = sadd.s32 %s495, 2
          %s638 = scalar_lea.vmem %s488, %s637
          %v639 = vld [vmem:[%s638] sm:$0x1]
          %s640 = scalar_lea.vmem %s1, 384
          %v641 = vld [vmem:[%s640] sm:$0xff]
          %v642 = vld [vmem:[%s640 + $0x8] sm:$0xff]
          %v643 = vld [vmem:[%s640 + $0x10] sm:$0xff]
          %v644 = vld [vmem:[%s640 + $0x18] sm:$0xff]
          %v645 = vld [vmem:[%s640 + $0x20] sm:$0xff]
          %v646 = vld [vmem:[%s640 + $0x28] sm:$0xff]
          %v647 = vld [vmem:[%s640 + $0x30] sm:$0xff]
          %v648 = vld [vmem:[%s640 + $0x38] sm:$0xff]
          %v649 = vld [vmem:[%s640 + $0x40] sm:$0xff]
          %v650 = vld [vmem:[%s640 + $0x48] sm:$0xff]
          %v651 = vld [vmem:[%s640 + $0x50] sm:$0xff]
          %v652 = vld [vmem:[%s640 + $0x58] sm:$0xff]
          %v653 = vld [vmem:[%s640 + $0x60] sm:$0xff]
          %v654 = vld [vmem:[%s640 + $0x68] sm:$0xff]
          %v655 = vld [vmem:[%s640 + $0x70] sm:$0xff]
          %v656 = vld [vmem:[%s640 + $0x78] sm:$0xff]
          %v657 = vld [vmem:[%s640 + $0x80] sm:$0xff]
          %v658 = vld [vmem:[%s640 + $0x88] sm:$0xff]
          %v659 = vld [vmem:[%s640 + $0x90] sm:$0xff]
          %v660 = vld [vmem:[%s640 + $0x98] sm:$0xff]
          %v661 = vld [vmem:[%s640 + $0xa0] sm:$0xff]
          %v662 = vld [vmem:[%s640 + $0xa8] sm:$0xff]
          %v663 = vld [vmem:[%s640 + $0xb0] sm:$0xff]
          %v664 = vld [vmem:[%s640 + $0xb8] sm:$0xff]
          %v666 = vsel %vm550, %v639, 0
          %668 = vmatpush.msra.mxu0 0.0
          %669 = vmatpush.msra.mxu0 0.0
          %670 = vmatpush.msra.mxu0 0.0
          %671 = vmatpush.msra.mxu0 0.0
          %672 = vmatpush.msra.mxu0 %v663
          %673 = vmatpush.msra.mxu0 %v661
          %674 = vmatpush.msra.mxu0 %v659
          %675 = vmatpush.msra.mxu0 %v657
          %676 = vmatpush.msra.mxu0 %v655
          %677 = vmatpush.msra.mxu0 %v653
          %678 = vmatpush.msra.mxu0 %v651
          %679 = vmatpush.msra.mxu0 %v649
          %680 = vmatpush.msra.mxu0 %v647
          %681 = vmatpush.msra.mxu0 %v645
          %682 = vmatpush.msra.mxu0 %v643
          %683 = vmatpush.msra.mxu0 %v641
          %684 = vmatmul.f32.gmra.mxu0 %v666
          %v685 = vpop.f32.mrf.mxu0
          %v686 = vadd.f32 0.0, %v685
          %687 = vdwg.mxu0
          %688 = vmatpush.msra.mxu0 0.0
          %689 = vmatpush.msra.mxu0 0.0
          %690 = vmatpush.msra.mxu0 0.0
          %691 = vmatpush.msra.mxu0 0.0
          %692 = vmatpush.msra.mxu0 %v664
          %693 = vmatpush.msra.mxu0 %v662
          %694 = vmatpush.msra.mxu0 %v660
          %695 = vmatpush.msra.mxu0 %v658
          %696 = vmatpush.msra.mxu0 %v656
          %697 = vmatpush.msra.mxu0 %v654
          %698 = vmatpush.msra.mxu0 %v652
          %699 = vmatpush.msra.mxu0 %v650
          %700 = vmatpush.msra.mxu0 %v648
          %701 = vmatpush.msra.mxu0 %v646
          %702 = vmatpush.msra.mxu0 %v644
          %703 = vmatpush.msra.mxu0 %v642
          %704 = vmatmul.f32.gmra.mxu0 %v666
          %v705 = vpop.f32.mrf.mxu0
          %v706 = vadd.f32 0.0, %v705
          %707 = vdwg.mxu0
          %v708 = vadd.f32 %v615, %v686
          %v709 = vadd.f32 %v635, %v706
          %s710 = sadd.s32 %s495, 3
          %s711 = scalar_lea.vmem %s488, %s710
          %v712 = vld [vmem:[%s711] sm:$0x1]
          %s713 = scalar_lea.vmem %s1, 576
          %v714 = vld [vmem:[%s713] sm:$0xff]
          %v715 = vld [vmem:[%s713 + $0x8] sm:$0xff]
          %v716 = vld [vmem:[%s713 + $0x10] sm:$0xff]
          %v717 = vld [vmem:[%s713 + $0x18] sm:$0xff]
          %v718 = vld [vmem:[%s713 + $0x20] sm:$0xff]
          %v719 = vld [vmem:[%s713 + $0x28] sm:$0xff]
          %v720 = vld [vmem:[%s713 + $0x30] sm:$0xff]
          %v721 = vld [vmem:[%s713 + $0x38] sm:$0xff]
          %v722 = vld [vmem:[%s713 + $0x40] sm:$0xff]
          %v723 = vld [vmem:[%s713 + $0x48] sm:$0xff]
          %v724 = vld [vmem:[%s713 + $0x50] sm:$0xff]
          %v725 = vld [vmem:[%s713 + $0x58] sm:$0xff]
          %v726 = vld [vmem:[%s713 + $0x60] sm:$0xff]
          %v727 = vld [vmem:[%s713 + $0x68] sm:$0xff]
          %v728 = vld [vmem:[%s713 + $0x70] sm:$0xff]
          %v729 = vld [vmem:[%s713 + $0x78] sm:$0xff]
          %v730 = vld [vmem:[%s713 + $0x80] sm:$0xff]
          %v731 = vld [vmem:[%s713 + $0x88] sm:$0xff]
          %v732 = vld [vmem:[%s713 + $0x90] sm:$0xff]
          %v733 = vld [vmem:[%s713 + $0x98] sm:$0xff]
          %v734 = vld [vmem:[%s713 + $0xa0] sm:$0xff]
          %v735 = vld [vmem:[%s713 + $0xa8] sm:$0xff]
          %v736 = vld [vmem:[%s713 + $0xb0] sm:$0xff]
          %v737 = vld [vmem:[%s713 + $0xb8] sm:$0xff]
          %v739 = vsel %vm550, %v712, 0
          %741 = vmatpush.msra.mxu0 0.0
          %742 = vmatpush.msra.mxu0 0.0
          %743 = vmatpush.msra.mxu0 0.0
          %744 = vmatpush.msra.mxu0 0.0
          %745 = vmatpush.msra.mxu0 %v736
          %746 = vmatpush.msra.mxu0 %v734
          %747 = vmatpush.msra.mxu0 %v732
          %748 = vmatpush.msra.mxu0 %v730
          %749 = vmatpush.msra.mxu0 %v728
          %750 = vmatpush.msra.mxu0 %v726
          %751 = vmatpush.msra.mxu0 %v724
          %752 = vmatpush.msra.mxu0 %v722
          %753 = vmatpush.msra.mxu0 %v720
          %754 = vmatpush.msra.mxu0 %v718
          %755 = vmatpush.msra.mxu0 %v716
          %756 = vmatpush.msra.mxu0 %v714
          %757 = vmatmul.f32.gmra.mxu0 %v739
          %v758 = vpop.f32.mrf.mxu0
          %v759 = vadd.f32 0.0, %v758
          %760 = vdwg.mxu0
          %761 = vmatpush.msra.mxu0 0.0
          %762 = vmatpush.msra.mxu0 0.0
          %763 = vmatpush.msra.mxu0 0.0
          %764 = vmatpush.msra.mxu0 0.0
          %765 = vmatpush.msra.mxu0 %v737
          %766 = vmatpush.msra.mxu0 %v735
          %767 = vmatpush.msra.mxu0 %v733
          %768 = vmatpush.msra.mxu0 %v731
          %769 = vmatpush.msra.mxu0 %v729
          %770 = vmatpush.msra.mxu0 %v727
          %771 = vmatpush.msra.mxu0 %v725
          %772 = vmatpush.msra.mxu0 %v723
          %773 = vmatpush.msra.mxu0 %v721
          %774 = vmatpush.msra.mxu0 %v719
          %775 = vmatpush.msra.mxu0 %v717
          %776 = vmatpush.msra.mxu0 %v715
          %777 = vmatmul.f32.gmra.mxu0 %v739
          %v778 = vpop.f32.mrf.mxu0
          %v779 = vadd.f32 0.0, %v778
          %780 = vdwg.mxu0
          %v781 = vadd.f32 %v708, %v759
          %v782 = vadd.f32 %v709, %v779
          %s783 = sadd.s32 %s495, 4
          %s784 = scalar_lea.vmem %s488, %s783
          %v785 = vld [vmem:[%s784] sm:$0x1]
          %s786 = scalar_lea.vmem %s1, 768
          %v787 = vld [vmem:[%s786] sm:$0xff]
          %v788 = vld [vmem:[%s786 + $0x8] sm:$0xff]
          %v789 = vld [vmem:[%s786 + $0x10] sm:$0xff]
          %v790 = vld [vmem:[%s786 + $0x18] sm:$0xff]
          %v791 = vld [vmem:[%s786 + $0x20] sm:$0xff]
          %v792 = vld [vmem:[%s786 + $0x28] sm:$0xff]
          %v793 = vld [vmem:[%s786 + $0x30] sm:$0xff]
          %v794 = vld [vmem:[%s786 + $0x38] sm:$0xff]
          %v795 = vld [vmem:[%s786 + $0x40] sm:$0xff]
          %v796 = vld [vmem:[%s786 + $0x48] sm:$0xff]
          %v797 = vld [vmem:[%s786 + $0x50] sm:$0xff]
          %v798 = vld [vmem:[%s786 + $0x58] sm:$0xff]
          %v799 = vld [vmem:[%s786 + $0x60] sm:$0xff]
          %v800 = vld [vmem:[%s786 + $0x68] sm:$0xff]
          %v801 = vld [vmem:[%s786 + $0x70] sm:$0xff]
          %v802 = vld [vmem:[%s786 + $0x78] sm:$0xff]
          %v803 = vld [vmem:[%s786 + $0x80] sm:$0xff]
          %v804 = vld [vmem:[%s786 + $0x88] sm:$0xff]
          %v805 = vld [vmem:[%s786 + $0x90] sm:$0xff]
          %v806 = vld [vmem:[%s786 + $0x98] sm:$0xff]
          %v807 = vld [vmem:[%s786 + $0xa0] sm:$0xff]
          %v808 = vld [vmem:[%s786 + $0xa8] sm:$0xff]
          %v809 = vld [vmem:[%s786 + $0xb0] sm:$0xff]
          %v810 = vld [vmem:[%s786 + $0xb8] sm:$0xff]
          %v812 = vsel %vm550, %v785, 0
          %814 = vmatpush.msra.mxu0 0.0
          %815 = vmatpush.msra.mxu0 0.0
          %816 = vmatpush.msra.mxu0 0.0
          %817 = vmatpush.msra.mxu0 0.0
          %818 = vmatpush.msra.mxu0 %v809
          %819 = vmatpush.msra.mxu0 %v807
          %820 = vmatpush.msra.mxu0 %v805
          %821 = vmatpush.msra.mxu0 %v803
          %822 = vmatpush.msra.mxu0 %v801
          %823 = vmatpush.msra.mxu0 %v799
          %824 = vmatpush.msra.mxu0 %v797
          %825 = vmatpush.msra.mxu0 %v795
          %826 = vmatpush.msra.mxu0 %v793
          %827 = vmatpush.msra.mxu0 %v791
          %828 = vmatpush.msra.mxu0 %v789
          %829 = vmatpush.msra.mxu0 %v787
          %830 = vmatmul.f32.gmra.mxu0 %v812
          %v831 = vpop.f32.mrf.mxu0
          %v832 = vadd.f32 0.0, %v831
          %833 = vdwg.mxu0
          %834 = vmatpush.msra.mxu0 0.0
          %835 = vmatpush.msra.mxu0 0.0
          %836 = vmatpush.msra.mxu0 0.0
          %837 = vmatpush.msra.mxu0 0.0
          %838 = vmatpush.msra.mxu0 %v810
          %839 = vmatpush.msra.mxu0 %v808
          %840 = vmatpush.msra.mxu0 %v806
          %841 = vmatpush.msra.mxu0 %v804
          %842 = vmatpush.msra.mxu0 %v802
          %843 = vmatpush.msra.mxu0 %v800
          %844 = vmatpush.msra.mxu0 %v798
          %845 = vmatpush.msra.mxu0 %v796
          %846 = vmatpush.msra.mxu0 %v794
          %847 = vmatpush.msra.mxu0 %v792
          %848 = vmatpush.msra.mxu0 %v790
          %849 = vmatpush.msra.mxu0 %v788
          %850 = vmatmul.f32.gmra.mxu0 %v812
          %v851 = vpop.f32.mrf.mxu0
          %v852 = vadd.f32 0.0, %v851
          %853 = vdwg.mxu0
          %v854 = vadd.f32 %v781, %v832
          %v855 = vadd.f32 %v782, %v852
          %856 = vmatpush.msra.mxu0 0.0
          %857 = vmatpush.msra.mxu0 0.0
          %858 = vmatpush.msra.mxu0 0.0
          %859 = vmatpush.msra.mxu0 0.0
          %860 = vmatpush.msra.mxu0 %v548
          %861 = vmatpush.msra.mxu0 %v546
          %862 = vmatpush.msra.mxu0 %v544
          %863 = vmatpush.msra.mxu0 %v542
          %864 = vmatpush.msra.mxu0 %v540
          %865 = vmatpush.msra.mxu0 %v538
          %866 = vmatpush.msra.mxu0 %v536
          %867 = vmatpush.msra.mxu0 %v534
          %868 = vmatpush.msra.mxu0 %v532
          %869 = vmatpush.msra.mxu0 %v530
          %870 = vmatpush.msra.mxu0 %v528
          %871 = vmatpush.msra.mxu0 %v526
          %872 = vmatmul.f32.gmra.mxu0 %v666
          %v873 = vpop.f32.mrf.mxu0
          %v874 = vadd.f32 0.0, %v873
          %875 = vdwg.mxu0
          %876 = vmatpush.msra.mxu0 0.0
          %877 = vmatpush.msra.mxu0 0.0
          %878 = vmatpush.msra.mxu0 0.0
          %879 = vmatpush.msra.mxu0 0.0
          %880 = vmatpush.msra.mxu0 %v549
          %881 = vmatpush.msra.mxu0 %v547
          %882 = vmatpush.msra.mxu0 %v545
          %883 = vmatpush.msra.mxu0 %v543
          %884 = vmatpush.msra.mxu0 %v541
          %885 = vmatpush.msra.mxu0 %v539
          %886 = vmatpush.msra.mxu0 %v537
          %887 = vmatpush.msra.mxu0 %v535
          %888 = vmatpush.msra.mxu0 %v533
          %889 = vmatpush.msra.mxu0 %v531
          %890 = vmatpush.msra.mxu0 %v529
          %891 = vmatpush.msra.mxu0 %v527
          %892 = vmatmul.f32.gmra.mxu0 %v666
          %v893 = vpop.f32.mrf.mxu0
          %v894 = vadd.f32 0.0, %v893
          %895 = vdwg.mxu0
          %896 = vmatpush.msra.mxu0 0.0
          %897 = vmatpush.msra.mxu0 0.0
          %898 = vmatpush.msra.mxu0 0.0
          %899 = vmatpush.msra.mxu0 0.0
          %900 = vmatpush.msra.mxu0 %v520
          %901 = vmatpush.msra.mxu0 %v518
          %902 = vmatpush.msra.mxu0 %v516
          %903 = vmatpush.msra.mxu0 %v514
          %904 = vmatpush.msra.mxu0 %v512
          %905 = vmatpush.msra.mxu0 %v510
          %906 = vmatpush.msra.mxu0 %v508
          %907 = vmatpush.msra.mxu0 %v506
          %908 = vmatpush.msra.mxu0 %v504
          %909 = vmatpush.msra.mxu0 %v502
          %910 = vmatpush.msra.mxu0 %v500
          %911 = vmatpush.msra.mxu0 %v498
          %912 = vmatmul.f32.gmra.mxu0 %v552
          %v913 = vpop.f32.mrf.mxu0
          %v914 = vadd.f32 %v874, %v913
          %915 = vdwg.mxu0
          %916 = vmatpush.msra.mxu0 0.0
          %917 = vmatpush.msra.mxu0 0.0
          %918 = vmatpush.msra.mxu0 0.0
          %919 = vmatpush.msra.mxu0 0.0
          %920 = vmatpush.msra.mxu0 %v521
          %921 = vmatpush.msra.mxu0 %v519
          %922 = vmatpush.msra.mxu0 %v517
          %923 = vmatpush.msra.mxu0 %v515
          %924 = vmatpush.msra.mxu0 %v513
          %925 = vmatpush.msra.mxu0 %v511
          %926 = vmatpush.msra.mxu0 %v509
          %927 = vmatpush.msra.mxu0 %v507
          %928 = vmatpush.msra.mxu0 %v505
          %929 = vmatpush.msra.mxu0 %v503
          %930 = vmatpush.msra.mxu0 %v501
          %931 = vmatpush.msra.mxu0 %v499
          %932 = vmatmul.f32.gmra.mxu0 %v552
          %v933 = vpop.f32.mrf.mxu0
          %v934 = vadd.f32 %v894, %v933
          %935 = vdwg.mxu0
          %936 = vmatpush.msra.mxu0 0.0
          %937 = vmatpush.msra.mxu0 0.0
          %938 = vmatpush.msra.mxu0 0.0
          %939 = vmatpush.msra.mxu0 0.0
          %940 = vmatpush.msra.mxu0 %v663
          %941 = vmatpush.msra.mxu0 %v661
          %942 = vmatpush.msra.mxu0 %v659
          %943 = vmatpush.msra.mxu0 %v657
          %944 = vmatpush.msra.mxu0 %v655
          %945 = vmatpush.msra.mxu0 %v653
          %946 = vmatpush.msra.mxu0 %v651
          %947 = vmatpush.msra.mxu0 %v649
          %948 = vmatpush.msra.mxu0 %v647
          %949 = vmatpush.msra.mxu0 %v645
          %950 = vmatpush.msra.mxu0 %v643
          %951 = vmatpush.msra.mxu0 %v641
          %952 = vmatmul.f32.gmra.mxu0 %v739
          %v953 = vpop.f32.mrf.mxu0
          %v954 = vadd.f32 0.0, %v953
          %955 = vdwg.mxu0
          %956 = vmatpush.msra.mxu0 0.0
          %957 = vmatpush.msra.mxu0 0.0
          %958 = vmatpush.msra.mxu0 0.0
          %959 = vmatpush.msra.mxu0 0.0
          %960 = vmatpush.msra.mxu0 %v664
          %961 = vmatpush.msra.mxu0 %v662
          %962 = vmatpush.msra.mxu0 %v660
          %963 = vmatpush.msra.mxu0 %v658
          %964 = vmatpush.msra.mxu0 %v656
          %965 = vmatpush.msra.mxu0 %v654
          %966 = vmatpush.msra.mxu0 %v652
          %967 = vmatpush.msra.mxu0 %v650
          %968 = vmatpush.msra.mxu0 %v648
          %969 = vmatpush.msra.mxu0 %v646
          %970 = vmatpush.msra.mxu0 %v644
          %971 = vmatpush.msra.mxu0 %v642
          %972 = vmatmul.f32.gmra.mxu0 %v739
          %v973 = vpop.f32.mrf.mxu0
          %v974 = vadd.f32 0.0, %v973
          %975 = vdwg.mxu0
          %v976 = vadd.f32 %v914, %v954
          %v977 = vadd.f32 %v934, %v974
          %978 = vmatpush.msra.mxu0 0.0
          %979 = vmatpush.msra.mxu0 0.0
          %980 = vmatpush.msra.mxu0 0.0
          %981 = vmatpush.msra.mxu0 0.0
          %982 = vmatpush.msra.mxu0 %v736
          %983 = vmatpush.msra.mxu0 %v734
          %984 = vmatpush.msra.mxu0 %v732
          %985 = vmatpush.msra.mxu0 %v730
          %986 = vmatpush.msra.mxu0 %v728
          %987 = vmatpush.msra.mxu0 %v726
          %988 = vmatpush.msra.mxu0 %v724
          %989 = vmatpush.msra.mxu0 %v722
          %990 = vmatpush.msra.mxu0 %v720
          %991 = vmatpush.msra.mxu0 %v718
          %992 = vmatpush.msra.mxu0 %v716
          %993 = vmatpush.msra.mxu0 %v714
          %994 = vmatmul.f32.gmra.mxu0 %v812
          %v995 = vpop.f32.mrf.mxu0
          %v996 = vadd.f32 0.0, %v995
          %997 = vdwg.mxu0
          %998 = vmatpush.msra.mxu0 0.0
          %999 = vmatpush.msra.mxu0 0.0
          %1000 = vmatpush.msra.mxu0 0.0
          %1001 = vmatpush.msra.mxu0 0.0
          %1002 = vmatpush.msra.mxu0 %v737
          %1003 = vmatpush.msra.mxu0 %v735
          %1004 = vmatpush.msra.mxu0 %v733
          %1005 = vmatpush.msra.mxu0 %v731
          %1006 = vmatpush.msra.mxu0 %v729
          %1007 = vmatpush.msra.mxu0 %v727
          %1008 = vmatpush.msra.mxu0 %v725
          %1009 = vmatpush.msra.mxu0 %v723
          %1010 = vmatpush.msra.mxu0 %v721
          %1011 = vmatpush.msra.mxu0 %v719
          %1012 = vmatpush.msra.mxu0 %v717
          %1013 = vmatpush.msra.mxu0 %v715
          %1014 = vmatmul.f32.gmra.mxu0 %v812
          %v1015 = vpop.f32.mrf.mxu0
          %v1016 = vadd.f32 0.0, %v1015
          %1017 = vdwg.mxu0
          %v1018 = vadd.f32 %v976, %v996
          %v1019 = vadd.f32 %v977, %v1016
          %s1020 = sadd.s32 %s495, 5
          %s1021 = scalar_lea.vmem %s488, %s1020
          %v1022 = vld [vmem:[%s1021] sm:$0x1]
          %v1024 = vsel %vm550, %v1022, 0
          %1026 = vmatpush.msra.mxu0 0.0
          %1027 = vmatpush.msra.mxu0 0.0
          %1028 = vmatpush.msra.mxu0 0.0
          %1029 = vmatpush.msra.mxu0 0.0
          %1030 = vmatpush.msra.mxu0 %v809
          %1031 = vmatpush.msra.mxu0 %v807
          %1032 = vmatpush.msra.mxu0 %v805
          %1033 = vmatpush.msra.mxu0 %v803
          %1034 = vmatpush.msra.mxu0 %v801
          %1035 = vmatpush.msra.mxu0 %v799
          %1036 = vmatpush.msra.mxu0 %v797
          %1037 = vmatpush.msra.mxu0 %v795
          %1038 = vmatpush.msra.mxu0 %v793
          %1039 = vmatpush.msra.mxu0 %v791
          %1040 = vmatpush.msra.mxu0 %v789
          %1041 = vmatpush.msra.mxu0 %v787
          %1042 = vmatmul.f32.gmra.mxu0 %v1024
          %v1043 = vpop.f32.mrf.mxu0
          %v1044 = vadd.f32 0.0, %v1043
          %1045 = vdwg.mxu0
          %1046 = vmatpush.msra.mxu0 0.0
          %1047 = vmatpush.msra.mxu0 0.0
          %1048 = vmatpush.msra.mxu0 0.0
          %1049 = vmatpush.msra.mxu0 0.0
          %1050 = vmatpush.msra.mxu0 %v810
          %1051 = vmatpush.msra.mxu0 %v808
          %1052 = vmatpush.msra.mxu0 %v806
          %1053 = vmatpush.msra.mxu0 %v804
          %1054 = vmatpush.msra.mxu0 %v802
          %1055 = vmatpush.msra.mxu0 %v800
          %1056 = vmatpush.msra.mxu0 %v798
          %1057 = vmatpush.msra.mxu0 %v796
          %1058 = vmatpush.msra.mxu0 %v794
          %1059 = vmatpush.msra.mxu0 %v792
          %1060 = vmatpush.msra.mxu0 %v790
          %1061 = vmatpush.msra.mxu0 %v788
          %1062 = vmatmul.f32.gmra.mxu0 %v1024
          %v1063 = vpop.f32.mrf.mxu0
          %v1064 = vadd.f32 0.0, %v1063
          %1065 = vdwg.mxu0
          %v1066 = vadd.f32 %v1018, %v1044
          %v1067 = vadd.f32 %v1019, %v1064
          %v1068 = vmax.f32 %v854, %v1066
          %v1069 = vmax.f32 %v855, %v1067
          %v1070 = vld [vmem:[%s3] sm:$0xff]
          %v1071 = vld [vmem:[%s3 + $0x8] sm:$0xff]
          %v1072 = vld [vmem:[%s3 + $0x10] sm:$0xff]
          %v1073 = vld [vmem:[%s3 + $0x18] sm:$0xff]
          %v1074 = vld [vmem:[%s3 + $0x20] sm:$0xff]
          %v1075 = vld [vmem:[%s3 + $0x28] sm:$0xff]
          %v1076 = vld [vmem:[%s3 + $0x30] sm:$0xff]
          %v1077 = vld [vmem:[%s3 + $0x38] sm:$0xff]
          %v1078 = vld [vmem:[%s3 + $0x40] sm:$0xff]
          %v1079 = vld [vmem:[%s3 + $0x48] sm:$0xff]
          %v1080 = vld [vmem:[%s3 + $0x50] sm:$0xff]
          %v1081 = vld [vmem:[%s3 + $0x58] sm:$0xff]
          %v1082 = vld [vmem:[%s3 + $0x60] sm:$0xff]
          %v1083 = vld [vmem:[%s3 + $0x68] sm:$0xff]
          %v1084 = vld [vmem:[%s3 + $0x70] sm:$0xff]
          %v1085 = vld [vmem:[%s3 + $0x78] sm:$0xff]
          %v1086 = vld [vmem:[%s3 + $0x80] sm:$0xff]
          %v1087 = vld [vmem:[%s3 + $0x88] sm:$0xff]
          %v1088 = vld [vmem:[%s3 + $0x90] sm:$0xff]
          %v1089 = vld [vmem:[%s3 + $0x98] sm:$0xff]
          %v1090 = vld [vmem:[%s3 + $0xa0] sm:$0xff]
          %vm1091 = vcmask 326656
          %v1093 = vsel %vm1091, %v1069, 0
          %1095 = vmatpush.msra.mxu0 %v1085
          %1096 = vmatpush.msra.mxu0 %v1084
          %1097 = vmatpush.msra.mxu0 %v1083
          %1098 = vmatpush.msra.mxu0 %v1082
          %1099 = vmatpush.msra.mxu0 %v1081
          %1100 = vmatpush.msra.mxu0 %v1080
          %1101 = vmatpush.msra.mxu0 %v1079
          %1102 = vmatpush.msra.mxu0 %v1078
          %1103 = vmatpush.msra.mxu0 %v1077
          %1104 = vmatpush.msra.mxu0 %v1076
          %1105 = vmatpush.msra.mxu0 %v1075
          %1106 = vmatpush.msra.mxu0 %v1074
          %1107 = vmatpush.msra.mxu0 %v1073
          %1108 = vmatpush.msra.mxu0 %v1072
          %1109 = vmatpush.msra.mxu0 %v1071
          %1110 = vmatpush.msra.mxu0 %v1070
          %1111 = vmatmul.f32.gmra.mxu0 %v1068
          %v1112 = vpop.f32.mrf.mxu0
          %v1113 = vadd.f32 0.0, %v1112
          %1114 = vdwg.mxu0
          %1115 = vmatpush.msra.mxu0 0.0
          %1116 = vmatpush.msra.mxu0 0.0
          %1117 = vmatpush.msra.mxu0 0.0
          %1118 = vmatpush.msra.mxu0 0.0
          %1119 = vmatpush.msra.mxu0 0.0
          %1120 = vmatpush.msra.mxu0 0.0
          %1121 = vmatpush.msra.mxu0 0.0
          %1122 = vmatpush.msra.mxu0 0.0
          %1123 = vmatpush.msra.mxu0 0.0
          %1124 = vmatpush.msra.mxu0 0.0
          %1125 = vmatpush.msra.mxu0 0.0
          %1126 = vmatpush.msra.mxu0 %v1090
          %1127 = vmatpush.msra.mxu0 %v1089
          %1128 = vmatpush.msra.mxu0 %v1088
          %1129 = vmatpush.msra.mxu0 %v1087
          %1130 = vmatpush.msra.mxu0 %v1086
          %1131 = vmatmul.f32.gmra.mxu0 %v1093
          %v1132 = vpop.f32.mrf.mxu0
          %v1133 = vadd.f32 %v1113, %v1132
          %1134 = vdwg.mxu0
          %v1135 = vld [vmem:[%s4] sm:$0xff]
          %v1136 = vld [vmem:[%s4 + $0x8] sm:$0xff]
          %v1137 = vld [vmem:[%s4 + $0x10] sm:$0xff]
          %v1138 = vld [vmem:[%s4 + $0x18] sm:$0xff]
          %v1139 = vld [vmem:[%s4 + $0x20] sm:$0xff]
          %v1140 = vld [vmem:[%s4 + $0x28] sm:$0xff]
          %v1141 = vld [vmem:[%s4 + $0x30] sm:$0xff]
          %v1142 = vld [vmem:[%s4 + $0x38] sm:$0xff]
          %v1143 = vld [vmem:[%s4 + $0x40] sm:$0xff]
          %v1144 = vld [vmem:[%s4 + $0x48] sm:$0xff]
          %v1145 = vld [vmem:[%s4 + $0x50] sm:$0xff]
          %v1146 = vld [vmem:[%s4 + $0x58] sm:$0xff]
          %v1147 = vld [vmem:[%s4 + $0x60] sm:$0xff]
          %v1148 = vld [vmem:[%s4 + $0x68] sm:$0xff]
          %v1149 = vld [vmem:[%s4 + $0x70] sm:$0xff]
          %v1150 = vld [vmem:[%s4 + $0x78] sm:$0xff]
          %v1151 = vld [vmem:[%s4 + $0x80] sm:$0xff]
          %v1152 = vld [vmem:[%s4 + $0x88] sm:$0xff]
          %v1153 = vld [vmem:[%s4 + $0x90] sm:$0xff]
          %v1154 = vld [vmem:[%s4 + $0x98] sm:$0xff]
          %v1155 = vld [vmem:[%s4 + $0xa0] sm:$0xff]
          %1156 = vmatpush.msra.mxu0 %v1150
          %1157 = vmatpush.msra.mxu0 %v1149
          %1158 = vmatpush.msra.mxu0 %v1148
          %1159 = vmatpush.msra.mxu0 %v1147
          %1160 = vmatpush.msra.mxu0 %v1146
          %1161 = vmatpush.msra.mxu0 %v1145
          %1162 = vmatpush.msra.mxu0 %v1144
          %1163 = vmatpush.msra.mxu0 %v1143
          %1164 = vmatpush.msra.mxu0 %v1142
          %1165 = vmatpush.msra.mxu0 %v1141
          %1166 = vmatpush.msra.mxu0 %v1140
          %1167 = vmatpush.msra.mxu0 %v1139
          %1168 = vmatpush.msra.mxu0 %v1138
          %1169 = vmatpush.msra.mxu0 %v1137
          %1170 = vmatpush.msra.mxu0 %v1136
          %1171 = vmatpush.msra.mxu0 %v1135
          %1172 = vmatmul.f32.gmra.mxu0 %v1068
          %v1173 = vpop.f32.mrf.mxu0
          %v1174 = vadd.f32 0.0, %v1173
          %1175 = vdwg.mxu0
          %1176 = vmatpush.msra.mxu0 0.0
          %1177 = vmatpush.msra.mxu0 0.0
          %1178 = vmatpush.msra.mxu0 0.0
          %1179 = vmatpush.msra.mxu0 0.0
          %1180 = vmatpush.msra.mxu0 0.0
          %1181 = vmatpush.msra.mxu0 0.0
          %1182 = vmatpush.msra.mxu0 0.0
          %1183 = vmatpush.msra.mxu0 0.0
          %1184 = vmatpush.msra.mxu0 0.0
          %1185 = vmatpush.msra.mxu0 0.0
          %1186 = vmatpush.msra.mxu0 0.0
          %1187 = vmatpush.msra.mxu0 %v1155
          %1188 = vmatpush.msra.mxu0 %v1154
          %1189 = vmatpush.msra.mxu0 %v1153
          %1190 = vmatpush.msra.mxu0 %v1152
          %1191 = vmatpush.msra.mxu0 %v1151
          %1192 = vmatmul.f32.gmra.mxu0 %v1093
          %v1193 = vpop.f32.mrf.mxu0
          %v1194 = vadd.f32 %v1174, %v1193
          %1195 = vdwg.mxu0
          %v1196 = vmax.f32 %v1133, %v1194
          %v1197 = vld [vmem:[%s2] sm:$0x1]
          %v1198 = vadd.f32 %v1196, %v1197
          %v1199 = vmax.f32 %v1198, 0.0
          %s1200 = scalar_lea.vmem [#allocation2], %s490
          %vm1201 = vcmask 679936
          %1202 = vst.msk [vmem:[%s1200] sm:$0x1] %vm1201, %v1199
        $region85: #{net_forward.1} parent=79 // loop_footer
          %s494 = sadd.s32 1, %s490
        $region86: #{net_forward.1} parent=79 // loop_footer_branch
          %489 = sbr.rel target = $region82
        $region87: #{net_forward.1} parent=79 // loop_exit
          _
        loop: start=0, step=1, limit=5
        $region88: #{net_forward.1} parent=79 // loop_pre_header
          _
        $region89: #{net_forward.1} parent=79 // loop_header
          %s1204 = sphi 0, %s1208
          %p1205 = scmp.ge.s32.totalorder %s1204, 5
        $region90: #{net_forward.1} parent=79 // loop_header_branch
          %1207 = sbr.rel (%p1205) target = $region94
        $region91: #{net_forward.1} parent=79 // loop_body
          %s1209 = smul.u32 %s1204, 2
          %s1210 = scalar_lea.vmem [#allocation2], %s1209
          %v1211 = vld [vmem:[%s1210] sm:$0x1]
          %v1212 = vld [vmem:[%s5] sm:$0xff]
          %v1213 = vld [vmem:[%s5 + $0x8] sm:$0xff]
          %v1214 = vld [vmem:[%s5 + $0x10] sm:$0xff]
          %v1215 = vld [vmem:[%s5 + $0x18] sm:$0xff]
          %v1216 = vld [vmem:[%s5 + $0x20] sm:$0xff]
          %v1217 = vld [vmem:[%s5 + $0x28] sm:$0xff]
          %v1218 = vld [vmem:[%s5 + $0x30] sm:$0xff]
          %v1219 = vld [vmem:[%s5 + $0x38] sm:$0xff]
          %v1220 = vld [vmem:[%s5 + $0x40] sm:$0xff]
          %v1221 = vld [vmem:[%s5 + $0x48] sm:$0xff]
          %v1222 = vld [vmem:[%s5 + $0x50] sm:$0xff]
          %v1223 = vld [vmem:[%s5 + $0x58] sm:$0xff]
          %v1224 = vld [vmem:[%s5 + $0x60] sm:$0xff]
          %v1225 = vld [vmem:[%s5 + $0x68] sm:$0xff]
          %v1226 = vld [vmem:[%s5 + $0x70] sm:$0xff]
          %v1227 = vld [vmem:[%s5 + $0x78] sm:$0xff]
          %v1228 = vld [vmem:[%s5 + $0x80] sm:$0xff]
          %v1229 = vld [vmem:[%s5 + $0x88] sm:$0xff]
          %v1230 = vld [vmem:[%s5 + $0x90] sm:$0xff]
          %v1231 = vld [vmem:[%s5 + $0x98] sm:$0xff]
          %v1232 = vld [vmem:[%s5 + $0xa0] sm:$0xf]
          %v1233 = vld [vmem:[%s5 + $0xa8] sm:$0xf]
          %s1234 = sadd.s32 %s1209, 1
          %s1235 = scalar_lea.vmem [#allocation2], %s1234
          %v1236 = vld [vmem:[%s1235] sm:$0x1]
          %s1237 = scalar_lea.vmem %s5, 176
          %v1238 = vld [vmem:[%s1237] sm:$0xff]
          %v1239 = vld [vmem:[%s1237 + $0x8] sm:$0xff]
          %v1240 = vld [vmem:[%s1237 + $0x10] sm:$0xff]
          %v1241 = vld [vmem:[%s1237 + $0x18] sm:$0xff]
          %v1242 = vld [vmem:[%s1237 + $0x20] sm:$0xff]
          %v1243 = vld [vmem:[%s1237 + $0x28] sm:$0xff]
          %v1244 = vld [vmem:[%s1237 + $0x30] sm:$0xff]
          %v1245 = vld [vmem:[%s1237 + $0x38] sm:$0xff]
          %v1246 = vld [vmem:[%s1237 + $0x40] sm:$0xff]
          %v1247 = vld [vmem:[%s1237 + $0x48] sm:$0xff]
          %v1248 = vld [vmem:[%s1237 + $0x50] sm:$0xff]
          %v1249 = vld [vmem:[%s1237 + $0x58] sm:$0xff]
          %v1250 = vld [vmem:[%s1237 + $0x60] sm:$0xff]
          %v1251 = vld [vmem:[%s1237 + $0x68] sm:$0xff]
          %v1252 = vld [vmem:[%s1237 + $0x70] sm:$0xff]
          %v1253 = vld [vmem:[%s1237 + $0x78] sm:$0xff]
          %v1254 = vld [vmem:[%s1237 + $0x80] sm:$0xff]
          %v1255 = vld [vmem:[%s1237 + $0x88] sm:$0xff]
          %v1256 = vld [vmem:[%s1237 + $0x90] sm:$0xff]
          %v1257 = vld [vmem:[%s1237 + $0x98] sm:$0xff]
          %v1258 = vld [vmem:[%s1237 + $0xa0] sm:$0xf]
          %v1259 = vld [vmem:[%s1237 + $0xa8] sm:$0xf]
          %vm1260 = vcmask 687104
          %v1262 = vsel %vm1260, %v1236, 0
          %vm1264 = vcmask 1043456
          %v1266 = vsel %vm1264, %v1258, 0
          %v1269 = vsel %vm1264, %v1259, 0
          %1271 = vmatpush.msra.mxu0 0.0
          %1272 = vmatpush.msra.mxu0 0.0
          %1273 = vmatpush.msra.mxu0 0.0
          %1274 = vmatpush.msra.mxu0 0.0
          %1275 = vmatpush.msra.mxu0 0.0
          %1276 = vmatpush.msra.mxu0 %v1266
          %1277 = vmatpush.msra.mxu0 %v1256
          %1278 = vmatpush.msra.mxu0 %v1254
          %1279 = vmatpush.msra.mxu0 %v1252
          %1280 = vmatpush.msra.mxu0 %v1250
          %1281 = vmatpush.msra.mxu0 %v1248
          %1282 = vmatpush.msra.mxu0 %v1246
          %1283 = vmatpush.msra.mxu0 %v1244
          %1284 = vmatpush.msra.mxu0 %v1242
          %1285 = vmatpush.msra.mxu0 %v1240
          %1286 = vmatpush.msra.mxu0 %v1238
          %1287 = vmatmul.f32.gmra.mxu0 %v1262
          %v1288 = vpop.f32.mrf.mxu0
          %v1289 = vadd.f32 0.0, %v1288
          %1290 = vdwg.mxu0
          %1291 = vmatpush.msra.mxu0 0.0
          %1292 = vmatpush.msra.mxu0 0.0
          %1293 = vmatpush.msra.mxu0 0.0
          %1294 = vmatpush.msra.mxu0 0.0
          %1295 = vmatpush.msra.mxu0 0.0
          %1296 = vmatpush.msra.mxu0 %v1269
          %1297 = vmatpush.msra.mxu0 %v1257
          %1298 = vmatpush.msra.mxu0 %v1255
          %1299 = vmatpush.msra.mxu0 %v1253
          %1300 = vmatpush.msra.mxu0 %v1251
          %1301 = vmatpush.msra.mxu0 %v1249
          %1302 = vmatpush.msra.mxu0 %v1247
          %1303 = vmatpush.msra.mxu0 %v1245
          %1304 = vmatpush.msra.mxu0 %v1243
          %1305 = vmatpush.msra.mxu0 %v1241
          %1306 = vmatpush.msra.mxu0 %v1239
          %1307 = vmatmul.f32.gmra.mxu0 %v1262
          %v1308 = vpop.f32.mrf.mxu0
          %v1309 = vadd.f32 0.0, %v1308
          %1310 = vdwg.mxu0
          %v1312 = vsel %vm1260, %v1211, 0
          %v1315 = vsel %vm1264, %v1232, 0
          %v1318 = vsel %vm1264, %v1233, 0
          %1320 = vmatpush.msra.mxu0 0.0
          %1321 = vmatpush.msra.mxu0 0.0
          %1322 = vmatpush.msra.mxu0 0.0
          %1323 = vmatpush.msra.mxu0 0.0
          %1324 = vmatpush.msra.mxu0 0.0
          %1325 = vmatpush.msra.mxu0 %v1315
          %1326 = vmatpush.msra.mxu0 %v1230
          %1327 = vmatpush.msra.mxu0 %v1228
          %1328 = vmatpush.msra.mxu0 %v1226
          %1329 = vmatpush.msra.mxu0 %v1224
          %1330 = vmatpush.msra.mxu0 %v1222
          %1331 = vmatpush.msra.mxu0 %v1220
          %1332 = vmatpush.msra.mxu0 %v1218
          %1333 = vmatpush.msra.mxu0 %v1216
          %1334 = vmatpush.msra.mxu0 %v1214
          %1335 = vmatpush.msra.mxu0 %v1212
          %1336 = vmatmul.f32.gmra.mxu0 %v1312
          %v1337 = vpop.f32.mrf.mxu0
          %v1338 = vadd.f32 %v1289, %v1337
          %1339 = vdwg.mxu0
          %1340 = vmatpush.msra.mxu0 0.0
          %1341 = vmatpush.msra.mxu0 0.0
          %1342 = vmatpush.msra.mxu0 0.0
          %1343 = vmatpush.msra.mxu0 0.0
          %1344 = vmatpush.msra.mxu0 0.0
          %1345 = vmatpush.msra.mxu0 %v1318
          %1346 = vmatpush.msra.mxu0 %v1231
          %1347 = vmatpush.msra.mxu0 %v1229
          %1348 = vmatpush.msra.mxu0 %v1227
          %1349 = vmatpush.msra.mxu0 %v1225
          %1350 = vmatpush.msra.mxu0 %v1223
          %1351 = vmatpush.msra.mxu0 %v1221
          %1352 = vmatpush.msra.mxu0 %v1219
          %1353 = vmatpush.msra.mxu0 %v1217
          %1354 = vmatpush.msra.mxu0 %v1215
          %1355 = vmatpush.msra.mxu0 %v1213
          %1356 = vmatmul.f32.gmra.mxu0 %v1312
          %v1357 = vpop.f32.mrf.mxu0
          %v1358 = vadd.f32 %v1309, %v1357
          %1359 = vdwg.mxu0
          %s1360 = sadd.s32 %s1209, 2
          %s1361 = scalar_lea.vmem [#allocation2], %s1360
          %v1362 = vld [vmem:[%s1361] sm:$0x1]
          %s1363 = scalar_lea.vmem %s5, 352
          %v1364 = vld [vmem:[%s1363] sm:$0xff]
          %v1365 = vld [vmem:[%s1363 + $0x8] sm:$0xff]
          %v1366 = vld [vmem:[%s1363 + $0x10] sm:$0xff]
          %v1367 = vld [vmem:[%s1363 + $0x18] sm:$0xff]
          %v1368 = vld [vmem:[%s1363 + $0x20] sm:$0xff]
          %v1369 = vld [vmem:[%s1363 + $0x28] sm:$0xff]
          %v1370 = vld [vmem:[%s1363 + $0x30] sm:$0xff]
          %v1371 = vld [vmem:[%s1363 + $0x38] sm:$0xff]
          %v1372 = vld [vmem:[%s1363 + $0x40] sm:$0xff]
          %v1373 = vld [vmem:[%s1363 + $0x48] sm:$0xff]
          %v1374 = vld [vmem:[%s1363 + $0x50] sm:$0xff]
          %v1375 = vld [vmem:[%s1363 + $0x58] sm:$0xff]
          %v1376 = vld [vmem:[%s1363 + $0x60] sm:$0xff]
          %v1377 = vld [vmem:[%s1363 + $0x68] sm:$0xff]
          %v1378 = vld [vmem:[%s1363 + $0x70] sm:$0xff]
          %v1379 = vld [vmem:[%s1363 + $0x78] sm:$0xff]
          %v1380 = vld [vmem:[%s1363 + $0x80] sm:$0xff]
          %v1381 = vld [vmem:[%s1363 + $0x88] sm:$0xff]
          %v1382 = vld [vmem:[%s1363 + $0x90] sm:$0xff]
          %v1383 = vld [vmem:[%s1363 + $0x98] sm:$0xff]
          %v1384 = vld [vmem:[%s1363 + $0xa0] sm:$0xf]
          %v1385 = vld [vmem:[%s1363 + $0xa8] sm:$0xf]
          %v1387 = vsel %vm1260, %v1362, 0
          %v1390 = vsel %vm1264, %v1384, 0
          %v1393 = vsel %vm1264, %v1385, 0
          %1395 = vmatpush.msra.mxu0 0.0
          %1396 = vmatpush.msra.mxu0 0.0
          %1397 = vmatpush.msra.mxu0 0.0
          %1398 = vmatpush.msra.mxu0 0.0
          %1399 = vmatpush.msra.mxu0 0.0
          %1400 = vmatpush.msra.mxu0 %v1390
          %1401 = vmatpush.msra.mxu0 %v1382
          %1402 = vmatpush.msra.mxu0 %v1380
          %1403 = vmatpush.msra.mxu0 %v1378
          %1404 = vmatpush.msra.mxu0 %v1376
          %1405 = vmatpush.msra.mxu0 %v1374
          %1406 = vmatpush.msra.mxu0 %v1372
          %1407 = vmatpush.msra.mxu0 %v1370
          %1408 = vmatpush.msra.mxu0 %v1368
          %1409 = vmatpush.msra.mxu0 %v1366
          %1410 = vmatpush.msra.mxu0 %v1364
          %1411 = vmatmul.f32.gmra.mxu0 %v1387
          %v1412 = vpop.f32.mrf.mxu0
          %v1413 = vadd.f32 0.0, %v1412
          %1414 = vdwg.mxu0
          %1415 = vmatpush.msra.mxu0 0.0
          %1416 = vmatpush.msra.mxu0 0.0
          %1417 = vmatpush.msra.mxu0 0.0
          %1418 = vmatpush.msra.mxu0 0.0
          %1419 = vmatpush.msra.mxu0 0.0
          %1420 = vmatpush.msra.mxu0 %v1393
          %1421 = vmatpush.msra.mxu0 %v1383
          %1422 = vmatpush.msra.mxu0 %v1381
          %1423 = vmatpush.msra.mxu0 %v1379
          %1424 = vmatpush.msra.mxu0 %v1377
          %1425 = vmatpush.msra.mxu0 %v1375
          %1426 = vmatpush.msra.mxu0 %v1373
          %1427 = vmatpush.msra.mxu0 %v1371
          %1428 = vmatpush.msra.mxu0 %v1369
          %1429 = vmatpush.msra.mxu0 %v1367
          %1430 = vmatpush.msra.mxu0 %v1365
          %1431 = vmatmul.f32.gmra.mxu0 %v1387
          %v1432 = vpop.f32.mrf.mxu0
          %v1433 = vadd.f32 0.0, %v1432
          %1434 = vdwg.mxu0
          %v1435 = vadd.f32 %v1338, %v1413
          %v1436 = vadd.f32 %v1358, %v1433
          %s1437 = sadd.s32 %s1209, 3
          %s1438 = scalar_lea.vmem [#allocation2], %s1437
          %v1439 = vld [vmem:[%s1438] sm:$0x1]
          %s1440 = scalar_lea.vmem %s5, 528
          %v1441 = vld [vmem:[%s1440] sm:$0xff]
          %v1442 = vld [vmem:[%s1440 + $0x8] sm:$0xff]
          %v1443 = vld [vmem:[%s1440 + $0x10] sm:$0xff]
          %v1444 = vld [vmem:[%s1440 + $0x18] sm:$0xff]
          %v1445 = vld [vmem:[%s1440 + $0x20] sm:$0xff]
          %v1446 = vld [vmem:[%s1440 + $0x28] sm:$0xff]
          %v1447 = vld [vmem:[%s1440 + $0x30] sm:$0xff]
          %v1448 = vld [vmem:[%s1440 + $0x38] sm:$0xff]
          %v1449 = vld [vmem:[%s1440 + $0x40] sm:$0xff]
          %v1450 = vld [vmem:[%s1440 + $0x48] sm:$0xff]
          %v1451 = vld [vmem:[%s1440 + $0x50] sm:$0xff]
          %v1452 = vld [vmem:[%s1440 + $0x58] sm:$0xff]
          %v1453 = vld [vmem:[%s1440 + $0x60] sm:$0xff]
          %v1454 = vld [vmem:[%s1440 + $0x68] sm:$0xff]
          %v1455 = vld [vmem:[%s1440 + $0x70] sm:$0xff]
          %v1456 = vld [vmem:[%s1440 + $0x78] sm:$0xff]
          %v1457 = vld [vmem:[%s1440 + $0x80] sm:$0xff]
          %v1458 = vld [vmem:[%s1440 + $0x88] sm:$0xff]
          %v1459 = vld [vmem:[%s1440 + $0x90] sm:$0xff]
          %v1460 = vld [vmem:[%s1440 + $0x98] sm:$0xff]
          %v1461 = vld [vmem:[%s1440 + $0xa0] sm:$0xf]
          %v1462 = vld [vmem:[%s1440 + $0xa8] sm:$0xf]
          %v1464 = vsel %vm1260, %v1439, 0
          %v1467 = vsel %vm1264, %v1461, 0
          %v1470 = vsel %vm1264, %v1462, 0
          %1472 = vmatpush.msra.mxu0 0.0
          %1473 = vmatpush.msra.mxu0 0.0
          %1474 = vmatpush.msra.mxu0 0.0
          %1475 = vmatpush.msra.mxu0 0.0
          %1476 = vmatpush.msra.mxu0 0.0
          %1477 = vmatpush.msra.mxu0 %v1467
          %1478 = vmatpush.msra.mxu0 %v1459
          %1479 = vmatpush.msra.mxu0 %v1457
          %1480 = vmatpush.msra.mxu0 %v1455
          %1481 = vmatpush.msra.mxu0 %v1453
          %1482 = vmatpush.msra.mxu0 %v1451
          %1483 = vmatpush.msra.mxu0 %v1449
          %1484 = vmatpush.msra.mxu0 %v1447
          %1485 = vmatpush.msra.mxu0 %v1445
          %1486 = vmatpush.msra.mxu0 %v1443
          %1487 = vmatpush.msra.mxu0 %v1441
          %1488 = vmatmul.f32.gmra.mxu0 %v1464
          %v1489 = vpop.f32.mrf.mxu0
          %v1490 = vadd.f32 0.0, %v1489
          %1491 = vdwg.mxu0
          %1492 = vmatpush.msra.mxu0 0.0
          %1493 = vmatpush.msra.mxu0 0.0
          %1494 = vmatpush.msra.mxu0 0.0
          %1495 = vmatpush.msra.mxu0 0.0
          %1496 = vmatpush.msra.mxu0 0.0
          %1497 = vmatpush.msra.mxu0 %v1470
          %1498 = vmatpush.msra.mxu0 %v1460
          %1499 = vmatpush.msra.mxu0 %v1458
          %1500 = vmatpush.msra.mxu0 %v1456
          %1501 = vmatpush.msra.mxu0 %v1454
          %1502 = vmatpush.msra.mxu0 %v1452
          %1503 = vmatpush.msra.mxu0 %v1450
          %1504 = vmatpush.msra.mxu0 %v1448
          %1505 = vmatpush.msra.mxu0 %v1446
          %1506 = vmatpush.msra.mxu0 %v1444
          %1507 = vmatpush.msra.mxu0 %v1442
          %1508 = vmatmul.f32.gmra.mxu0 %v1464
          %v1509 = vpop.f32.mrf.mxu0
          %v1510 = vadd.f32 0.0, %v1509
          %1511 = vdwg.mxu0
          %v1512 = vadd.f32 %v1435, %v1490
          %v1513 = vadd.f32 %v1436, %v1510
          %s1514 = sadd.s32 %s1209, 4
          %s1515 = scalar_lea.vmem [#allocation2], %s1514
          %v1516 = vld [vmem:[%s1515] sm:$0x1]
          %s1517 = scalar_lea.vmem %s5, 704
          %v1518 = vld [vmem:[%s1517] sm:$0xff]
          %v1519 = vld [vmem:[%s1517 + $0x8] sm:$0xff]
          %v1520 = vld [vmem:[%s1517 + $0x10] sm:$0xff]
          %v1521 = vld [vmem:[%s1517 + $0x18] sm:$0xff]
          %v1522 = vld [vmem:[%s1517 + $0x20] sm:$0xff]
          %v1523 = vld [vmem:[%s1517 + $0x28] sm:$0xff]
          %v1524 = vld [vmem:[%s1517 + $0x30] sm:$0xff]
          %v1525 = vld [vmem:[%s1517 + $0x38] sm:$0xff]
          %v1526 = vld [vmem:[%s1517 + $0x40] sm:$0xff]
          %v1527 = vld [vmem:[%s1517 + $0x48] sm:$0xff]
          %v1528 = vld [vmem:[%s1517 + $0x50] sm:$0xff]
          %v1529 = vld [vmem:[%s1517 + $0x58] sm:$0xff]
          %v1530 = vld [vmem:[%s1517 + $0x60] sm:$0xff]
          %v1531 = vld [vmem:[%s1517 + $0x68] sm:$0xff]
          %v1532 = vld [vmem:[%s1517 + $0x70] sm:$0xff]
          %v1533 = vld [vmem:[%s1517 + $0x78] sm:$0xff]
          %v1534 = vld [vmem:[%s1517 + $0x80] sm:$0xff]
          %v1535 = vld [vmem:[%s1517 + $0x88] sm:$0xff]
          %v1536 = vld [vmem:[%s1517 + $0x90] sm:$0xff]
          %v1537 = vld [vmem:[%s1517 + $0x98] sm:$0xff]
          %v1538 = vld [vmem:[%s1517 + $0xa0] sm:$0xf]
          %v1539 = vld [vmem:[%s1517 + $0xa8] sm:$0xf]
          %v1541 = vsel %vm1260, %v1516, 0
          %v1544 = vsel %vm1264, %v1538, 0
          %v1547 = vsel %vm1264, %v1539, 0
          %1549 = vmatpush.msra.mxu0 0.0
          %1550 = vmatpush.msra.mxu0 0.0
          %1551 = vmatpush.msra.mxu0 0.0
          %1552 = vmatpush.msra.mxu0 0.0
          %1553 = vmatpush.msra.mxu0 0.0
          %1554 = vmatpush.msra.mxu0 %v1544
          %1555 = vmatpush.msra.mxu0 %v1536
          %1556 = vmatpush.msra.mxu0 %v1534
          %1557 = vmatpush.msra.mxu0 %v1532
          %1558 = vmatpush.msra.mxu0 %v1530
          %1559 = vmatpush.msra.mxu0 %v1528
          %1560 = vmatpush.msra.mxu0 %v1526
          %1561 = vmatpush.msra.mxu0 %v1524
          %1562 = vmatpush.msra.mxu0 %v1522
          %1563 = vmatpush.msra.mxu0 %v1520
          %1564 = vmatpush.msra.mxu0 %v1518
          %1565 = vmatmul.f32.gmra.mxu0 %v1541
          %v1566 = vpop.f32.mrf.mxu0
          %v1567 = vadd.f32 0.0, %v1566
          %1568 = vdwg.mxu0
          %1569 = vmatpush.msra.mxu0 0.0
          %1570 = vmatpush.msra.mxu0 0.0
          %1571 = vmatpush.msra.mxu0 0.0
          %1572 = vmatpush.msra.mxu0 0.0
          %1573 = vmatpush.msra.mxu0 0.0
          %1574 = vmatpush.msra.mxu0 %v1547
          %1575 = vmatpush.msra.mxu0 %v1537
          %1576 = vmatpush.msra.mxu0 %v1535
          %1577 = vmatpush.msra.mxu0 %v1533
          %1578 = vmatpush.msra.mxu0 %v1531
          %1579 = vmatpush.msra.mxu0 %v1529
          %1580 = vmatpush.msra.mxu0 %v1527
          %1581 = vmatpush.msra.mxu0 %v1525
          %1582 = vmatpush.msra.mxu0 %v1523
          %1583 = vmatpush.msra.mxu0 %v1521
          %1584 = vmatpush.msra.mxu0 %v1519
          %1585 = vmatmul.f32.gmra.mxu0 %v1541
          %v1586 = vpop.f32.mrf.mxu0
          %v1587 = vadd.f32 0.0, %v1586
          %1588 = vdwg.mxu0
          %v1589 = vadd.f32 %v1512, %v1567
          %v1590 = vadd.f32 %v1513, %v1587
          %1591 = vmatpush.msra.mxu0 0.0
          %1592 = vmatpush.msra.mxu0 0.0
          %1593 = vmatpush.msra.mxu0 0.0
          %1594 = vmatpush.msra.mxu0 0.0
          %1595 = vmatpush.msra.mxu0 0.0
          %1596 = vmatpush.msra.mxu0 %v1266
          %1597 = vmatpush.msra.mxu0 %v1256
          %1598 = vmatpush.msra.mxu0 %v1254
          %1599 = vmatpush.msra.mxu0 %v1252
          %1600 = vmatpush.msra.mxu0 %v1250
          %1601 = vmatpush.msra.mxu0 %v1248
          %1602 = vmatpush.msra.mxu0 %v1246
          %1603 = vmatpush.msra.mxu0 %v1244
          %1604 = vmatpush.msra.mxu0 %v1242
          %1605 = vmatpush.msra.mxu0 %v1240
          %1606 = vmatpush.msra.mxu0 %v1238
          %1607 = vmatmul.f32.gmra.mxu0 %v1387
          %v1608 = vpop.f32.mrf.mxu0
          %v1609 = vadd.f32 0.0, %v1608
          %1610 = vdwg.mxu0
          %1611 = vmatpush.msra.mxu0 0.0
          %1612 = vmatpush.msra.mxu0 0.0
          %1613 = vmatpush.msra.mxu0 0.0
          %1614 = vmatpush.msra.mxu0 0.0
          %1615 = vmatpush.msra.mxu0 0.0
          %1616 = vmatpush.msra.mxu0 %v1269
          %1617 = vmatpush.msra.mxu0 %v1257
          %1618 = vmatpush.msra.mxu0 %v1255
          %1619 = vmatpush.msra.mxu0 %v1253
          %1620 = vmatpush.msra.mxu0 %v1251
          %1621 = vmatpush.msra.mxu0 %v1249
          %1622 = vmatpush.msra.mxu0 %v1247
          %1623 = vmatpush.msra.mxu0 %v1245
          %1624 = vmatpush.msra.mxu0 %v1243
          %1625 = vmatpush.msra.mxu0 %v1241
          %1626 = vmatpush.msra.mxu0 %v1239
          %1627 = vmatmul.f32.gmra.mxu0 %v1387
          %v1628 = vpop.f32.mrf.mxu0
          %v1629 = vadd.f32 0.0, %v1628
          %1630 = vdwg.mxu0
          %1631 = vmatpush.msra.mxu0 0.0
          %1632 = vmatpush.msra.mxu0 0.0
          %1633 = vmatpush.msra.mxu0 0.0
          %1634 = vmatpush.msra.mxu0 0.0
          %1635 = vmatpush.msra.mxu0 0.0
          %1636 = vmatpush.msra.mxu0 %v1315
          %1637 = vmatpush.msra.mxu0 %v1230
          %1638 = vmatpush.msra.mxu0 %v1228
          %1639 = vmatpush.msra.mxu0 %v1226
          %1640 = vmatpush.msra.mxu0 %v1224
          %1641 = vmatpush.msra.mxu0 %v1222
          %1642 = vmatpush.msra.mxu0 %v1220
          %1643 = vmatpush.msra.mxu0 %v1218
          %1644 = vmatpush.msra.mxu0 %v1216
          %1645 = vmatpush.msra.mxu0 %v1214
          %1646 = vmatpush.msra.mxu0 %v1212
          %1647 = vmatmul.f32.gmra.mxu0 %v1262
          %v1648 = vpop.f32.mrf.mxu0
          %v1649 = vadd.f32 %v1609, %v1648
          %1650 = vdwg.mxu0
          %1651 = vmatpush.msra.mxu0 0.0
          %1652 = vmatpush.msra.mxu0 0.0
          %1653 = vmatpush.msra.mxu0 0.0
          %1654 = vmatpush.msra.mxu0 0.0
          %1655 = vmatpush.msra.mxu0 0.0
          %1656 = vmatpush.msra.mxu0 %v1318
          %1657 = vmatpush.msra.mxu0 %v1231
          %1658 = vmatpush.msra.mxu0 %v1229
          %1659 = vmatpush.msra.mxu0 %v1227
          %1660 = vmatpush.msra.mxu0 %v1225
          %1661 = vmatpush.msra.mxu0 %v1223
          %1662 = vmatpush.msra.mxu0 %v1221
          %1663 = vmatpush.msra.mxu0 %v1219
          %1664 = vmatpush.msra.mxu0 %v1217
          %1665 = vmatpush.msra.mxu0 %v1215
          %1666 = vmatpush.msra.mxu0 %v1213
          %1667 = vmatmul.f32.gmra.mxu0 %v1262
          %v1668 = vpop.f32.mrf.mxu0
          %v1669 = vadd.f32 %v1629, %v1668
          %1670 = vdwg.mxu0
          %1671 = vmatpush.msra.mxu0 0.0
          %1672 = vmatpush.msra.mxu0 0.0
          %1673 = vmatpush.msra.mxu0 0.0
          %1674 = vmatpush.msra.mxu0 0.0
          %1675 = vmatpush.msra.mxu0 0.0
          %1676 = vmatpush.msra.mxu0 %v1390
          %1677 = vmatpush.msra.mxu0 %v1382
          %1678 = vmatpush.msra.mxu0 %v1380
          %1679 = vmatpush.msra.mxu0 %v1378
          %1680 = vmatpush.msra.mxu0 %v1376
          %1681 = vmatpush.msra.mxu0 %v1374
          %1682 = vmatpush.msra.mxu0 %v1372
          %1683 = vmatpush.msra.mxu0 %v1370
          %1684 = vmatpush.msra.mxu0 %v1368
          %1685 = vmatpush.msra.mxu0 %v1366
          %1686 = vmatpush.msra.mxu0 %v1364
          %1687 = vmatmul.f32.gmra.mxu0 %v1464
          %v1688 = vpop.f32.mrf.mxu0
          %v1689 = vadd.f32 0.0, %v1688
          %1690 = vdwg.mxu0
          %1691 = vmatpush.msra.mxu0 0.0
          %1692 = vmatpush.msra.mxu0 0.0
          %1693 = vmatpush.msra.mxu0 0.0
          %1694 = vmatpush.msra.mxu0 0.0
          %1695 = vmatpush.msra.mxu0 0.0
          %1696 = vmatpush.msra.mxu0 %v1393
          %1697 = vmatpush.msra.mxu0 %v1383
          %1698 = vmatpush.msra.mxu0 %v1381
          %1699 = vmatpush.msra.mxu0 %v1379
          %1700 = vmatpush.msra.mxu0 %v1377
          %1701 = vmatpush.msra.mxu0 %v1375
          %1702 = vmatpush.msra.mxu0 %v1373
          %1703 = vmatpush.msra.mxu0 %v1371
          %1704 = vmatpush.msra.mxu0 %v1369
          %1705 = vmatpush.msra.mxu0 %v1367
          %1706 = vmatpush.msra.mxu0 %v1365
          %1707 = vmatmul.f32.gmra.mxu0 %v1464
          %v1708 = vpop.f32.mrf.mxu0
          %v1709 = vadd.f32 0.0, %v1708
          %1710 = vdwg.mxu0
          %v1711 = vadd.f32 %v1649, %v1689
          %v1712 = vadd.f32 %v1669, %v1709
          %1713 = vmatpush.msra.mxu0 0.0
          %1714 = vmatpush.msra.mxu0 0.0
          %1715 = vmatpush.msra.mxu0 0.0
          %1716 = vmatpush.msra.mxu0 0.0
          %1717 = vmatpush.msra.mxu0 0.0
          %1718 = vmatpush.msra.mxu0 %v1467
          %1719 = vmatpush.msra.mxu0 %v1459
          %1720 = vmatpush.msra.mxu0 %v1457
          %1721 = vmatpush.msra.mxu0 %v1455
          %1722 = vmatpush.msra.mxu0 %v1453
          %1723 = vmatpush.msra.mxu0 %v1451
          %1724 = vmatpush.msra.mxu0 %v1449
          %1725 = vmatpush.msra.mxu0 %v1447
          %1726 = vmatpush.msra.mxu0 %v1445
          %1727 = vmatpush.msra.mxu0 %v1443
          %1728 = vmatpush.msra.mxu0 %v1441
          %1729 = vmatmul.f32.gmra.mxu0 %v1541
          %v1730 = vpop.f32.mrf.mxu0
          %v1731 = vadd.f32 0.0, %v1730
          %1732 = vdwg.mxu0
          %1733 = vmatpush.msra.mxu0 0.0
          %1734 = vmatpush.msra.mxu0 0.0
          %1735 = vmatpush.msra.mxu0 0.0
          %1736 = vmatpush.msra.mxu0 0.0
          %1737 = vmatpush.msra.mxu0 0.0
          %1738 = vmatpush.msra.mxu0 %v1470
          %1739 = vmatpush.msra.mxu0 %v1460
          %1740 = vmatpush.msra.mxu0 %v1458
          %1741 = vmatpush.msra.mxu0 %v1456
          %1742 = vmatpush.msra.mxu0 %v1454
          %1743 = vmatpush.msra.mxu0 %v1452
          %1744 = vmatpush.msra.mxu0 %v1450
          %1745 = vmatpush.msra.mxu0 %v1448
          %1746 = vmatpush.msra.mxu0 %v1446
          %1747 = vmatpush.msra.mxu0 %v1444
          %1748 = vmatpush.msra.mxu0 %v1442
          %1749 = vmatmul.f32.gmra.mxu0 %v1541
          %v1750 = vpop.f32.mrf.mxu0
          %v1751 = vadd.f32 0.0, %v1750
          %1752 = vdwg.mxu0
          %v1753 = vadd.f32 %v1711, %v1731
          %v1754 = vadd.f32 %v1712, %v1751
          %s1755 = sadd.s32 %s1209, 5
          %s1756 = scalar_lea.vmem [#allocation2], %s1755
          %v1757 = vld [vmem:[%s1756] sm:$0x1]
          %v1759 = vsel %vm1260, %v1757, 0
          %1761 = vmatpush.msra.mxu0 0.0
          %1762 = vmatpush.msra.mxu0 0.0
          %1763 = vmatpush.msra.mxu0 0.0
          %1764 = vmatpush.msra.mxu0 0.0
          %1765 = vmatpush.msra.mxu0 0.0
          %1766 = vmatpush.msra.mxu0 %v1544
          %1767 = vmatpush.msra.mxu0 %v1536
          %1768 = vmatpush.msra.mxu0 %v1534
          %1769 = vmatpush.msra.mxu0 %v1532
          %1770 = vmatpush.msra.mxu0 %v1530
          %1771 = vmatpush.msra.mxu0 %v1528
          %1772 = vmatpush.msra.mxu0 %v1526
          %1773 = vmatpush.msra.mxu0 %v1524
          %1774 = vmatpush.msra.mxu0 %v1522
          %1775 = vmatpush.msra.mxu0 %v1520
          %1776 = vmatpush.msra.mxu0 %v1518
          %1777 = vmatmul.f32.gmra.mxu0 %v1759
          %v1778 = vpop.f32.mrf.mxu0
          %v1779 = vadd.f32 0.0, %v1778
          %1780 = vdwg.mxu0
          %1781 = vmatpush.msra.mxu0 0.0
          %1782 = vmatpush.msra.mxu0 0.0
          %1783 = vmatpush.msra.mxu0 0.0
          %1784 = vmatpush.msra.mxu0 0.0
          %1785 = vmatpush.msra.mxu0 0.0
          %1786 = vmatpush.msra.mxu0 %v1547
          %1787 = vmatpush.msra.mxu0 %v1537
          %1788 = vmatpush.msra.mxu0 %v1535
          %1789 = vmatpush.msra.mxu0 %v1533
          %1790 = vmatpush.msra.mxu0 %v1531
          %1791 = vmatpush.msra.mxu0 %v1529
          %1792 = vmatpush.msra.mxu0 %v1527
          %1793 = vmatpush.msra.mxu0 %v1525
          %1794 = vmatpush.msra.mxu0 %v1523
          %1795 = vmatpush.msra.mxu0 %v1521
          %1796 = vmatpush.msra.mxu0 %v1519
          %1797 = vmatmul.f32.gmra.mxu0 %v1759
          %v1798 = vpop.f32.mrf.mxu0
          %v1799 = vadd.f32 0.0, %v1798
          %1800 = vdwg.mxu0
          %v1801 = vadd.f32 %v1753, %v1779
          %v1802 = vadd.f32 %v1754, %v1799
          %v1803 = vmax.f32 %v1589, %v1801
          %v1804 = vmax.f32 %v1590, %v1802
          %v1805 = vld [vmem:[%s7] sm:$0xff]
          %v1806 = vld [vmem:[%s7 + $0x8] sm:$0xff]
          %v1807 = vld [vmem:[%s7 + $0x10] sm:$0xff]
          %v1808 = vld [vmem:[%s7 + $0x18] sm:$0xff]
          %v1809 = vld [vmem:[%s7 + $0x20] sm:$0xff]
          %v1810 = vld [vmem:[%s7 + $0x28] sm:$0xff]
          %v1811 = vld [vmem:[%s7 + $0x30] sm:$0xff]
          %v1812 = vld [vmem:[%s7 + $0x38] sm:$0xff]
          %v1813 = vld [vmem:[%s7 + $0x40] sm:$0xff]
          %v1814 = vld [vmem:[%s7 + $0x48] sm:$0xff]
          %v1815 = vld [vmem:[%s7 + $0x50] sm:$0xff]
          %v1816 = vld [vmem:[%s7 + $0x58] sm:$0xff]
          %v1817 = vld [vmem:[%s7 + $0x60] sm:$0xff]
          %v1818 = vld [vmem:[%s7 + $0x68] sm:$0xff]
          %v1819 = vld [vmem:[%s7 + $0x70] sm:$0xff]
          %v1820 = vld [vmem:[%s7 + $0x78] sm:$0xff]
          %v1821 = vld [vmem:[%s7 + $0x80] sm:$0xff]
          %v1822 = vld [vmem:[%s7 + $0x88] sm:$0xff]
          %v1823 = vld [vmem:[%s7 + $0x90] sm:$0xff]
          %v1824 = vld [vmem:[%s7 + $0x98] sm:$0xff]
          %vm1825 = vcmask 261120
          %v1827 = vsel %vm1825, %v1804, 0
          %1829 = vmatpush.msra.mxu0 %v1820
          %1830 = vmatpush.msra.mxu0 %v1819
          %1831 = vmatpush.msra.mxu0 %v1818
          %1832 = vmatpush.msra.mxu0 %v1817
          %1833 = vmatpush.msra.mxu0 %v1816
          %1834 = vmatpush.msra.mxu0 %v1815
          %1835 = vmatpush.msra.mxu0 %v1814
          %1836 = vmatpush.msra.mxu0 %v1813
          %1837 = vmatpush.msra.mxu0 %v1812
          %1838 = vmatpush.msra.mxu0 %v1811
          %1839 = vmatpush.msra.mxu0 %v1810
          %1840 = vmatpush.msra.mxu0 %v1809
          %1841 = vmatpush.msra.mxu0 %v1808
          %1842 = vmatpush.msra.mxu0 %v1807
          %1843 = vmatpush.msra.mxu0 %v1806
          %1844 = vmatpush.msra.mxu0 %v1805
          %1845 = vmatmul.f32.gmra.mxu0 %v1803
          %v1846 = vpop.f32.mrf.mxu0
          %v1847 = vadd.f32 0.0, %v1846
          %1848 = vdwg.mxu0
          %1849 = vmatpush.msra.mxu0 0.0
          %1850 = vmatpush.msra.mxu0 0.0
          %1851 = vmatpush.msra.mxu0 0.0
          %1852 = vmatpush.msra.mxu0 0.0
          %1853 = vmatpush.msra.mxu0 0.0
          %1854 = vmatpush.msra.mxu0 0.0
          %1855 = vmatpush.msra.mxu0 0.0
          %1856 = vmatpush.msra.mxu0 0.0
          %1857 = vmatpush.msra.mxu0 0.0
          %1858 = vmatpush.msra.mxu0 0.0
          %1859 = vmatpush.msra.mxu0 0.0
          %1860 = vmatpush.msra.mxu0 0.0
          %1861 = vmatpush.msra.mxu0 %v1824
          %1862 = vmatpush.msra.mxu0 %v1823
          %1863 = vmatpush.msra.mxu0 %v1822
          %1864 = vmatpush.msra.mxu0 %v1821
          %1865 = vmatmul.f32.gmra.mxu0 %v1827
          %v1866 = vpop.f32.mrf.mxu0
          %v1867 = vadd.f32 %v1847, %v1866
          %1868 = vdwg.mxu0
          %v1869 = vld [vmem:[%s8] sm:$0xff]
          %v1870 = vld [vmem:[%s8 + $0x8] sm:$0xff]
          %v1871 = vld [vmem:[%s8 + $0x10] sm:$0xff]
          %v1872 = vld [vmem:[%s8 + $0x18] sm:$0xff]
          %v1873 = vld [vmem:[%s8 + $0x20] sm:$0xff]
          %v1874 = vld [vmem:[%s8 + $0x28] sm:$0xff]
          %v1875 = vld [vmem:[%s8 + $0x30] sm:$0xff]
          %v1876 = vld [vmem:[%s8 + $0x38] sm:$0xff]
          %v1877 = vld [vmem:[%s8 + $0x40] sm:$0xff]
          %v1878 = vld [vmem:[%s8 + $0x48] sm:$0xff]
          %v1879 = vld [vmem:[%s8 + $0x50] sm:$0xff]
          %v1880 = vld [vmem:[%s8 + $0x58] sm:$0xff]
          %v1881 = vld [vmem:[%s8 + $0x60] sm:$0xff]
          %v1882 = vld [vmem:[%s8 + $0x68] sm:$0xff]
          %v1883 = vld [vmem:[%s8 + $0x70] sm:$0xff]
          %v1884 = vld [vmem:[%s8 + $0x78] sm:$0xff]
          %v1885 = vld [vmem:[%s8 + $0x80] sm:$0xff]
          %v1886 = vld [vmem:[%s8 + $0x88] sm:$0xff]
          %v1887 = vld [vmem:[%s8 + $0x90] sm:$0xff]
          %v1888 = vld [vmem:[%s8 + $0x98] sm:$0xff]
          %1889 = vmatpush.msra.mxu0 %v1884
          %1890 = vmatpush.msra.mxu0 %v1883
          %1891 = vmatpush.msra.mxu0 %v1882
          %1892 = vmatpush.msra.mxu0 %v1881
          %1893 = vmatpush.msra.mxu0 %v1880
          %1894 = vmatpush.msra.mxu0 %v1879
          %1895 = vmatpush.msra.mxu0 %v1878
          %1896 = vmatpush.msra.mxu0 %v1877
          %1897 = vmatpush.msra.mxu0 %v1876
          %1898 = vmatpush.msra.mxu0 %v1875
          %1899 = vmatpush.msra.mxu0 %v1874
          %1900 = vmatpush.msra.mxu0 %v1873
          %1901 = vmatpush.msra.mxu0 %v1872
          %1902 = vmatpush.msra.mxu0 %v1871
          %1903 = vmatpush.msra.mxu0 %v1870
          %1904 = vmatpush.msra.mxu0 %v1869
          %1905 = vmatmul.f32.gmra.mxu0 %v1803
          %v1906 = vpop.f32.mrf.mxu0
          %v1907 = vadd.f32 0.0, %v1906
          %1908 = vdwg.mxu0
          %1909 = vmatpush.msra.mxu0 0.0
          %1910 = vmatpush.msra.mxu0 0.0
          %1911 = vmatpush.msra.mxu0 0.0
          %1912 = vmatpush.msra.mxu0 0.0
          %1913 = vmatpush.msra.mxu0 0.0
          %1914 = vmatpush.msra.mxu0 0.0
          %1915 = vmatpush.msra.mxu0 0.0
          %1916 = vmatpush.msra.mxu0 0.0
          %1917 = vmatpush.msra.mxu0 0.0
          %1918 = vmatpush.msra.mxu0 0.0
          %1919 = vmatpush.msra.mxu0 0.0
          %1920 = vmatpush.msra.mxu0 0.0
          %1921 = vmatpush.msra.mxu0 %v1888
          %1922 = vmatpush.msra.mxu0 %v1887
          %1923 = vmatpush.msra.mxu0 %v1886
          %1924 = vmatpush.msra.mxu0 %v1885
          %1925 = vmatmul.f32.gmra.mxu0 %v1827
          %v1926 = vpop.f32.mrf.mxu0
          %v1927 = vadd.f32 %v1907, %v1926
          %1928 = vdwg.mxu0
          %v1929 = vmax.f32 %v1867, %v1927
          %v1930 = vld [vmem:[%s6] sm:$0x1]
          %v1931 = vadd.f32 %v1929, %v1930
          %v1932 = vmax.f32 %v1931, 0.0
          %s1933 = scalar_lea.vmem [#allocation3], %s1204
          %vm1934 = vcmask 647168
          %1935 = vst.msk [vmem:[%s1933] sm:$0x1] %vm1934, %v1932
        $region92: #{net_forward.1} parent=79 // loop_footer
          %s1208 = sadd.s32 1, %s1204
        $region93: #{net_forward.1} parent=79 // loop_footer_branch
          %1203 = sbr.rel target = $region89
        $region94: #{net_forward.1} parent=79 // loop_exit
          _
        %v1936 = vld [vmem:[%s10] sm:$0x1]
        %v1937 = vld [vmem:[#allocation3] sm:$0x1]
        %v1938 = vld [vmem:[%s9] sm:$0xff]
        %v1939 = vld [vmem:[%s9 + $0x8] sm:$0xff]
        %v1940 = vld [vmem:[%s9 + $0x10] sm:$0xff]
        %v1941 = vld [vmem:[%s9 + $0x18] sm:$0xff]
        %v1942 = vld [vmem:[%s9 + $0x20] sm:$0xff]
        %v1943 = vld [vmem:[%s9 + $0x28] sm:$0xff]
        %v1944 = vld [vmem:[%s9 + $0x30] sm:$0xff]
        %v1945 = vld [vmem:[%s9 + $0x38] sm:$0xff]
        %v1946 = vld [vmem:[%s9 + $0x40] sm:$0xff]
        %v1947 = vld [vmem:[%s9 + $0x48] sm:$0xff]
        %vm1948 = vcmask 654336
        %v1950 = vsel %vm1948, %v1937, 0
        %1952 = vmatpush.msra.mxu0 0.0
        %1953 = vmatpush.msra.mxu0 0.0
        %1954 = vmatpush.msra.mxu0 0.0
        %1955 = vmatpush.msra.mxu0 0.0
        %1956 = vmatpush.msra.mxu0 0.0
        %1957 = vmatpush.msra.mxu0 0.0
        %1958 = vmatpush.msra.mxu0 %v1947
        %1959 = vmatpush.msra.mxu0 %v1946
        %1960 = vmatpush.msra.mxu0 %v1945
        %1961 = vmatpush.msra.mxu0 %v1944
        %1962 = vmatpush.msra.mxu0 %v1943
        %1963 = vmatpush.msra.mxu0 %v1942
        %1964 = vmatpush.msra.mxu0 %v1941
        %1965 = vmatpush.msra.mxu0 %v1940
        %1966 = vmatpush.msra.mxu0 %v1939
        %1967 = vmatpush.msra.mxu0 %v1938
        %1968 = vmatmul.f32.gmra.mxu0 %v1950
        %v1969 = vpop.f32.mrf.mxu0
        %v1970 = vadd.f32 0.0, %v1969
        %1971 = vdwg.mxu0
        %v1972 = vadd.f32 %v1936, %v1970
        %s1973 = scalar_lea.vmem [#allocation3], 1
        %v1974 = vld [vmem:[%s1973] sm:$0x1]
        %s1975 = scalar_lea.vmem %s9, 80
        %v1976 = vld [vmem:[%s1975] sm:$0xff]
        %v1977 = vld [vmem:[%s1975 + $0x8] sm:$0xff]
        %v1978 = vld [vmem:[%s1975 + $0x10] sm:$0xff]
        %v1979 = vld [vmem:[%s1975 + $0x18] sm:$0xff]
        %v1980 = vld [vmem:[%s1975 + $0x20] sm:$0xff]
        %v1981 = vld [vmem:[%s1975 + $0x28] sm:$0xff]
        %v1982 = vld [vmem:[%s1975 + $0x30] sm:$0xff]
        %v1983 = vld [vmem:[%s1975 + $0x38] sm:$0xff]
        %v1984 = vld [vmem:[%s1975 + $0x40] sm:$0xff]
        %v1985 = vld [vmem:[%s1975 + $0x48] sm:$0xff]
        %v1987 = vsel %vm1948, %v1974, 0
        %1989 = vmatpush.msra.mxu0 0.0
        %1990 = vmatpush.msra.mxu0 0.0
        %1991 = vmatpush.msra.mxu0 0.0
        %1992 = vmatpush.msra.mxu0 0.0
        %1993 = vmatpush.msra.mxu0 0.0
        %1994 = vmatpush.msra.mxu0 0.0
        %1995 = vmatpush.msra.mxu0 %v1985
        %1996 = vmatpush.msra.mxu0 %v1984
        %1997 = vmatpush.msra.mxu0 %v1983
        %1998 = vmatpush.msra.mxu0 %v1982
        %1999 = vmatpush.msra.mxu0 %v1981
        %2000 = vmatpush.msra.mxu0 %v1980
        %2001 = vmatpush.msra.mxu0 %v1979
        %2002 = vmatpush.msra.mxu0 %v1978
        %2003 = vmatpush.msra.mxu0 %v1977
        %2004 = vmatpush.msra.mxu0 %v1976
        %2005 = vmatmul.f32.gmra.mxu0 %v1987
        %v2006 = vpop.f32.mrf.mxu0
        %v2007 = vadd.f32 0.0, %v2006
        %2008 = vdwg.mxu0
        %v2009 = vadd.f32 %v1972, %v2007
        %s2010 = scalar_lea.vmem [#allocation3], 2
        %v2011 = vld [vmem:[%s2010] sm:$0x1]
        %s2012 = scalar_lea.vmem %s9, 160
        %v2013 = vld [vmem:[%s2012] sm:$0xff]
        %v2014 = vld [vmem:[%s2012 + $0x8] sm:$0xff]
        %v2015 = vld [vmem:[%s2012 + $0x10] sm:$0xff]
        %v2016 = vld [vmem:[%s2012 + $0x18] sm:$0xff]
        %v2017 = vld [vmem:[%s2012 + $0x20] sm:$0xff]
        %v2018 = vld [vmem:[%s2012 + $0x28] sm:$0xff]
        %v2019 = vld [vmem:[%s2012 + $0x30] sm:$0xff]
        %v2020 = vld [vmem:[%s2012 + $0x38] sm:$0xff]
        %v2021 = vld [vmem:[%s2012 + $0x40] sm:$0xff]
        %v2022 = vld [vmem:[%s2012 + $0x48] sm:$0xff]
        %v2024 = vsel %vm1948, %v2011, 0
        %2026 = vmatpush.msra.mxu0 0.0
        %2027 = vmatpush.msra.mxu0 0.0
        %2028 = vmatpush.msra.mxu0 0.0
        %2029 = vmatpush.msra.mxu0 0.0
        %2030 = vmatpush.msra.mxu0 0.0
        %2031 = vmatpush.msra.mxu0 0.0
        %2032 = vmatpush.msra.mxu0 %v2022
        %2033 = vmatpush.msra.mxu0 %v2021
        %2034 = vmatpush.msra.mxu0 %v2020
        %2035 = vmatpush.msra.mxu0 %v2019
        %2036 = vmatpush.msra.mxu0 %v2018
        %2037 = vmatpush.msra.mxu0 %v2017
        %2038 = vmatpush.msra.mxu0 %v2016
        %2039 = vmatpush.msra.mxu0 %v2015
        %2040 = vmatpush.msra.mxu0 %v2014
        %2041 = vmatpush.msra.mxu0 %v2013
        %2042 = vmatmul.f32.gmra.mxu0 %v2024
        %v2043 = vpop.f32.mrf.mxu0
        %v2044 = vadd.f32 0.0, %v2043
        %2045 = vdwg.mxu0
        %v2046 = vadd.f32 %v2009, %v2044
        %s2047 = scalar_lea.vmem [#allocation3], 3
        %v2048 = vld [vmem:[%s2047] sm:$0x1]
        %s2049 = scalar_lea.vmem %s9, 240
        %v2050 = vld [vmem:[%s2049] sm:$0xff]
        %v2051 = vld [vmem:[%s2049 + $0x8] sm:$0xff]
        %v2052 = vld [vmem:[%s2049 + $0x10] sm:$0xff]
        %v2053 = vld [vmem:[%s2049 + $0x18] sm:$0xff]
        %v2054 = vld [vmem:[%s2049 + $0x20] sm:$0xff]
        %v2055 = vld [vmem:[%s2049 + $0x28] sm:$0xff]
        %v2056 = vld [vmem:[%s2049 + $0x30] sm:$0xff]
        %v2057 = vld [vmem:[%s2049 + $0x38] sm:$0xff]
        %v2058 = vld [vmem:[%s2049 + $0x40] sm:$0xff]
        %v2059 = vld [vmem:[%s2049 + $0x48] sm:$0xff]
        %v2061 = vsel %vm1948, %v2048, 0
        %2063 = vmatpush.msra.mxu0 0.0
        %2064 = vmatpush.msra.mxu0 0.0
        %2065 = vmatpush.msra.mxu0 0.0
        %2066 = vmatpush.msra.mxu0 0.0
        %2067 = vmatpush.msra.mxu0 0.0
        %2068 = vmatpush.msra.mxu0 0.0
        %2069 = vmatpush.msra.mxu0 %v2059
        %2070 = vmatpush.msra.mxu0 %v2058
        %2071 = vmatpush.msra.mxu0 %v2057
        %2072 = vmatpush.msra.mxu0 %v2056
        %2073 = vmatpush.msra.mxu0 %v2055
        %2074 = vmatpush.msra.mxu0 %v2054
        %2075 = vmatpush.msra.mxu0 %v2053
        %2076 = vmatpush.msra.mxu0 %v2052
        %2077 = vmatpush.msra.mxu0 %v2051
        %2078 = vmatpush.msra.mxu0 %v2050
        %2079 = vmatmul.f32.gmra.mxu0 %v2061
        %v2080 = vpop.f32.mrf.mxu0
        %v2081 = vadd.f32 0.0, %v2080
        %2082 = vdwg.mxu0
        %v2083 = vadd.f32 %v2046, %v2081
        %s2084 = scalar_lea.vmem [#allocation3], 4
        %v2085 = vld [vmem:[%s2084] sm:$0x1]
        %s2086 = scalar_lea.vmem %s9, 320
        %v2087 = vld [vmem:[%s2086] sm:$0xff]
        %v2088 = vld [vmem:[%s2086 + $0x8] sm:$0xff]
        %v2089 = vld [vmem:[%s2086 + $0x10] sm:$0xff]
        %v2090 = vld [vmem:[%s2086 + $0x18] sm:$0xff]
        %v2091 = vld [vmem:[%s2086 + $0x20] sm:$0xff]
        %v2092 = vld [vmem:[%s2086 + $0x28] sm:$0xff]
        %v2093 = vld [vmem:[%s2086 + $0x30] sm:$0xff]
        %v2094 = vld [vmem:[%s2086 + $0x38] sm:$0xff]
        %v2095 = vld [vmem:[%s2086 + $0x40] sm:$0xff]
        %v2096 = vld [vmem:[%s2086 + $0x48] sm:$0xff]
        %v2098 = vsel %vm1948, %v2085, 0
        %2100 = vmatpush.msra.mxu0 0.0
        %2101 = vmatpush.msra.mxu0 0.0
        %2102 = vmatpush.msra.mxu0 0.0
        %2103 = vmatpush.msra.mxu0 0.0
        %2104 = vmatpush.msra.mxu0 0.0
        %2105 = vmatpush.msra.mxu0 0.0
        %2106 = vmatpush.msra.mxu0 %v2096
        %2107 = vmatpush.msra.mxu0 %v2095
        %2108 = vmatpush.msra.mxu0 %v2094
        %2109 = vmatpush.msra.mxu0 %v2093
        %2110 = vmatpush.msra.mxu0 %v2092
        %2111 = vmatpush.msra.mxu0 %v2091
        %2112 = vmatpush.msra.mxu0 %v2090
        %2113 = vmatpush.msra.mxu0 %v2089
        %2114 = vmatpush.msra.mxu0 %v2088
        %2115 = vmatpush.msra.mxu0 %v2087
        %2116 = vmatmul.f32.gmra.mxu0 %v2098
        %v2117 = vpop.f32.mrf.mxu0
        %v2118 = vadd.f32 0.0, %v2117
        %2119 = vdwg.mxu0
        %v2120 = vadd.f32 %v2083, %v2118
        %v2121 = vmax.f32 %v2120, 0.0
        %v2122 = vld [vmem:[%s11] sm:$0xff]
        %v2123 = vld [vmem:[%s11 + $0x8] sm:$0xff]
        %v2124 = vld [vmem:[%s11 + $0x10] sm:$0xff]
        %v2125 = vld [vmem:[%s11 + $0x18] sm:$0xff]
        %v2126 = vld [vmem:[%s11 + $0x20] sm:$0xff]
        %v2127 = vld [vmem:[%s11 + $0x28] sm:$0xff]
        %v2128 = vld [vmem:[%s11 + $0x30] sm:$0xff]
        %v2129 = vld [vmem:[%s11 + $0x38] sm:$0xff]
        %v2130 = vld [vmem:[%s11 + $0x40] sm:$0xff]
        %v2131 = vld [vmem:[%s11 + $0x48] sm:$0xff]
        %v2132 = vld [vmem:[%s11 + $0x50] sm:$0xff]
        %v2133 = vld [vmem:[%s11 + $0x58] sm:$0xff]
        %v2134 = vld [vmem:[%s11 + $0x60] sm:$0xff]
        %v2135 = vld [vmem:[%s11 + $0x68] sm:$0xff]
        %v2136 = vld [vmem:[%s11 + $0x70] sm:$0xff]
        %v2137 = vld [vmem:[%s12] sm:$0x1]
        %vm2138 = vcmask 982016
        %v2140 = vsel %vm2138, %v2121, 0
        %2142 = vmatpush.msra.mxu0 0.0
        %2143 = vmatpush.msra.mxu0 %v2136
        %2144 = vmatpush.msra.mxu0 %v2135
        %2145 = vmatpush.msra.mxu0 %v2134
        %2146 = vmatpush.msra.mxu0 %v2133
        %2147 = vmatpush.msra.mxu0 %v2132
        %2148 = vmatpush.msra.mxu0 %v2131
        %2149 = vmatpush.msra.mxu0 %v2130
        %2150 = vmatpush.msra.mxu0 %v2129
        %2151 = vmatpush.msra.mxu0 %v2128
        %2152 = vmatpush.msra.mxu0 %v2127
        %2153 = vmatpush.msra.mxu0 %v2126
        %2154 = vmatpush.msra.mxu0 %v2125
        %2155 = vmatpush.msra.mxu0 %v2124
        %2156 = vmatpush.msra.mxu0 %v2123
        %2157 = vmatpush.msra.mxu0 %v2122
        %2158 = vmatmul.f32.gmra.mxu0 %v2140
        %v2159 = vpop.f32.mrf.mxu0
        %v2160 = vadd.f32 %v2137, %v2159
        %2161 = vdwg.mxu0
        %v2162 = vmax.f32 %v2160, 0.0
        %v2163 = vld [vmem:[%s13] sm:$0xff]
        %v2164 = vld [vmem:[%s13 + $0x8] sm:$0xff]
        %v2165 = vld [vmem:[%s13 + $0x10] sm:$0xff]
        %v2166 = vld [vmem:[%s13 + $0x18] sm:$0xff]
        %v2167 = vld [vmem:[%s13 + $0x20] sm:$0xff]
        %v2168 = vld [vmem:[%s13 + $0x28] sm:$0xff]
        %v2169 = vld [vmem:[%s13 + $0x30] sm:$0xff]
        %v2170 = vld [vmem:[%s13 + $0x38] sm:$0xff]
        %v2171 = vld [vmem:[%s13 + $0x40] sm:$0xff]
        %v2172 = vld [vmem:[%s13 + $0x48] sm:$0xff]
        %v2173 = vld [vmem:[%s13 + $0x50] sm:$0xf]
        %v2174 = vld [vmem:[%s14] sm:$0x1]
        %vm2175 = vcmask 687104
        %v2177 = vsel %vm2175, %v2162, 0
        %vm2179 = vcmask 1043456
        %v2181 = vsel %vm2179, %v2173, 0
        %2183 = vmatpush.msra.mxu0 0.0
        %2184 = vmatpush.msra.mxu0 0.0
        %2185 = vmatpush.msra.mxu0 0.0
        %2186 = vmatpush.msra.mxu0 0.0
        %2187 = vmatpush.msra.mxu0 0.0
        %2188 = vmatpush.msra.mxu0 %v2181
        %2189 = vmatpush.msra.mxu0 %v2172
        %2190 = vmatpush.msra.mxu0 %v2171
        %2191 = vmatpush.msra.mxu0 %v2170
        %2192 = vmatpush.msra.mxu0 %v2169
        %2193 = vmatpush.msra.mxu0 %v2168
        %2194 = vmatpush.msra.mxu0 %v2167
        %2195 = vmatpush.msra.mxu0 %v2166
        %2196 = vmatpush.msra.mxu0 %v2165
        %2197 = vmatpush.msra.mxu0 %v2164
        %2198 = vmatpush.msra.mxu0 %v2163
        %2199 = vmatmul.f32.gmra.mxu0 %v2177
        %v2200 = vpop.f32.mrf.mxu0
        %v2201 = vadd.f32 %v2174, %v2200
        %2202 = vdwg.mxu0
        %vm2203 = vcmask 73728
        %v2204 = vsel %vm2203, %v2201, -inf
        %2205 = vmax.xlane.f32.xlu0 %v2204
        %v2206 = vpop.xlane.xlu0 %2205
        %v2207 = vsub.f32 %v2201, %v2206
        %v2208 = vmul.f32 %v2207, 1.442695
        %v2209 = vpow.pop %v2208
        %v2210 = vsel %vm2203, %v2209, 0.0
        %2211 = vadd.xlane.f32.xlu0 %v2210
        %v2212 = vpop.xlane.xlu0 %2211
        %v2213 = vrcp.pop %v2212
        %v2214 = vmul.f32 %v2212, %v2213
        %v2215 = vsub.f32 1.0, %v2214
        %v2216 = vmul.f32 %v2213, %v2215
        %v2217 = vadd.f32 %v2213, %v2216
        %vm2218 = vweird.f32 %v2212
        %vm2219 = vweird.f32 %v2213
        %vm2220 = vmor %vm2218, %vm2219
        %v2221 = vsel %vm2220, %v2213, %v2217
        %v2222 = vand.u32 2147483647, %v2212
        %vm2223 = vcmp.eq.f32.partialorder %v2222, 8.507059e+37
        %v2224 = vand.u32 %v2212, 2147483648
        %v2225 = vor.u32 1.1754944e-38, %v2224
        %v2226 = vsel %vm2223, %v2225, %v2221
        %v2227 = vmul.f32 %v2209, %v2226
        %2228 = vst.msk [vmem:[%s484] sm:$0x1] %vm2203, %v2227
        %s2229 = sand.u32 %s357, 1
        %s2230 = scalar_lea.sflag [#allocation5], %s2229
        %s2231 = sand.u32 %s357, 1
        %s2232 = scalar_lea.vmem [#allocation4], %s2231
        // Predicated region
        $region95: #{net_forward.1} parent=79 // pred_check
          %p2233 = pneg %p367
        $region96: #{net_forward.1} parent=79 // pred_check_branch
          %2235 = sbr.rel (%p2233) target = $region98
        $region97: #{net_forward.1} parent=79 // pred_region
          %2237 = vsyncadd %s2230, 0
          %s2238 = scalar_lea.hbm %s15, %s29
          %s2240 = sshll.u32 %s2232, 4
          %s2241 = int_to_ptr.vmem [resolvable:$true] %s2240
          %s2242 = sshll.u32 %s2238, 4
          %s2243 = int_to_ptr.hbm [resolvable:$true] %s2242
          %2245 = dma.vmem_to_hbm [thread:$0]  %s2241, 16, %s2243, %s2230
        $region98: #{net_forward.1} parent=79 // pred_fallthru
          _
      $region80: #{net_forward.1} parent=5 // pred_fallthru
        _
      %p2246 = scmp.le.s32.totalorder 2, %s24
      // Predicated region
      $region99: #{net_forward.1} parent=5 // pred_check
        %p2247 = pneg %p2246
      $region100: #{net_forward.1} parent=5 // pred_check_branch
        %2249 = sbr.rel (%p2247) target = $region102
      $region101: #{net_forward.1} parent=5 // pred_region
        %s2250 = ssub.s32 %s24, 2
        // Predicated region
        $region103: #{net_forward.1} parent=101 // pred_check
          %p2251 = pneg %p373
        $region104: #{net_forward.1} parent=101 // pred_check_branch
          %2253 = sbr.rel (%p2251) target = $region106
        $region105: #{net_forward.1} parent=101 // pred_region
          %s2254 = sand.u32 %s358, 1
          %s2255 = scalar_lea.sflag [#allocation5], %s2254
          %s2256 = sand.u32 %s358, 1
          %s2257 = scalar_lea.vmem [#allocation4], %s2256
          %2259 = dma.done %s2255, 16
        $region106: #{net_forward.1} parent=101 // pred_fallthru
          _
      $region102: #{net_forward.1} parent=5 // pred_fallthru
        _
    $region6: #{net_forward.1} parent=1 // loop_footer
      %s28 = sadd.s32 1, %s24
    $region7: #{net_forward.1} parent=1 // loop_footer_branch
      %23 = sbr.rel target = $region3
    $region8: #{net_forward.1} parent=1 // loop_exit
      _
    %2260 = vsyncpa [#allocation5], 1
    %s2261 = scalar_lea.sflag [#allocation5], 1
    %2262 = vsyncpa %s2261, 1

</llo_original>
